<compile_context>
chip_gen: v5e
topology: v5e:2x2
jax: 0.10.0
libtpu: 0.0.40
codegen_flags: <defaults>
</compile_context>

<pallas_src>
import numpy as np

import jax
import jax.numpy as jnp
from jax.experimental import pallas as pl
from jax.experimental.pallas import tpu as pltpu

LANE = 128        # TPU vreg lane width; channels are padded to multiples of this.
_BN_EPS = 1e-5

# MXU operand dtype.  bf16 gives ~2x MXU throughput on v6e/v7x and halves the
# weight DMA/VMEM bytes; accumulation stays f32 (preferred_element_type) and
# all element-wise math stays f32 (so the missing bf16 VPU on v5e is moot).
PARAM_DTYPE = jnp.bfloat16


# ----------------------------------------------------------------------------
# In-kernel building blocks (traced inside the single fused kernel)
# ----------------------------------------------------------------------------
def _shifted(x, d, l, pos):
    """shifted[r] = x[r + d] within the same batch element, 0 outside.

    x:   (rows, C) activation, rows = batch * l (batch-major rows)
    d:   static tap offset (k - pad)
    pos: (rows, 1) int32, position of each row inside its batch element
    Implements Conv1d 'same' zero padding *and* the batch boundary.
    """
    if d == 0:
        return x
    rows, c = x.shape
    zeros = jnp.zeros((abs(d), c), x.dtype)
    if d > 0:
        sh = jnp.concatenate([x[d:, :], zeros], axis=0)
    else:
        sh = jnp.concatenate([zeros, x[:rows + d, :]], axis=0)
    valid = jnp.logical_and(pos + d >= 0, pos + d < l)          # (rows, 1)
    return jnp.where(valid, sh, 0.0)


def _conv_block(x, w_ref, b_ref, k_size, l, relu=True, residual=None):
    """'same' Conv1d + folded BN (+ residual) (+ ReLU) on a (rows, C) slab.

    The K shifted copies of the activation are built with slice/pad/mask
    (VPU/XLU work) and lane-concatenated, so the conv is a single MXU matmul
    with contraction depth K*128.
    """
    rows = x.shape[0]
    if k_size == 1:
        cols = x
    else:
        pad = (k_size - 1) // 2
        pos = jax.lax.broadcasted_iota(jnp.int32, (rows, 1), 0) % l
        cols = jnp.concatenate(
            [_shifted(x, kk - pad, l, pos) for kk in range(k_size)], axis=-1)
    y = jnp.dot(cols.astype(w_ref.dtype), w_ref[...],
                preferred_element_type=jnp.float32)
    y = y + b_ref[...]
    if residual is not None:
        y = y + residual
    if relu:
        y = jnp.maximum(y, 0.0)
    return y


def _max_pool(x, scratch_ref):
    """MaxPool1d(kernel=2, stride=2): scratch write + two strided sublane reads."""
    rows = x.shape[0]
    scratch_ref[0:rows, :] = x
    even = scratch_ref[pl.ds(0, rows // 2, stride=2), :]
    odd = scratch_ref[pl.ds(1, rows // 2, stride=2), :]
    return jnp.maximum(even, odd)


def _dense_block(x, w_ref, b_ref, relu):
    """Linear + folded BN (+ ReLU)."""
    y = jnp.dot(x.astype(w_ref.dtype), w_ref[...],
                preferred_element_type=jnp.float32)
    y = y + b_ref[...]
    if relu:
        y = jnp.maximum(y, 0.0)
    return y


# ----------------------------------------------------------------------------
# The fused forward kernel (everything in one pallas_call)
# ----------------------------------------------------------------------------
def _make_kernel(n, seq_len):
    l0 = seq_len
    l1, l2, l3 = l0 // 2, l0 // 4, l0 // 8

    def kernel(
        # data
        x_ref, con_ref,
        # ECG conv trunk
        c1_w, c1_b, r1a_w, r1a_b, r1b_w, r1b_b,
        c2_w, c2_b, r2a_w, r2a_b, r2b_w, r2b_b,
        c3_w, c3_b, r3a_w, r3a_b, r3b_w, r3b_b,
        c4_w, c4_b,
        # dense layers
        efc1_w, efc1_b, efc2_w, efc2_b,
        cfc1_w, cfc1_b, cfc2_w, cfc2_b,
        ffc1_wa, ffc1_wb, ffc1_b, ffc2_w, ffc2_b,
        # average-pool constant
        pavg,
        # output / scratch
        out_ref, pool_scratch,
    ):
        # ---------------- ECG branch (Conv1d stack, channels on lanes) ------
        x = x_ref[...]                                  # (N*L0, LANE), lane 0 = signal
        x = _conv_block(x, c1_w, c1_b, 5, l0)           # Conv1d(1,32,5,p=2)+BN+ReLU
        x = _max_pool(x, pool_scratch)                  # MaxPool1d(2)
        h = _conv_block(x, r1a_w, r1a_b, 3, l1)         # ResidualBlock(32)
        x = _conv_block(h, r1b_w, r1b_b, 3, l1, residual=x)
        x = _conv_block(x, c2_w, c2_b, 5, l1)           # Conv1d(32,64,5,p=2)+BN+ReLU
        x = _max_pool(x, pool_scratch)                  # MaxPool1d(2)
        h = _conv_block(x, r2a_w, r2a_b, 3, l2)         # ResidualBlock(64)
        x = _conv_block(h, r2b_w, r2b_b, 3, l2, residual=x)
        x = _conv_block(x, c3_w, c3_b, 5, l2)           # Conv1d(64,128,5,p=2)+BN+ReLU
        x = _max_pool(x, pool_scratch)                  # MaxPool1d(2)
        h = _conv_block(x, r3a_w, r3a_b, 3, l3)         # ResidualBlock(128)
        x = _conv_block(h, r3b_w, r3b_b, 3, l3, residual=x)
        x = _conv_block(x, c4_w, c4_b, 1, l3)           # Conv1d(128,256,1)+BN+ReLU
        # AdaptiveAvgPool1d(1) + Flatten as a tiny constant averaging matmul.
        x = jnp.dot(pavg[...], x, preferred_element_type=jnp.float32)   # (N, 256)
        x = _dense_block(x, efc1_w, efc1_b, relu=True)  # Linear(256,128)+BN+ReLU (+Dropout=id)
        ecg_feat = _dense_block(x, efc2_w, efc2_b, relu=False)   # Linear(128,CIS) (padded lanes)

        # ---------------- Concept branch -------------------------------------
        c = con_ref[...]                                # (N, LANE), first CIS lanes valid
        c = _dense_block(c, cfc1_w, cfc1_b, relu=True)  # Linear(CIS,128)+BN+ReLU (+Dropout=id)
        con_feat = _dense_block(c, cfc2_w, cfc2_b, relu=True)    # Linear(128,64)+BN+ReLU (padded)

        # ---------------- Fusion head (torch.cat folded into a row-split GEMM)
        z = jnp.dot(ecg_feat.astype(ffc1_wa.dtype), ffc1_wa[...],
                    preferred_element_type=jnp.float32)
        z = z + jnp.dot(con_feat.astype(ffc1_wb.dtype), ffc1_wb[...],
                        preferred_element_type=jnp.float32)
        z = jnp.maximum(z + ffc1_b[...], 0.0)           # Linear(CIS+64,256)+ReLU (+Dropout=id)
        out = _dense_block(z, ffc2_w, ffc2_b, relu=False)   # Linear(256, num_classes) (padded)
        out_ref[...] = out.astype(out_ref.dtype)

    return kernel


# ----------------------------------------------------------------------------
# Wrapper: one pallas_call for the whole forward pass
# ----------------------------------------------------------------------------
_LAYER_ORDER = ("c1", "r1a", "r1b", "c2", "r2a", "r2b", "c3", "r3a", "r3b",
                "c4", "efc1", "efc2", "cfc1", "cfc2")


def _ordered_args(p):
    args = []
    for name in _LAYER_ORDER:
        args.append(p[name + "_w"])
        args.append(p[name + "_b"])
    for name in ("ffc1_wa", "ffc1_wb", "ffc1_b", "ffc2_w", "ffc2_b", "pavg"):
        args.append(p[name])
    return args


def ecg_concept_cnn_forward(packed, ecg, concepts, num_classes):
    """ECGConceptCNN.forward (ECG=True, Concept=True, eval mode), fully fused."""
    n, cin, seq = ecg.shape
    assert cin == 1
    assert seq % 8 == 0, "three MaxPool1d(2) stages require seq_len % 8 == 0"
    cis = concepts.shape[1]
    assert cis <= LANE

    # Channels-as-lanes layout: rows = batch*length, lanes = channels (padded).
    x0 = jnp.pad(ecg.reshape(n * seq, 1).astype(jnp.float32),
                 ((0, 0), (0, LANE - 1)))
    con0 = jnp.pad(concepts.astype(jnp.float32), ((0, 0), (0, LANE - cis)))

    args = [x0, con0] + _ordered_args(packed)

    # Explicit scoped-VMEM budget sized from the real footprint (weights +
    # a few live f32 im2col slabs), clamped to [16 MiB, 32 MiB] which is safe
    # on every chip generation (raises v5e's 16 MiB default once seq grows).
    arg_bytes = sum(int(np.prod(a.shape)) * a.dtype.itemsize for a in args)
    act_bytes = 8 * n * seq * 5 * LANE * 4
    vmem_limit = int(min(32 << 20, max(16 << 20, 2 * (arg_bytes + act_bytes))))

    vmem = pl.BlockSpec(memory_space=pltpu.MemorySpace.VMEM)
    out_pad = pl.pallas_call(
        _make_kernel(n, seq),
        out_shape=jax.ShapeDtypeStruct((n, LANE), jnp.float32),
        in_specs=[vmem] * len(args),
        out_specs=vmem,
        scratch_shapes=[pltpu.VMEM((n * seq, LANE), jnp.float32)],
        compiler_params=pltpu.CompilerParams(vmem_limit_bytes=vmem_limit),
    )(*args)
    # Logits were computed lane-dense (128 wide); slice back to num_classes.
    return out_pad[:, :num_classes]


# ----------------------------------------------------------------------------
# Parameter generation in PyTorch layouts + conversion to the kernel layout
# ----------------------------------------------------------------------------
def init_torch_params(key, cis, nc):
    """Synthetic parameters in PyTorch's native layouts, BN with running stats."""
    ks = iter(jax.random.split(key, 128))

    def conv(c_in, c_out, k):
        w = jax.random.normal(next(ks), (c_out, c_in, k), jnp.float32) / np.sqrt(c_in * k)
        b = 0.1 * jax.random.normal(next(ks), (c_out,), jnp.float32)
        return {"w": w, "b": b}

    def bn(c):
        return {"gamma": 1.0 + 0.1 * jax.random.normal(next(ks), (c,), jnp.float32),
                "beta": 0.1 * jax.random.normal(next(ks), (c,), jnp.float32),
                "mean": 0.05 * jax.random.normal(next(ks), (c,), jnp.float32),
                "var": 1.0 + 0.1 * jax.random.uniform(next(ks), (c,), jnp.float32)}

    def lin(d_in, d_out):
        w = jax.random.normal(next(ks), (d_out, d_in), jnp.float32) / np.sqrt(d_in)
        b = 0.1 * jax.random.normal(next(ks), (d_out,), jnp.float32)
        return {"w": w, "b": b}

    return {
        "c1": conv(1, 32, 5), "c1_bn": bn(32),
        "r1a": conv(32, 32, 3), "r1a_bn": bn(32),
        "r1b": conv(32, 32, 3), "r1b_bn": bn(32),
        "c2": conv(32, 64, 5), "c2_bn": bn(64),
        "r2a": conv(64, 64, 3), "r2a_bn": bn(64),
        "r2b": conv(64, 64, 3), "r2b_bn": bn(64),
        "c3": conv(64, 128, 5), "c3_bn": bn(128),
        "r3a": conv(128, 128, 3), "r3a_bn": bn(128),
        "r3b": conv(128, 128, 3), "r3b_bn": bn(128),
        "c4": conv(128, 256, 1), "c4_bn": bn(256),
        "efc1": lin(256, 128), "efc1_bn": bn(128),
        "efc2": lin(128, cis),
        "cfc1": lin(cis, 128), "cfc1_bn": bn(128),
        "cfc2": lin(128, 64), "cfc2_bn": bn(64),
        "ffc1": lin(cis + 64, 256),
        "ffc2": lin(256, nc),
    }


def _fold_bn(layer, bn):
    """Eval-mode BN + bias folding: y = scale * (W x) + shift."""
    if bn is None:
        scale = jnp.ones_like(layer["b"])
        shift = layer["b"]
    else:
        scale = bn["gamma"] / jnp.sqrt(bn["var"] + _BN_EPS)
        shift = (layer["b"] - bn["mean"]) * scale + bn["beta"]
    return scale, shift


def _pack_conv(layer, bn):
    """PyTorch Conv1d (Cout, Cin, K) -> im2col weight (K*LANE, Cout_pad), scale folded."""
    w = layer["w"]
    cout, cin, k = w.shape
    cout_pad = ((cout + LANE - 1) // LANE) * LANE
    scale, shift = _fold_bn(layer, bn)
    w_eff = jnp.transpose(w, (2, 1, 0)) * scale[None, None, :]    # (K, Cin, Cout)
    w_flat = jnp.zeros((k * LANE, cout_pad), jnp.float32)
    for kk in range(k):
        w_flat = w_flat.at[kk * LANE: kk * LANE + cin, :cout].set(w_eff[kk])
    b_row = jnp.zeros((1, cout_pad), jnp.float32).at[0, :cout].set(shift)
    return w_flat.astype(PARAM_DTYPE), b_row


def _pack_dense(layer, bn, pad_in=None, pad_out=None):
    """PyTorch Linear (Dout, Din) -> (Din_pad, Dout_pad), BN scale folded, zero-padded."""
    scale, shift = _fold_bn(layer, bn)
    w_eff = layer["w"].T * scale[None, :]                          # (Din, Dout)
    din, dout = w_eff.shape
    din_p = max(din, pad_in or 0)
    dout_p = max(dout, pad_out or 0)
    w_pad = jnp.zeros((din_p, dout_p), jnp.float32).at[:din, :dout].set(w_eff)
    b_pad = jnp.zeros((1, dout_p), jnp.float32).at[0, :dout].set(shift)
    return w_pad.astype(PARAM_DTYPE), b_pad


def _pack_fusion_fc1(layer, cis):
    """Split fusion Linear so torch.cat([ecg_feat, con_feat]) becomes two GEMMs.

    Both halves are padded to 128 input lanes (the padded feature lanes are
    exact zeros, so the zero weight rows contribute nothing)."""
    w, b = layer["w"], layer["b"]                      # (256, cis + 64), (256,)
    d_out = w.shape[0]
    wa = jnp.zeros((LANE, d_out), jnp.float32).at[:cis, :].set(w[:, :cis].T)
    wb = jnp.zeros((LANE, d_out), jnp.float32).at[:64, :].set(w[:, cis:].T)
    return (wa.astype(PARAM_DTYPE), wb.astype(PARAM_DTYPE),
            b.reshape(1, -1).astype(jnp.float32))


def _avg_pool_matrix(n, l):
    """(N, N*L) constant implementing AdaptiveAvgPool1d(1) + Flatten (tiny)."""
    m = np.zeros((n, n * l), np.float32)
    for b in range(n):
        m[b, b * l:(b + 1) * l] = 1.0 / l
    return jnp.asarray(m)


def pack_params(tp, n, seq_len, cis):
    assert seq_len % 8 == 0, "seq_len must be divisible by 8 (three MaxPool1d(2) stages)"
    p = {}
    for name in ("c1", "r1a", "r1b", "c2", "r2a", "r2b", "c3", "r3a", "r3b", "c4"):
        p[name + "_w"], p[name + "_b"] = _pack_conv(tp[name], tp[name + "_bn"])
    p["efc1_w"], p["efc1_b"] = _pack_dense(tp["efc1"], tp["efc1_bn"])
    p["efc2_w"], p["efc2_b"] = _pack_dense(tp["efc2"], None, pad_out=LANE)
    p["cfc1_w"], p["cfc1_b"] = _pack_dense(tp["cfc1"], tp["cfc1_bn"], pad_in=LANE)
    p["cfc2_w"], p["cfc2_b"] = _pack_dense(tp["cfc2"], tp["cfc2_bn"], pad_out=LANE)
    p["ffc1_wa"], p["ffc1_wb"], p["ffc1_b"] = _pack_fusion_fc1(tp["ffc1"], cis)
    p["ffc2_w"], p["ffc2_b"] = _pack_dense(tp["ffc2"], None, pad_out=LANE)
    p["pavg"] = _avg_pool_matrix(n, seq_len // 8)
    return p


# ----------------------------------------------------------------------------
# Pure-JAX reference (mirrors the PyTorch module, eval mode) for verification
# ----------------------------------------------------------------------------
def _bn_eval(x, bn, axis):
    shape = [1] * x.ndim
    shape[axis] = -1
    scale = bn["gamma"] / jnp.sqrt(bn["var"] + _BN_EPS)
    shift = bn["beta"] - bn["mean"] * scale
    return x * scale.reshape(shape) + shift.reshape(shape)


def _ref_conv1d(x, layer, pad):
    y = jax.lax.conv_general_dilated(
        x, layer["w"], window_strides=(1,), padding=[(pad, pad)],
        dimension_numbers=("NCH", "OIH", "NCH"))
    return y + layer["b"][None, :, None]


def _ref_linear(x, layer):
    return x @ layer["w"].T + layer["b"][None, :]


def _ref_maxpool(x):
    n, c, l = x.shape
    return jnp.max(x[:, :, :(l // 2) * 2].reshape(n, c, l // 2, 2), axis=-1)


def reference_forward(tp, ecg, concepts):
    relu = jax.nn.relu

    def conv_bn_relu(x, name, k):
        return relu(_bn_eval(_ref_conv1d(x, tp[name], (k - 1) // 2),
                             tp[name + "_bn"], 1))

    def res_block(x, na, nb):
        out = conv_bn_relu(x, na, 3)
        out = _bn_eval(_ref_conv1d(out, tp[nb], 1), tp[nb + "_bn"], 1)
        return relu(out + x)

    x = conv_bn_relu(ecg, "c1", 5)
    x = _ref_maxpool(x)
    x = res_block(x, "r1a", "r1b")
    x = conv_bn_relu(x, "c2", 5)
    x = _ref_maxpool(x)
    x = res_block(x, "r2a", "r2b")
    x = conv_bn_relu(x, "c3", 5)
    x = _ref_maxpool(x)
    x = res_block(x, "r3a", "r3b")
    x = conv_bn_relu(x, "c4", 1)
    x = jnp.mean(x, axis=-1)                           # AdaptiveAvgPool1d(1)+Flatten
    x = relu(_bn_eval(_ref_linear(x, tp["efc1"]), tp["efc1_bn"], 1))
    ecg_feat = _ref_linear(x, tp["efc2"])
    c = relu(_bn_eval(_ref_linear(concepts, tp["cfc1"]), tp["cfc1_bn"], 1))
    con_feat = relu(_bn_eval(_ref_linear(c, tp["cfc2"]), tp["cfc2_bn"], 1))
    comb = jnp.concatenate([ecg_feat, con_feat], axis=1)
    z = relu(_ref_linear(comb, tp["ffc1"]))
    return _ref_linear(z, tp["ffc2"])


# ----------------------------------------------------------------------------
if __name__ == "__main__":
    key = jax.random.PRNGKey(0)
    k_params, k_ecg, k_con = jax.random.split(key, 3)

    concept_input_size = 7
    num_classes = 5
    batch = 2
    seq_len = 32   # three MaxPool1d(2) stages -> must be divisible by 8

    torch_params = init_torch_params(k_params, concept_input_size, num_classes)
    packed = pack_params(torch_params, batch, seq_len, concept_input_size)

    ecg = jax.random.normal(k_ecg, (batch, 1, seq_len), jnp.float32)
    concepts = jax.random.normal(k_con, (batch, concept_input_size), jnp.float32)

    fwd = jax.jit(ecg_concept_cnn_forward, static_argnums=(3,))
    out = jax.block_until_ready(fwd(packed, ecg, concepts, num_classes))

    assert out.shape == (batch, num_classes)
    assert bool(jnp.all(jnp.isfinite(out)))

    # Verify against a pure-JAX f32 replica of the PyTorch forward (eval mode).
    # The kernel feeds the MXU bf16 operands (~16 matmul layers deep), so the
    # tolerance is widened vs. a pure-f32 comparison; structural bugs would
    # produce O(1) mismatches and still be caught.
    with jax.default_matmul_precision("float32"):
        ref = jax.block_until_ready(jax.jit(reference_forward)(torch_params, ecg, concepts))
    np.testing.assert_allclose(np.asarray(out), np.asarray(ref), rtol=5e-2, atol=5e-2)

    print("KERNEL_OK")
</pallas_src>

<mosaic_0001>
module attributes {stable_mosaic.version = 11 : i64} {
  func.func @kernel(%arg0: memref<64x128xf32, #tpu.memory_space<vmem>>, %arg1: memref<2x128xf32, #tpu.memory_space<vmem>>, %arg2: memref<640x128xbf16, #tpu.memory_space<vmem>>, %arg3: memref<1x128xf32, #tpu.memory_space<vmem>>, %arg4: memref<384x128xbf16, #tpu.memory_space<vmem>>, %arg5: memref<1x128xf32, #tpu.memory_space<vmem>>, %arg6: memref<384x128xbf16, #tpu.memory_space<vmem>>, %arg7: memref<1x128xf32, #tpu.memory_space<vmem>>, %arg8: memref<640x128xbf16, #tpu.memory_space<vmem>>, %arg9: memref<1x128xf32, #tpu.memory_space<vmem>>, %arg10: memref<384x128xbf16, #tpu.memory_space<vmem>>, %arg11: memref<1x128xf32, #tpu.memory_space<vmem>>, %arg12: memref<384x128xbf16, #tpu.memory_space<vmem>>, %arg13: memref<1x128xf32, #tpu.memory_space<vmem>>, %arg14: memref<640x128xbf16, #tpu.memory_space<vmem>>, %arg15: memref<1x128xf32, #tpu.memory_space<vmem>>, %arg16: memref<384x128xbf16, #tpu.memory_space<vmem>>, %arg17: memref<1x128xf32, #tpu.memory_space<vmem>>, %arg18: memref<384x128xbf16, #tpu.memory_space<vmem>>, %arg19: memref<1x128xf32, #tpu.memory_space<vmem>>, %arg20: memref<128x256xbf16, #tpu.memory_space<vmem>>, %arg21: memref<1x256xf32, #tpu.memory_space<vmem>>, %arg22: memref<256x128xbf16, #tpu.memory_space<vmem>>, %arg23: memref<1x128xf32, #tpu.memory_space<vmem>>, %arg24: memref<128x128xbf16, #tpu.memory_space<vmem>>, %arg25: memref<1x128xf32, #tpu.memory_space<vmem>>, %arg26: memref<128x128xbf16, #tpu.memory_space<vmem>>, %arg27: memref<1x128xf32, #tpu.memory_space<vmem>>, %arg28: memref<128x128xbf16, #tpu.memory_space<vmem>>, %arg29: memref<1x128xf32, #tpu.memory_space<vmem>>, %arg30: memref<128x256xbf16, #tpu.memory_space<vmem>>, %arg31: memref<128x256xbf16, #tpu.memory_space<vmem>>, %arg32: memref<1x256xf32, #tpu.memory_space<vmem>>, %arg33: memref<256x128xbf16, #tpu.memory_space<vmem>>, %arg34: memref<1x128xf32, #tpu.memory_space<vmem>>, %arg35: memref<2x8xf32, #tpu.memory_space<vmem>>, %arg36: memref<2x128xf32, #tpu.memory_space<vmem>>, %arg37: memref<64x128xf32, #tpu.memory_space<vmem>>) attributes {dimension_semantics = [], scalar_prefetch = 0 : i64, scratch_operands = 1 : i64, tpu.core_type = #tpu.core_type<tc>} {
    %c0 = arith.constant 0 : index
    %c0_0 = arith.constant 0 : index
    %0 = vector.load %arg0[%c0, %c0_0] : memref<64x128xf32, #tpu.memory_space<vmem>>, vector<64x128xf32>
    %1 = tpu.iota {dimensions = array<i32: 0>} : vector<64x1xi32>
    %c32_i32 = arith.constant 32 : i32
    %c0_i32 = arith.constant 0 : i32
    %2 = arith.cmpi eq, %c32_i32, %c0_i32 : i32
    %c1_i32 = arith.constant 1 : i32
    %3 = arith.select %2, %c1_i32, %c32_i32 : i32
    %4 = vector.broadcast %3 : i32 to vector<64x1xi32>
    %5 = arith.remsi %1, %4 : vector<64x1xi32>
    %c0_i32_1 = arith.constant 0 : i32
    %6 = vector.broadcast %c0_i32_1 : i32 to vector<64x1xi32>
    %7 = arith.cmpi ne, %5, %6 : vector<64x1xi32>
    %c0_i32_2 = arith.constant 0 : i32
    %8 = vector.broadcast %c0_i32_2 : i32 to vector<64x1xi32>
    %9 = arith.cmpi slt, %5, %8 : vector<64x1xi32>
    %c0_i32_3 = arith.constant 0 : i32
    %10 = arith.cmpi slt, %3, %c0_i32_3 : i32
    %11 = vector.broadcast %10 : i1 to vector<64x1xi1>
    %12 = vector.broadcast %11 : vector<64x1xi1> to vector<64x1xi1>
    %13 = arith.xori %9, %12 : vector<64x1xi1>
    %14 = arith.andi %13, %7 : vector<64x1xi1>
    %15 = vector.broadcast %3 : i32 to vector<64x1xi32>
    %16 = arith.addi %5, %15 : vector<64x1xi32>
    %17 = arith.select %14, %16, %5 : vector<64x1xi1>, vector<64x1xi32>
    %cst = arith.constant 0.000000e+00 : f32
    %18 = vector.broadcast %cst : f32 to vector<2x128xf32>
    %19 = vector.extract_strided_slice %0 {offsets = [0, 0], sizes = [62, 128], strides = [1, 1]} : vector<64x128xf32> to vector<62x128xf32>
    %20 = tpu.concatenate %18, %19 in 0 : vector<2x128xf32>, vector<62x128xf32> -> vector<64x128xf32>
    %c-2_i32 = arith.constant -2 : i32
    %21 = vector.broadcast %c-2_i32 : i32 to vector<64x1xi32>
    %22 = arith.addi %17, %21 : vector<64x1xi32>
    %c0_i32_4 = arith.constant 0 : i32
    %23 = vector.broadcast %c0_i32_4 : i32 to vector<64x1xi32>
    %24 = arith.cmpi sge, %22, %23 : vector<64x1xi32>
    %c-2_i32_5 = arith.constant -2 : i32
    %25 = vector.broadcast %c-2_i32_5 : i32 to vector<64x1xi32>
    %26 = arith.addi %17, %25 : vector<64x1xi32>
    %c32_i32_6 = arith.constant 32 : i32
    %27 = vector.broadcast %c32_i32_6 : i32 to vector<64x1xi32>
    %28 = arith.cmpi slt, %26, %27 : vector<64x1xi32>
    %29 = arith.andi %24, %28 : vector<64x1xi1>
    %cst_7 = arith.constant 0.000000e+00 : f32
    %30 = vector.shape_cast %29 : vector<64x1xi1> to vector<64x1xi1>
    %31 = vector.broadcast %30 : vector<64x1xi1> to vector<64x128xi1>
    %32 = vector.broadcast %cst_7 : f32 to vector<64x128xf32>
    %33 = arith.select %31, %20, %32 : vector<64x128xi1>, vector<64x128xf32>
    %cst_8 = arith.constant 0.000000e+00 : f32
    %34 = vector.broadcast %cst_8 : f32 to vector<1x128xf32>
    %35 = vector.extract_strided_slice %0 {offsets = [0, 0], sizes = [63, 128], strides = [1, 1]} : vector<64x128xf32> to vector<63x128xf32>
    %36 = tpu.concatenate %34, %35 in 0 : vector<1x128xf32>, vector<63x128xf32> -> vector<64x128xf32>
    %c-1_i32 = arith.constant -1 : i32
    %37 = vector.broadcast %c-1_i32 : i32 to vector<64x1xi32>
    %38 = arith.addi %17, %37 : vector<64x1xi32>
    %c0_i32_9 = arith.constant 0 : i32
    %39 = vector.broadcast %c0_i32_9 : i32 to vector<64x1xi32>
    %40 = arith.cmpi sge, %38, %39 : vector<64x1xi32>
    %c-1_i32_10 = arith.constant -1 : i32
    %41 = vector.broadcast %c-1_i32_10 : i32 to vector<64x1xi32>
    %42 = arith.addi %17, %41 : vector<64x1xi32>
    %c32_i32_11 = arith.constant 32 : i32
    %43 = vector.broadcast %c32_i32_11 : i32 to vector<64x1xi32>
    %44 = arith.cmpi slt, %42, %43 : vector<64x1xi32>
    %45 = arith.andi %40, %44 : vector<64x1xi1>
    %cst_12 = arith.constant 0.000000e+00 : f32
    %46 = vector.shape_cast %45 : vector<64x1xi1> to vector<64x1xi1>
    %47 = vector.broadcast %46 : vector<64x1xi1> to vector<64x128xi1>
    %48 = vector.broadcast %cst_12 : f32 to vector<64x128xf32>
    %49 = arith.select %47, %36, %48 : vector<64x128xi1>, vector<64x128xf32>
    %cst_13 = arith.constant 0.000000e+00 : f32
    %50 = vector.broadcast %cst_13 : f32 to vector<1x128xf32>
    %51 = vector.extract_strided_slice %0 {offsets = [1, 0], sizes = [63, 128], strides = [1, 1]} : vector<64x128xf32> to vector<63x128xf32>
    %52 = tpu.concatenate %51, %50 in 0 : vector<63x128xf32>, vector<1x128xf32> -> vector<64x128xf32>
    %c1_i32_14 = arith.constant 1 : i32
    %53 = vector.broadcast %c1_i32_14 : i32 to vector<64x1xi32>
    %54 = arith.addi %17, %53 : vector<64x1xi32>
    %c0_i32_15 = arith.constant 0 : i32
    %55 = vector.broadcast %c0_i32_15 : i32 to vector<64x1xi32>
    %56 = arith.cmpi sge, %54, %55 : vector<64x1xi32>
    %c1_i32_16 = arith.constant 1 : i32
    %57 = vector.broadcast %c1_i32_16 : i32 to vector<64x1xi32>
    %58 = arith.addi %17, %57 : vector<64x1xi32>
    %c32_i32_17 = arith.constant 32 : i32
    %59 = vector.broadcast %c32_i32_17 : i32 to vector<64x1xi32>
    %60 = arith.cmpi slt, %58, %59 : vector<64x1xi32>
    %61 = arith.andi %56, %60 : vector<64x1xi1>
    %cst_18 = arith.constant 0.000000e+00 : f32
    %62 = vector.shape_cast %61 : vector<64x1xi1> to vector<64x1xi1>
    %63 = vector.broadcast %62 : vector<64x1xi1> to vector<64x128xi1>
    %64 = vector.broadcast %cst_18 : f32 to vector<64x128xf32>
    %65 = arith.select %63, %52, %64 : vector<64x128xi1>, vector<64x128xf32>
    %cst_19 = arith.constant 0.000000e+00 : f32
    %66 = vector.broadcast %cst_19 : f32 to vector<2x128xf32>
    %67 = vector.extract_strided_slice %0 {offsets = [2, 0], sizes = [62, 128], strides = [1, 1]} : vector<64x128xf32> to vector<62x128xf32>
    %68 = tpu.concatenate %67, %66 in 0 : vector<62x128xf32>, vector<2x128xf32> -> vector<64x128xf32>
    %c2_i32 = arith.constant 2 : i32
    %69 = vector.broadcast %c2_i32 : i32 to vector<64x1xi32>
    %70 = arith.addi %17, %69 : vector<64x1xi32>
    %c0_i32_20 = arith.constant 0 : i32
    %71 = vector.broadcast %c0_i32_20 : i32 to vector<64x1xi32>
    %72 = arith.cmpi sge, %70, %71 : vector<64x1xi32>
    %c2_i32_21 = arith.constant 2 : i32
    %73 = vector.broadcast %c2_i32_21 : i32 to vector<64x1xi32>
    %74 = arith.addi %17, %73 : vector<64x1xi32>
    %c32_i32_22 = arith.constant 32 : i32
    %75 = vector.broadcast %c32_i32_22 : i32 to vector<64x1xi32>
    %76 = arith.cmpi slt, %74, %75 : vector<64x1xi32>
    %77 = arith.andi %72, %76 : vector<64x1xi1>
    %cst_23 = arith.constant 0.000000e+00 : f32
    %78 = vector.shape_cast %77 : vector<64x1xi1> to vector<64x1xi1>
    %79 = vector.broadcast %78 : vector<64x1xi1> to vector<64x128xi1>
    %80 = vector.broadcast %cst_23 : f32 to vector<64x128xf32>
    %81 = arith.select %79, %68, %80 : vector<64x128xi1>, vector<64x128xf32>
    %82 = tpu.concatenate %33, %49, %0, %65, %81 in 1 : vector<64x128xf32>, vector<64x128xf32>, vector<64x128xf32>, vector<64x128xf32>, vector<64x128xf32> -> vector<64x640xf32>
    %83 = arith.truncf %82 : vector<64x640xf32> to vector<64x640xbf16>
    %c0_24 = arith.constant 0 : index
    %c0_25 = arith.constant 0 : index
    %84 = vector.load %arg2[%c0_24, %c0_25] : memref<640x128xbf16, #tpu.memory_space<vmem>>, vector<640x128xbf16>
    %cst_26 = arith.constant dense<0.000000e+00> : vector<64x128xf32>
    %85 = tpu.matmul %83, %84, %cst_26 {dimension_numbers = #tpu.dot_dimension_numbers<[1], [0], [0], [1], [0, 0, 1, 1], [], []>} : vector<64x640xbf16>, vector<640x128xbf16>, vector<64x128xf32> -> vector<64x128xf32>
    %c0_27 = arith.constant 0 : index
    %c0_28 = arith.constant 0 : index
    %86 = vector.load %arg3[%c0_27, %c0_28] : memref<1x128xf32, #tpu.memory_space<vmem>>, vector<1x128xf32>
    %87 = vector.broadcast %86 : vector<1x128xf32> to vector<64x128xf32>
    %88 = arith.addf %85, %87 : vector<64x128xf32>
    %cst_29 = arith.constant 0.000000e+00 : f32
    %89 = vector.broadcast %cst_29 : f32 to vector<64x128xf32>
    %90 = arith.maximumf %88, %89 : vector<64x128xf32>
    %c0_30 = arith.constant 0 : index
    %c0_31 = arith.constant 0 : index
    %91 = vector.load %arg37[%c0_30, %c0_31] : memref<64x128xf32, #tpu.memory_space<vmem>>, vector<64x128xf32>
    tpu.vector_store %arg37[%c0_30, %c0_31], %90 {strides = array<i32>} : memref<64x128xf32, #tpu.memory_space<vmem>>, vector<64x128xf32>,
    %c0_32 = arith.constant 0 : index
    %c0_33 = arith.constant 0 : index
    %92 = tpu.strided_load %arg37[%c0_32, %c0_33] {strides = array<i32: 2, 1>} : memref<64x128xf32, #tpu.memory_space<vmem>>, vector<32x128xf32>
    %c1 = arith.constant 1 : index
    %c0_34 = arith.constant 0 : index
    %93 = tpu.strided_load %arg37[%c1, %c0_34] {strides = array<i32: 2, 1>} : memref<64x128xf32, #tpu.memory_space<vmem>>, vector<32x128xf32>
    %94 = arith.maximumf %92, %93 : vector<32x128xf32>
    %95 = tpu.iota {dimensions = array<i32: 0>} : vector<32x1xi32>
    %c16_i32 = arith.constant 16 : i32
    %c0_i32_35 = arith.constant 0 : i32
    %96 = arith.cmpi eq, %c16_i32, %c0_i32_35 : i32
    %c1_i32_36 = arith.constant 1 : i32
    %97 = arith.select %96, %c1_i32_36, %c16_i32 : i32
    %98 = vector.broadcast %97 : i32 to vector<32x1xi32>
    %99 = arith.remsi %95, %98 : vector<32x1xi32>
    %c0_i32_37 = arith.constant 0 : i32
    %100 = vector.broadcast %c0_i32_37 : i32 to vector<32x1xi32>
    %101 = arith.cmpi ne, %99, %100 : vector<32x1xi32>
    %c0_i32_38 = arith.constant 0 : i32
    %102 = vector.broadcast %c0_i32_38 : i32 to vector<32x1xi32>
    %103 = arith.cmpi slt, %99, %102 : vector<32x1xi32>
    %c0_i32_39 = arith.constant 0 : i32
    %104 = arith.cmpi slt, %97, %c0_i32_39 : i32
    %105 = vector.broadcast %104 : i1 to vector<32x1xi1>
    %106 = vector.broadcast %105 : vector<32x1xi1> to vector<32x1xi1>
    %107 = arith.xori %103, %106 : vector<32x1xi1>
    %108 = arith.andi %107, %101 : vector<32x1xi1>
    %109 = vector.broadcast %97 : i32 to vector<32x1xi32>
    %110 = arith.addi %99, %109 : vector<32x1xi32>
    %111 = arith.select %108, %110, %99 : vector<32x1xi1>, vector<32x1xi32>
    %cst_40 = arith.constant 0.000000e+00 : f32
    %112 = vector.broadcast %cst_40 : f32 to vector<1x128xf32>
    %113 = vector.extract_strided_slice %94 {offsets = [0, 0], sizes = [31, 128], strides = [1, 1]} : vector<32x128xf32> to vector<31x128xf32>
    %114 = tpu.concatenate %112, %113 in 0 : vector<1x128xf32>, vector<31x128xf32> -> vector<32x128xf32>
    %c-1_i32_41 = arith.constant -1 : i32
    %115 = vector.broadcast %c-1_i32_41 : i32 to vector<32x1xi32>
    %116 = arith.addi %111, %115 : vector<32x1xi32>
    %c0_i32_42 = arith.constant 0 : i32
    %117 = vector.broadcast %c0_i32_42 : i32 to vector<32x1xi32>
    %118 = arith.cmpi sge, %116, %117 : vector<32x1xi32>
    %c-1_i32_43 = arith.constant -1 : i32
    %119 = vector.broadcast %c-1_i32_43 : i32 to vector<32x1xi32>
    %120 = arith.addi %111, %119 : vector<32x1xi32>
    %c16_i32_44 = arith.constant 16 : i32
    %121 = vector.broadcast %c16_i32_44 : i32 to vector<32x1xi32>
    %122 = arith.cmpi slt, %120, %121 : vector<32x1xi32>
    %123 = arith.andi %118, %122 : vector<32x1xi1>
    %cst_45 = arith.constant 0.000000e+00 : f32
    %124 = vector.shape_cast %123 : vector<32x1xi1> to vector<32x1xi1>
    %125 = vector.broadcast %124 : vector<32x1xi1> to vector<32x128xi1>
    %126 = vector.broadcast %cst_45 : f32 to vector<32x128xf32>
    %127 = arith.select %125, %114, %126 : vector<32x128xi1>, vector<32x128xf32>
    %cst_46 = arith.constant 0.000000e+00 : f32
    %128 = vector.broadcast %cst_46 : f32 to vector<1x128xf32>
    %129 = vector.extract_strided_slice %94 {offsets = [1, 0], sizes = [31, 128], strides = [1, 1]} : vector<32x128xf32> to vector<31x128xf32>
    %130 = tpu.concatenate %129, %128 in 0 : vector<31x128xf32>, vector<1x128xf32> -> vector<32x128xf32>
    %c1_i32_47 = arith.constant 1 : i32
    %131 = vector.broadcast %c1_i32_47 : i32 to vector<32x1xi32>
    %132 = arith.addi %111, %131 : vector<32x1xi32>
    %c0_i32_48 = arith.constant 0 : i32
    %133 = vector.broadcast %c0_i32_48 : i32 to vector<32x1xi32>
    %134 = arith.cmpi sge, %132, %133 : vector<32x1xi32>
    %c1_i32_49 = arith.constant 1 : i32
    %135 = vector.broadcast %c1_i32_49 : i32 to vector<32x1xi32>
    %136 = arith.addi %111, %135 : vector<32x1xi32>
    %c16_i32_50 = arith.constant 16 : i32
    %137 = vector.broadcast %c16_i32_50 : i32 to vector<32x1xi32>
    %138 = arith.cmpi slt, %136, %137 : vector<32x1xi32>
    %139 = arith.andi %134, %138 : vector<32x1xi1>
    %cst_51 = arith.constant 0.000000e+00 : f32
    %140 = vector.shape_cast %139 : vector<32x1xi1> to vector<32x1xi1>
    %141 = vector.broadcast %140 : vector<32x1xi1> to vector<32x128xi1>
    %142 = vector.broadcast %cst_51 : f32 to vector<32x128xf32>
    %143 = arith.select %141, %130, %142 : vector<32x128xi1>, vector<32x128xf32>
    %144 = tpu.concatenate %127, %94, %143 in 1 : vector<32x128xf32>, vector<32x128xf32>, vector<32x128xf32> -> vector<32x384xf32>
    %145 = arith.truncf %144 : vector<32x384xf32> to vector<32x384xbf16>
    %c0_52 = arith.constant 0 : index
    %c0_53 = arith.constant 0 : index
    %146 = vector.load %arg4[%c0_52, %c0_53] : memref<384x128xbf16, #tpu.memory_space<vmem>>, vector<384x128xbf16>
    %cst_54 = arith.constant dense<0.000000e+00> : vector<32x128xf32>
    %147 = tpu.matmul %145, %146, %cst_54 {dimension_numbers = #tpu.dot_dimension_numbers<[1], [0], [0], [1], [0, 0, 1, 1], [], []>} : vector<32x384xbf16>, vector<384x128xbf16>, vector<32x128xf32> -> vector<32x128xf32>
    %c0_55 = arith.constant 0 : index
    %c0_56 = arith.constant 0 : index
    %148 = vector.load %arg5[%c0_55, %c0_56] : memref<1x128xf32, #tpu.memory_space<vmem>>, vector<1x128xf32>
    %149 = vector.broadcast %148 : vector<1x128xf32> to vector<32x128xf32>
    %150 = arith.addf %147, %149 : vector<32x128xf32>
    %cst_57 = arith.constant 0.000000e+00 : f32
    %151 = vector.broadcast %cst_57 : f32 to vector<32x128xf32>
    %152 = arith.maximumf %150, %151 : vector<32x128xf32>
    %153 = tpu.iota {dimensions = array<i32: 0>} : vector<32x1xi32>
    %c16_i32_58 = arith.constant 16 : i32
    %c0_i32_59 = arith.constant 0 : i32
    %154 = arith.cmpi eq, %c16_i32_58, %c0_i32_59 : i32
    %c1_i32_60 = arith.constant 1 : i32
    %155 = arith.select %154, %c1_i32_60, %c16_i32_58 : i32
    %156 = vector.broadcast %155 : i32 to vector<32x1xi32>
    %157 = arith.remsi %153, %156 : vector<32x1xi32>
    %c0_i32_61 = arith.constant 0 : i32
    %158 = vector.broadcast %c0_i32_61 : i32 to vector<32x1xi32>
    %159 = arith.cmpi ne, %157, %158 : vector<32x1xi32>
    %c0_i32_62 = arith.constant 0 : i32
    %160 = vector.broadcast %c0_i32_62 : i32 to vector<32x1xi32>
    %161 = arith.cmpi slt, %157, %160 : vector<32x1xi32>
    %c0_i32_63 = arith.constant 0 : i32
    %162 = arith.cmpi slt, %155, %c0_i32_63 : i32
    %163 = vector.broadcast %162 : i1 to vector<32x1xi1>
    %164 = vector.broadcast %163 : vector<32x1xi1> to vector<32x1xi1>
    %165 = arith.xori %161, %164 : vector<32x1xi1>
    %166 = arith.andi %165, %159 : vector<32x1xi1>
    %167 = vector.broadcast %155 : i32 to vector<32x1xi32>
    %168 = arith.addi %157, %167 : vector<32x1xi32>
    %169 = arith.select %166, %168, %157 : vector<32x1xi1>, vector<32x1xi32>
    %cst_64 = arith.constant 0.000000e+00 : f32
    %170 = vector.broadcast %cst_64 : f32 to vector<1x128xf32>
    %171 = vector.extract_strided_slice %152 {offsets = [0, 0], sizes = [31, 128], strides = [1, 1]} : vector<32x128xf32> to vector<31x128xf32>
    %172 = tpu.concatenate %170, %171 in 0 : vector<1x128xf32>, vector<31x128xf32> -> vector<32x128xf32>
    %c-1_i32_65 = arith.constant -1 : i32
    %173 = vector.broadcast %c-1_i32_65 : i32 to vector<32x1xi32>
    %174 = arith.addi %169, %173 : vector<32x1xi32>
    %c0_i32_66 = arith.constant 0 : i32
    %175 = vector.broadcast %c0_i32_66 : i32 to vector<32x1xi32>
    %176 = arith.cmpi sge, %174, %175 : vector<32x1xi32>
    %c-1_i32_67 = arith.constant -1 : i32
    %177 = vector.broadcast %c-1_i32_67 : i32 to vector<32x1xi32>
    %178 = arith.addi %169, %177 : vector<32x1xi32>
    %c16_i32_68 = arith.constant 16 : i32
    %179 = vector.broadcast %c16_i32_68 : i32 to vector<32x1xi32>
    %180 = arith.cmpi slt, %178, %179 : vector<32x1xi32>
    %181 = arith.andi %176, %180 : vector<32x1xi1>
    %cst_69 = arith.constant 0.000000e+00 : f32
    %182 = vector.shape_cast %181 : vector<32x1xi1> to vector<32x1xi1>
    %183 = vector.broadcast %182 : vector<32x1xi1> to vector<32x128xi1>
    %184 = vector.broadcast %cst_69 : f32 to vector<32x128xf32>
    %185 = arith.select %183, %172, %184 : vector<32x128xi1>, vector<32x128xf32>
    %cst_70 = arith.constant 0.000000e+00 : f32
    %186 = vector.broadcast %cst_70 : f32 to vector<1x128xf32>
    %187 = vector.extract_strided_slice %152 {offsets = [1, 0], sizes = [31, 128], strides = [1, 1]} : vector<32x128xf32> to vector<31x128xf32>
    %188 = tpu.concatenate %187, %186 in 0 : vector<31x128xf32>, vector<1x128xf32> -> vector<32x128xf32>
    %c1_i32_71 = arith.constant 1 : i32
    %189 = vector.broadcast %c1_i32_71 : i32 to vector<32x1xi32>
    %190 = arith.addi %169, %189 : vector<32x1xi32>
    %c0_i32_72 = arith.constant 0 : i32
    %191 = vector.broadcast %c0_i32_72 : i32 to vector<32x1xi32>
    %192 = arith.cmpi sge, %190, %191 : vector<32x1xi32>
    %c1_i32_73 = arith.constant 1 : i32
    %193 = vector.broadcast %c1_i32_73 : i32 to vector<32x1xi32>
    %194 = arith.addi %169, %193 : vector<32x1xi32>
    %c16_i32_74 = arith.constant 16 : i32
    %195 = vector.broadcast %c16_i32_74 : i32 to vector<32x1xi32>
    %196 = arith.cmpi slt, %194, %195 : vector<32x1xi32>
    %197 = arith.andi %192, %196 : vector<32x1xi1>
    %cst_75 = arith.constant 0.000000e+00 : f32
    %198 = vector.shape_cast %197 : vector<32x1xi1> to vector<32x1xi1>
    %199 = vector.broadcast %198 : vector<32x1xi1> to vector<32x128xi1>
    %200 = vector.broadcast %cst_75 : f32 to vector<32x128xf32>
    %201 = arith.select %199, %188, %200 : vector<32x128xi1>, vector<32x128xf32>
    %202 = tpu.concatenate %185, %152, %201 in 1 : vector<32x128xf32>, vector<32x128xf32>, vector<32x128xf32> -> vector<32x384xf32>
    %203 = arith.truncf %202 : vector<32x384xf32> to vector<32x384xbf16>
    %c0_76 = arith.constant 0 : index
    %c0_77 = arith.constant 0 : index
    %204 = vector.load %arg6[%c0_76, %c0_77] : memref<384x128xbf16, #tpu.memory_space<vmem>>, vector<384x128xbf16>
    %cst_78 = arith.constant dense<0.000000e+00> : vector<32x128xf32>
    %205 = tpu.matmul %203, %204, %cst_78 {dimension_numbers = #tpu.dot_dimension_numbers<[1], [0], [0], [1], [0, 0, 1, 1], [], []>} : vector<32x384xbf16>, vector<384x128xbf16>, vector<32x128xf32> -> vector<32x128xf32>
    %c0_79 = arith.constant 0 : index
    %c0_80 = arith.constant 0 : index
    %206 = vector.load %arg7[%c0_79, %c0_80] : memref<1x128xf32, #tpu.memory_space<vmem>>, vector<1x128xf32>
    %207 = vector.broadcast %206 : vector<1x128xf32> to vector<32x128xf32>
    %208 = arith.addf %205, %207 : vector<32x128xf32>
    %209 = arith.addf %208, %94 : vector<32x128xf32>
    %cst_81 = arith.constant 0.000000e+00 : f32
    %210 = vector.broadcast %cst_81 : f32 to vector<32x128xf32>
    %211 = arith.maximumf %209, %210 : vector<32x128xf32>
    %212 = tpu.iota {dimensions = array<i32: 0>} : vector<32x1xi32>
    %c16_i32_82 = arith.constant 16 : i32
    %c0_i32_83 = arith.constant 0 : i32
    %213 = arith.cmpi eq, %c16_i32_82, %c0_i32_83 : i32
    %c1_i32_84 = arith.constant 1 : i32
    %214 = arith.select %213, %c1_i32_84, %c16_i32_82 : i32
    %215 = vector.broadcast %214 : i32 to vector<32x1xi32>
    %216 = arith.remsi %212, %215 : vector<32x1xi32>
    %c0_i32_85 = arith.constant 0 : i32
    %217 = vector.broadcast %c0_i32_85 : i32 to vector<32x1xi32>
    %218 = arith.cmpi ne, %216, %217 : vector<32x1xi32>
    %c0_i32_86 = arith.constant 0 : i32
    %219 = vector.broadcast %c0_i32_86 : i32 to vector<32x1xi32>
    %220 = arith.cmpi slt, %216, %219 : vector<32x1xi32>
    %c0_i32_87 = arith.constant 0 : i32
    %221 = arith.cmpi slt, %214, %c0_i32_87 : i32
    %222 = vector.broadcast %221 : i1 to vector<32x1xi1>
    %223 = vector.broadcast %222 : vector<32x1xi1> to vector<32x1xi1>
    %224 = arith.xori %220, %223 : vector<32x1xi1>
    %225 = arith.andi %224, %218 : vector<32x1xi1>
    %226 = vector.broadcast %214 : i32 to vector<32x1xi32>
    %227 = arith.addi %216, %226 : vector<32x1xi32>
    %228 = arith.select %225, %227, %216 : vector<32x1xi1>, vector<32x1xi32>
    %cst_88 = arith.constant 0.000000e+00 : f32
    %229 = vector.broadcast %cst_88 : f32 to vector<2x128xf32>
    %230 = vector.extract_strided_slice %211 {offsets = [0, 0], sizes = [30, 128], strides = [1, 1]} : vector<32x128xf32> to vector<30x128xf32>
    %231 = tpu.concatenate %229, %230 in 0 : vector<2x128xf32>, vector<30x128xf32> -> vector<32x128xf32>
    %c-2_i32_89 = arith.constant -2 : i32
    %232 = vector.broadcast %c-2_i32_89 : i32 to vector<32x1xi32>
    %233 = arith.addi %228, %232 : vector<32x1xi32>
    %c0_i32_90 = arith.constant 0 : i32
    %234 = vector.broadcast %c0_i32_90 : i32 to vector<32x1xi32>
    %235 = arith.cmpi sge, %233, %234 : vector<32x1xi32>
    %c-2_i32_91 = arith.constant -2 : i32
    %236 = vector.broadcast %c-2_i32_91 : i32 to vector<32x1xi32>
    %237 = arith.addi %228, %236 : vector<32x1xi32>
    %c16_i32_92 = arith.constant 16 : i32
    %238 = vector.broadcast %c16_i32_92 : i32 to vector<32x1xi32>
    %239 = arith.cmpi slt, %237, %238 : vector<32x1xi32>
    %240 = arith.andi %235, %239 : vector<32x1xi1>
    %cst_93 = arith.constant 0.000000e+00 : f32
    %241 = vector.shape_cast %240 : vector<32x1xi1> to vector<32x1xi1>
    %242 = vector.broadcast %241 : vector<32x1xi1> to vector<32x128xi1>
    %243 = vector.broadcast %cst_93 : f32 to vector<32x128xf32>
    %244 = arith.select %242, %231, %243 : vector<32x128xi1>, vector<32x128xf32>
    %cst_94 = arith.constant 0.000000e+00 : f32
    %245 = vector.broadcast %cst_94 : f32 to vector<1x128xf32>
    %246 = vector.extract_strided_slice %211 {offsets = [0, 0], sizes = [31, 128], strides = [1, 1]} : vector<32x128xf32> to vector<31x128xf32>
    %247 = tpu.concatenate %245, %246 in 0 : vector<1x128xf32>, vector<31x128xf32> -> vector<32x128xf32>
    %c-1_i32_95 = arith.constant -1 : i32
    %248 = vector.broadcast %c-1_i32_95 : i32 to vector<32x1xi32>
    %249 = arith.addi %228, %248 : vector<32x1xi32>
    %c0_i32_96 = arith.constant 0 : i32
    %250 = vector.broadcast %c0_i32_96 : i32 to vector<32x1xi32>
    %251 = arith.cmpi sge, %249, %250 : vector<32x1xi32>
    %c-1_i32_97 = arith.constant -1 : i32
    %252 = vector.broadcast %c-1_i32_97 : i32 to vector<32x1xi32>
    %253 = arith.addi %228, %252 : vector<32x1xi32>
    %c16_i32_98 = arith.constant 16 : i32
    %254 = vector.broadcast %c16_i32_98 : i32 to vector<32x1xi32>
    %255 = arith.cmpi slt, %253, %254 : vector<32x1xi32>
    %256 = arith.andi %251, %255 : vector<32x1xi1>
    %cst_99 = arith.constant 0.000000e+00 : f32
    %257 = vector.shape_cast %256 : vector<32x1xi1> to vector<32x1xi1>
    %258 = vector.broadcast %257 : vector<32x1xi1> to vector<32x128xi1>
    %259 = vector.broadcast %cst_99 : f32 to vector<32x128xf32>
    %260 = arith.select %258, %247, %259 : vector<32x128xi1>, vector<32x128xf32>
    %cst_100 = arith.constant 0.000000e+00 : f32
    %261 = vector.broadcast %cst_100 : f32 to vector<1x128xf32>
    %262 = vector.extract_strided_slice %211 {offsets = [1, 0], sizes = [31, 128], strides = [1, 1]} : vector<32x128xf32> to vector<31x128xf32>
    %263 = tpu.concatenate %262, %261 in 0 : vector<31x128xf32>, vector<1x128xf32> -> vector<32x128xf32>
    %c1_i32_101 = arith.constant 1 : i32
    %264 = vector.broadcast %c1_i32_101 : i32 to vector<32x1xi32>
    %265 = arith.addi %228, %264 : vector<32x1xi32>
    %c0_i32_102 = arith.constant 0 : i32
    %266 = vector.broadcast %c0_i32_102 : i32 to vector<32x1xi32>
    %267 = arith.cmpi sge, %265, %266 : vector<32x1xi32>
    %c1_i32_103 = arith.constant 1 : i32
    %268 = vector.broadcast %c1_i32_103 : i32 to vector<32x1xi32>
    %269 = arith.addi %228, %268 : vector<32x1xi32>
    %c16_i32_104 = arith.constant 16 : i32
    %270 = vector.broadcast %c16_i32_104 : i32 to vector<32x1xi32>
    %271 = arith.cmpi slt, %269, %270 : vector<32x1xi32>
    %272 = arith.andi %267, %271 : vector<32x1xi1>
    %cst_105 = arith.constant 0.000000e+00 : f32
    %273 = vector.shape_cast %272 : vector<32x1xi1> to vector<32x1xi1>
    %274 = vector.broadcast %273 : vector<32x1xi1> to vector<32x128xi1>
    %275 = vector.broadcast %cst_105 : f32 to vector<32x128xf32>
    %276 = arith.select %274, %263, %275 : vector<32x128xi1>, vector<32x128xf32>
    %cst_106 = arith.constant 0.000000e+00 : f32
    %277 = vector.broadcast %cst_106 : f32 to vector<2x128xf32>
    %278 = vector.extract_strided_slice %211 {offsets = [2, 0], sizes = [30, 128], strides = [1, 1]} : vector<32x128xf32> to vector<30x128xf32>
    %279 = tpu.concatenate %278, %277 in 0 : vector<30x128xf32>, vector<2x128xf32> -> vector<32x128xf32>
    %c2_i32_107 = arith.constant 2 : i32
    %280 = vector.broadcast %c2_i32_107 : i32 to vector<32x1xi32>
    %281 = arith.addi %228, %280 : vector<32x1xi32>
    %c0_i32_108 = arith.constant 0 : i32
    %282 = vector.broadcast %c0_i32_108 : i32 to vector<32x1xi32>
    %283 = arith.cmpi sge, %281, %282 : vector<32x1xi32>
    %c2_i32_109 = arith.constant 2 : i32
    %284 = vector.broadcast %c2_i32_109 : i32 to vector<32x1xi32>
    %285 = arith.addi %228, %284 : vector<32x1xi32>
    %c16_i32_110 = arith.constant 16 : i32
    %286 = vector.broadcast %c16_i32_110 : i32 to vector<32x1xi32>
    %287 = arith.cmpi slt, %285, %286 : vector<32x1xi32>
    %288 = arith.andi %283, %287 : vector<32x1xi1>
    %cst_111 = arith.constant 0.000000e+00 : f32
    %289 = vector.shape_cast %288 : vector<32x1xi1> to vector<32x1xi1>
    %290 = vector.broadcast %289 : vector<32x1xi1> to vector<32x128xi1>
    %291 = vector.broadcast %cst_111 : f32 to vector<32x128xf32>
    %292 = arith.select %290, %279, %291 : vector<32x128xi1>, vector<32x128xf32>
    %293 = tpu.concatenate %244, %260, %211, %276, %292 in 1 : vector<32x128xf32>, vector<32x128xf32>, vector<32x128xf32>, vector<32x128xf32>, vector<32x128xf32> -> vector<32x640xf32>
    %294 = arith.truncf %293 : vector<32x640xf32> to vector<32x640xbf16>
    %c0_112 = arith.constant 0 : index
    %c0_113 = arith.constant 0 : index
    %295 = vector.load %arg8[%c0_112, %c0_113] : memref<640x128xbf16, #tpu.memory_space<vmem>>, vector<640x128xbf16>
    %cst_114 = arith.constant dense<0.000000e+00> : vector<32x128xf32>
    %296 = tpu.matmul %294, %295, %cst_114 {dimension_numbers = #tpu.dot_dimension_numbers<[1], [0], [0], [1], [0, 0, 1, 1], [], []>} : vector<32x640xbf16>, vector<640x128xbf16>, vector<32x128xf32> -> vector<32x128xf32>
    %c0_115 = arith.constant 0 : index
    %c0_116 = arith.constant 0 : index
    %297 = vector.load %arg9[%c0_115, %c0_116] : memref<1x128xf32, #tpu.memory_space<vmem>>, vector<1x128xf32>
    %298 = vector.broadcast %297 : vector<1x128xf32> to vector<32x128xf32>
    %299 = arith.addf %296, %298 : vector<32x128xf32>
    %cst_117 = arith.constant 0.000000e+00 : f32
    %300 = vector.broadcast %cst_117 : f32 to vector<32x128xf32>
    %301 = arith.maximumf %299, %300 : vector<32x128xf32>
    %c0_118 = arith.constant 0 : index
    %c0_119 = arith.constant 0 : index
    %302 = vector.load %arg37[%c0_118, %c0_119] : memref<64x128xf32, #tpu.memory_space<vmem>>, vector<32x128xf32>
    tpu.vector_store %arg37[%c0_118, %c0_119], %301 {strides = array<i32>} : memref<64x128xf32, #tpu.memory_space<vmem>>, vector<32x128xf32>,
    %c0_120 = arith.constant 0 : index
    %c0_121 = arith.constant 0 : index
    %303 = tpu.strided_load %arg37[%c0_120, %c0_121] {strides = array<i32: 2, 1>} : memref<64x128xf32, #tpu.memory_space<vmem>>, vector<16x128xf32>
    %c1_122 = arith.constant 1 : index
    %c0_123 = arith.constant 0 : index
    %304 = tpu.strided_load %arg37[%c1_122, %c0_123] {strides = array<i32: 2, 1>} : memref<64x128xf32, #tpu.memory_space<vmem>>, vector<16x128xf32>
    %305 = arith.maximumf %303, %304 : vector<16x128xf32>
    %306 = tpu.iota {dimensions = array<i32: 0>} : vector<16x1xi32>
    %c8_i32 = arith.constant 8 : i32
    %c0_i32_124 = arith.constant 0 : i32
    %307 = arith.cmpi eq, %c8_i32, %c0_i32_124 : i32
    %c1_i32_125 = arith.constant 1 : i32
    %308 = arith.select %307, %c1_i32_125, %c8_i32 : i32
    %309 = vector.broadcast %308 : i32 to vector<16x1xi32>
    %310 = arith.remsi %306, %309 : vector<16x1xi32>
    %c0_i32_126 = arith.constant 0 : i32
    %311 = vector.broadcast %c0_i32_126 : i32 to vector<16x1xi32>
    %312 = arith.cmpi ne, %310, %311 : vector<16x1xi32>
    %c0_i32_127 = arith.constant 0 : i32
    %313 = vector.broadcast %c0_i32_127 : i32 to vector<16x1xi32>
    %314 = arith.cmpi slt, %310, %313 : vector<16x1xi32>
    %c0_i32_128 = arith.constant 0 : i32
    %315 = arith.cmpi slt, %308, %c0_i32_128 : i32
    %316 = vector.broadcast %315 : i1 to vector<16x1xi1>
    %317 = vector.broadcast %316 : vector<16x1xi1> to vector<16x1xi1>
    %318 = arith.xori %314, %317 : vector<16x1xi1>
    %319 = arith.andi %318, %312 : vector<16x1xi1>
    %320 = vector.broadcast %308 : i32 to vector<16x1xi32>
    %321 = arith.addi %310, %320 : vector<16x1xi32>
    %322 = arith.select %319, %321, %310 : vector<16x1xi1>, vector<16x1xi32>
    %cst_129 = arith.constant 0.000000e+00 : f32
    %323 = vector.broadcast %cst_129 : f32 to vector<1x128xf32>
    %324 = vector.extract_strided_slice %305 {offsets = [0, 0], sizes = [15, 128], strides = [1, 1]} : vector<16x128xf32> to vector<15x128xf32>
    %325 = tpu.concatenate %323, %324 in 0 : vector<1x128xf32>, vector<15x128xf32> -> vector<16x128xf32>
    %c-1_i32_130 = arith.constant -1 : i32
    %326 = vector.broadcast %c-1_i32_130 : i32 to vector<16x1xi32>
    %327 = arith.addi %322, %326 : vector<16x1xi32>
    %c0_i32_131 = arith.constant 0 : i32
    %328 = vector.broadcast %c0_i32_131 : i32 to vector<16x1xi32>
    %329 = arith.cmpi sge, %327, %328 : vector<16x1xi32>
    %c-1_i32_132 = arith.constant -1 : i32
    %330 = vector.broadcast %c-1_i32_132 : i32 to vector<16x1xi32>
    %331 = arith.addi %322, %330 : vector<16x1xi32>
    %c8_i32_133 = arith.constant 8 : i32
    %332 = vector.broadcast %c8_i32_133 : i32 to vector<16x1xi32>
    %333 = arith.cmpi slt, %331, %332 : vector<16x1xi32>
    %334 = arith.andi %329, %333 : vector<16x1xi1>
    %cst_134 = arith.constant 0.000000e+00 : f32
    %335 = vector.shape_cast %334 : vector<16x1xi1> to vector<16x1xi1>
    %336 = vector.broadcast %335 : vector<16x1xi1> to vector<16x128xi1>
    %337 = vector.broadcast %cst_134 : f32 to vector<16x128xf32>
    %338 = arith.select %336, %325, %337 : vector<16x128xi1>, vector<16x128xf32>
    %cst_135 = arith.constant 0.000000e+00 : f32
    %339 = vector.broadcast %cst_135 : f32 to vector<1x128xf32>
    %340 = vector.extract_strided_slice %305 {offsets = [1, 0], sizes = [15, 128], strides = [1, 1]} : vector<16x128xf32> to vector<15x128xf32>
    %341 = tpu.concatenate %340, %339 in 0 : vector<15x128xf32>, vector<1x128xf32> -> vector<16x128xf32>
    %c1_i32_136 = arith.constant 1 : i32
    %342 = vector.broadcast %c1_i32_136 : i32 to vector<16x1xi32>
    %343 = arith.addi %322, %342 : vector<16x1xi32>
    %c0_i32_137 = arith.constant 0 : i32
    %344 = vector.broadcast %c0_i32_137 : i32 to vector<16x1xi32>
    %345 = arith.cmpi sge, %343, %344 : vector<16x1xi32>
    %c1_i32_138 = arith.constant 1 : i32
    %346 = vector.broadcast %c1_i32_138 : i32 to vector<16x1xi32>
    %347 = arith.addi %322, %346 : vector<16x1xi32>
    %c8_i32_139 = arith.constant 8 : i32
    %348 = vector.broadcast %c8_i32_139 : i32 to vector<16x1xi32>
    %349 = arith.cmpi slt, %347, %348 : vector<16x1xi32>
    %350 = arith.andi %345, %349 : vector<16x1xi1>
    %cst_140 = arith.constant 0.000000e+00 : f32
    %351 = vector.shape_cast %350 : vector<16x1xi1> to vector<16x1xi1>
    %352 = vector.broadcast %351 : vector<16x1xi1> to vector<16x128xi1>
    %353 = vector.broadcast %cst_140 : f32 to vector<16x128xf32>
    %354 = arith.select %352, %341, %353 : vector<16x128xi1>, vector<16x128xf32>
    %355 = tpu.concatenate %338, %305, %354 in 1 : vector<16x128xf32>, vector<16x128xf32>, vector<16x128xf32> -> vector<16x384xf32>
    %356 = arith.truncf %355 : vector<16x384xf32> to vector<16x384xbf16>
    %c0_141 = arith.constant 0 : index
    %c0_142 = arith.constant 0 : index
    %357 = vector.load %arg10[%c0_141, %c0_142] : memref<384x128xbf16, #tpu.memory_space<vmem>>, vector<384x128xbf16>
    %cst_143 = arith.constant dense<0.000000e+00> : vector<16x128xf32>
    %358 = tpu.matmul %356, %357, %cst_143 {dimension_numbers = #tpu.dot_dimension_numbers<[1], [0], [0], [1], [0, 0, 1, 1], [], []>} : vector<16x384xbf16>, vector<384x128xbf16>, vector<16x128xf32> -> vector<16x128xf32>
    %c0_144 = arith.constant 0 : index
    %c0_145 = arith.constant 0 : index
    %359 = vector.load %arg11[%c0_144, %c0_145] : memref<1x128xf32, #tpu.memory_space<vmem>>, vector<1x128xf32>
    %360 = vector.broadcast %359 : vector<1x128xf32> to vector<16x128xf32>
    %361 = arith.addf %358, %360 : vector<16x128xf32>
    %cst_146 = arith.constant 0.000000e+00 : f32
    %362 = vector.broadcast %cst_146 : f32 to vector<16x128xf32>
    %363 = arith.maximumf %361, %362 : vector<16x128xf32>
    %364 = tpu.iota {dimensions = array<i32: 0>} : vector<16x1xi32>
    %c8_i32_147 = arith.constant 8 : i32
    %c0_i32_148 = arith.constant 0 : i32
    %365 = arith.cmpi eq, %c8_i32_147, %c0_i32_148 : i32
    %c1_i32_149 = arith.constant 1 : i32
    %366 = arith.select %365, %c1_i32_149, %c8_i32_147 : i32
    %367 = vector.broadcast %366 : i32 to vector<16x1xi32>
    %368 = arith.remsi %364, %367 : vector<16x1xi32>
    %c0_i32_150 = arith.constant 0 : i32
    %369 = vector.broadcast %c0_i32_150 : i32 to vector<16x1xi32>
    %370 = arith.cmpi ne, %368, %369 : vector<16x1xi32>
    %c0_i32_151 = arith.constant 0 : i32
    %371 = vector.broadcast %c0_i32_151 : i32 to vector<16x1xi32>
    %372 = arith.cmpi slt, %368, %371 : vector<16x1xi32>
    %c0_i32_152 = arith.constant 0 : i32
    %373 = arith.cmpi slt, %366, %c0_i32_152 : i32
    %374 = vector.broadcast %373 : i1 to vector<16x1xi1>
    %375 = vector.broadcast %374 : vector<16x1xi1> to vector<16x1xi1>
    %376 = arith.xori %372, %375 : vector<16x1xi1>
    %377 = arith.andi %376, %370 : vector<16x1xi1>
    %378 = vector.broadcast %366 : i32 to vector<16x1xi32>
    %379 = arith.addi %368, %378 : vector<16x1xi32>
    %380 = arith.select %377, %379, %368 : vector<16x1xi1>, vector<16x1xi32>
    %cst_153 = arith.constant 0.000000e+00 : f32
    %381 = vector.broadcast %cst_153 : f32 to vector<1x128xf32>
    %382 = vector.extract_strided_slice %363 {offsets = [0, 0], sizes = [15, 128], strides = [1, 1]} : vector<16x128xf32> to vector<15x128xf32>
    %383 = tpu.concatenate %381, %382 in 0 : vector<1x128xf32>, vector<15x128xf32> -> vector<16x128xf32>
    %c-1_i32_154 = arith.constant -1 : i32
    %384 = vector.broadcast %c-1_i32_154 : i32 to vector<16x1xi32>
    %385 = arith.addi %380, %384 : vector<16x1xi32>
    %c0_i32_155 = arith.constant 0 : i32
    %386 = vector.broadcast %c0_i32_155 : i32 to vector<16x1xi32>
    %387 = arith.cmpi sge, %385, %386 : vector<16x1xi32>
    %c-1_i32_156 = arith.constant -1 : i32
    %388 = vector.broadcast %c-1_i32_156 : i32 to vector<16x1xi32>
    %389 = arith.addi %380, %388 : vector<16x1xi32>
    %c8_i32_157 = arith.constant 8 : i32
    %390 = vector.broadcast %c8_i32_157 : i32 to vector<16x1xi32>
    %391 = arith.cmpi slt, %389, %390 : vector<16x1xi32>
    %392 = arith.andi %387, %391 : vector<16x1xi1>
    %cst_158 = arith.constant 0.000000e+00 : f32
    %393 = vector.shape_cast %392 : vector<16x1xi1> to vector<16x1xi1>
    %394 = vector.broadcast %393 : vector<16x1xi1> to vector<16x128xi1>
    %395 = vector.broadcast %cst_158 : f32 to vector<16x128xf32>
    %396 = arith.select %394, %383, %395 : vector<16x128xi1>, vector<16x128xf32>
    %cst_159 = arith.constant 0.000000e+00 : f32
    %397 = vector.broadcast %cst_159 : f32 to vector<1x128xf32>
    %398 = vector.extract_strided_slice %363 {offsets = [1, 0], sizes = [15, 128], strides = [1, 1]} : vector<16x128xf32> to vector<15x128xf32>
    %399 = tpu.concatenate %398, %397 in 0 : vector<15x128xf32>, vector<1x128xf32> -> vector<16x128xf32>
    %c1_i32_160 = arith.constant 1 : i32
    %400 = vector.broadcast %c1_i32_160 : i32 to vector<16x1xi32>
    %401 = arith.addi %380, %400 : vector<16x1xi32>
    %c0_i32_161 = arith.constant 0 : i32
    %402 = vector.broadcast %c0_i32_161 : i32 to vector<16x1xi32>
    %403 = arith.cmpi sge, %401, %402 : vector<16x1xi32>
    %c1_i32_162 = arith.constant 1 : i32
    %404 = vector.broadcast %c1_i32_162 : i32 to vector<16x1xi32>
    %405 = arith.addi %380, %404 : vector<16x1xi32>
    %c8_i32_163 = arith.constant 8 : i32
    %406 = vector.broadcast %c8_i32_163 : i32 to vector<16x1xi32>
    %407 = arith.cmpi slt, %405, %406 : vector<16x1xi32>
    %408 = arith.andi %403, %407 : vector<16x1xi1>
    %cst_164 = arith.constant 0.000000e+00 : f32
    %409 = vector.shape_cast %408 : vector<16x1xi1> to vector<16x1xi1>
    %410 = vector.broadcast %409 : vector<16x1xi1> to vector<16x128xi1>
    %411 = vector.broadcast %cst_164 : f32 to vector<16x128xf32>
    %412 = arith.select %410, %399, %411 : vector<16x128xi1>, vector<16x128xf32>
    %413 = tpu.concatenate %396, %363, %412 in 1 : vector<16x128xf32>, vector<16x128xf32>, vector<16x128xf32> -> vector<16x384xf32>
    %414 = arith.truncf %413 : vector<16x384xf32> to vector<16x384xbf16>
    %c0_165 = arith.constant 0 : index
    %c0_166 = arith.constant 0 : index
    %415 = vector.load %arg12[%c0_165, %c0_166] : memref<384x128xbf16, #tpu.memory_space<vmem>>, vector<384x128xbf16>
    %cst_167 = arith.constant dense<0.000000e+00> : vector<16x128xf32>
    %416 = tpu.matmul %414, %415, %cst_167 {dimension_numbers = #tpu.dot_dimension_numbers<[1], [0], [0], [1], [0, 0, 1, 1], [], []>} : vector<16x384xbf16>, vector<384x128xbf16>, vector<16x128xf32> -> vector<16x128xf32>
    %c0_168 = arith.constant 0 : index
    %c0_169 = arith.constant 0 : index
    %417 = vector.load %arg13[%c0_168, %c0_169] : memref<1x128xf32, #tpu.memory_space<vmem>>, vector<1x128xf32>
    %418 = vector.broadcast %417 : vector<1x128xf32> to vector<16x128xf32>
    %419 = arith.addf %416, %418 : vector<16x128xf32>
    %420 = arith.addf %419, %305 : vector<16x128xf32>
    %cst_170 = arith.constant 0.000000e+00 : f32
    %421 = vector.broadcast %cst_170 : f32 to vector<16x128xf32>
    %422 = arith.maximumf %420, %421 : vector<16x128xf32>
    %423 = tpu.iota {dimensions = array<i32: 0>} : vector<16x1xi32>
    %c8_i32_171 = arith.constant 8 : i32
    %c0_i32_172 = arith.constant 0 : i32
    %424 = arith.cmpi eq, %c8_i32_171, %c0_i32_172 : i32
    %c1_i32_173 = arith.constant 1 : i32
    %425 = arith.select %424, %c1_i32_173, %c8_i32_171 : i32
    %426 = vector.broadcast %425 : i32 to vector<16x1xi32>
    %427 = arith.remsi %423, %426 : vector<16x1xi32>
    %c0_i32_174 = arith.constant 0 : i32
    %428 = vector.broadcast %c0_i32_174 : i32 to vector<16x1xi32>
    %429 = arith.cmpi ne, %427, %428 : vector<16x1xi32>
    %c0_i32_175 = arith.constant 0 : i32
    %430 = vector.broadcast %c0_i32_175 : i32 to vector<16x1xi32>
    %431 = arith.cmpi slt, %427, %430 : vector<16x1xi32>
    %c0_i32_176 = arith.constant 0 : i32
    %432 = arith.cmpi slt, %425, %c0_i32_176 : i32
    %433 = vector.broadcast %432 : i1 to vector<16x1xi1>
    %434 = vector.broadcast %433 : vector<16x1xi1> to vector<16x1xi1>
    %435 = arith.xori %431, %434 : vector<16x1xi1>
    %436 = arith.andi %435, %429 : vector<16x1xi1>
    %437 = vector.broadcast %425 : i32 to vector<16x1xi32>
    %438 = arith.addi %427, %437 : vector<16x1xi32>
    %439 = arith.select %436, %438, %427 : vector<16x1xi1>, vector<16x1xi32>
    %cst_177 = arith.constant 0.000000e+00 : f32
    %440 = vector.broadcast %cst_177 : f32 to vector<2x128xf32>
    %441 = vector.extract_strided_slice %422 {offsets = [0, 0], sizes = [14, 128], strides = [1, 1]} : vector<16x128xf32> to vector<14x128xf32>
    %442 = tpu.concatenate %440, %441 in 0 : vector<2x128xf32>, vector<14x128xf32> -> vector<16x128xf32>
    %c-2_i32_178 = arith.constant -2 : i32
    %443 = vector.broadcast %c-2_i32_178 : i32 to vector<16x1xi32>
    %444 = arith.addi %439, %443 : vector<16x1xi32>
    %c0_i32_179 = arith.constant 0 : i32
    %445 = vector.broadcast %c0_i32_179 : i32 to vector<16x1xi32>
    %446 = arith.cmpi sge, %444, %445 : vector<16x1xi32>
    %c-2_i32_180 = arith.constant -2 : i32
    %447 = vector.broadcast %c-2_i32_180 : i32 to vector<16x1xi32>
    %448 = arith.addi %439, %447 : vector<16x1xi32>
    %c8_i32_181 = arith.constant 8 : i32
    %449 = vector.broadcast %c8_i32_181 : i32 to vector<16x1xi32>
    %450 = arith.cmpi slt, %448, %449 : vector<16x1xi32>
    %451 = arith.andi %446, %450 : vector<16x1xi1>
    %cst_182 = arith.constant 0.000000e+00 : f32
    %452 = vector.shape_cast %451 : vector<16x1xi1> to vector<16x1xi1>
    %453 = vector.broadcast %452 : vector<16x1xi1> to vector<16x128xi1>
    %454 = vector.broadcast %cst_182 : f32 to vector<16x128xf32>
    %455 = arith.select %453, %442, %454 : vector<16x128xi1>, vector<16x128xf32>
    %cst_183 = arith.constant 0.000000e+00 : f32
    %456 = vector.broadcast %cst_183 : f32 to vector<1x128xf32>
    %457 = vector.extract_strided_slice %422 {offsets = [0, 0], sizes = [15, 128], strides = [1, 1]} : vector<16x128xf32> to vector<15x128xf32>
    %458 = tpu.concatenate %456, %457 in 0 : vector<1x128xf32>, vector<15x128xf32> -> vector<16x128xf32>
    %c-1_i32_184 = arith.constant -1 : i32
    %459 = vector.broadcast %c-1_i32_184 : i32 to vector<16x1xi32>
    %460 = arith.addi %439, %459 : vector<16x1xi32>
    %c0_i32_185 = arith.constant 0 : i32
    %461 = vector.broadcast %c0_i32_185 : i32 to vector<16x1xi32>
    %462 = arith.cmpi sge, %460, %461 : vector<16x1xi32>
    %c-1_i32_186 = arith.constant -1 : i32
    %463 = vector.broadcast %c-1_i32_186 : i32 to vector<16x1xi32>
    %464 = arith.addi %439, %463 : vector<16x1xi32>
    %c8_i32_187 = arith.constant 8 : i32
    %465 = vector.broadcast %c8_i32_187 : i32 to vector<16x1xi32>
    %466 = arith.cmpi slt, %464, %465 : vector<16x1xi32>
    %467 = arith.andi %462, %466 : vector<16x1xi1>
    %cst_188 = arith.constant 0.000000e+00 : f32
    %468 = vector.shape_cast %467 : vector<16x1xi1> to vector<16x1xi1>
    %469 = vector.broadcast %468 : vector<16x1xi1> to vector<16x128xi1>
    %470 = vector.broadcast %cst_188 : f32 to vector<16x128xf32>
    %471 = arith.select %469, %458, %470 : vector<16x128xi1>, vector<16x128xf32>
    %cst_189 = arith.constant 0.000000e+00 : f32
    %472 = vector.broadcast %cst_189 : f32 to vector<1x128xf32>
    %473 = vector.extract_strided_slice %422 {offsets = [1, 0], sizes = [15, 128], strides = [1, 1]} : vector<16x128xf32> to vector<15x128xf32>
    %474 = tpu.concatenate %473, %472 in 0 : vector<15x128xf32>, vector<1x128xf32> -> vector<16x128xf32>
    %c1_i32_190 = arith.constant 1 : i32
    %475 = vector.broadcast %c1_i32_190 : i32 to vector<16x1xi32>
    %476 = arith.addi %439, %475 : vector<16x1xi32>
    %c0_i32_191 = arith.constant 0 : i32
    %477 = vector.broadcast %c0_i32_191 : i32 to vector<16x1xi32>
    %478 = arith.cmpi sge, %476, %477 : vector<16x1xi32>
    %c1_i32_192 = arith.constant 1 : i32
    %479 = vector.broadcast %c1_i32_192 : i32 to vector<16x1xi32>
    %480 = arith.addi %439, %479 : vector<16x1xi32>
    %c8_i32_193 = arith.constant 8 : i32
    %481 = vector.broadcast %c8_i32_193 : i32 to vector<16x1xi32>
    %482 = arith.cmpi slt, %480, %481 : vector<16x1xi32>
    %483 = arith.andi %478, %482 : vector<16x1xi1>
    %cst_194 = arith.constant 0.000000e+00 : f32
    %484 = vector.shape_cast %483 : vector<16x1xi1> to vector<16x1xi1>
    %485 = vector.broadcast %484 : vector<16x1xi1> to vector<16x128xi1>
    %486 = vector.broadcast %cst_194 : f32 to vector<16x128xf32>
    %487 = arith.select %485, %474, %486 : vector<16x128xi1>, vector<16x128xf32>
    %cst_195 = arith.constant 0.000000e+00 : f32
    %488 = vector.broadcast %cst_195 : f32 to vector<2x128xf32>
    %489 = vector.extract_strided_slice %422 {offsets = [2, 0], sizes = [14, 128], strides = [1, 1]} : vector<16x128xf32> to vector<14x128xf32>
    %490 = tpu.concatenate %489, %488 in 0 : vector<14x128xf32>, vector<2x128xf32> -> vector<16x128xf32>
    %c2_i32_196 = arith.constant 2 : i32
    %491 = vector.broadcast %c2_i32_196 : i32 to vector<16x1xi32>
    %492 = arith.addi %439, %491 : vector<16x1xi32>
    %c0_i32_197 = arith.constant 0 : i32
    %493 = vector.broadcast %c0_i32_197 : i32 to vector<16x1xi32>
    %494 = arith.cmpi sge, %492, %493 : vector<16x1xi32>
    %c2_i32_198 = arith.constant 2 : i32
    %495 = vector.broadcast %c2_i32_198 : i32 to vector<16x1xi32>
    %496 = arith.addi %439, %495 : vector<16x1xi32>
    %c8_i32_199 = arith.constant 8 : i32
    %497 = vector.broadcast %c8_i32_199 : i32 to vector<16x1xi32>
    %498 = arith.cmpi slt, %496, %497 : vector<16x1xi32>
    %499 = arith.andi %494, %498 : vector<16x1xi1>
    %cst_200 = arith.constant 0.000000e+00 : f32
    %500 = vector.shape_cast %499 : vector<16x1xi1> to vector<16x1xi1>
    %501 = vector.broadcast %500 : vector<16x1xi1> to vector<16x128xi1>
    %502 = vector.broadcast %cst_200 : f32 to vector<16x128xf32>
    %503 = arith.select %501, %490, %502 : vector<16x128xi1>, vector<16x128xf32>
    %504 = tpu.concatenate %455, %471, %422, %487, %503 in 1 : vector<16x128xf32>, vector<16x128xf32>, vector<16x128xf32>, vector<16x128xf32>, vector<16x128xf32> -> vector<16x640xf32>
    %505 = arith.truncf %504 : vector<16x640xf32> to vector<16x640xbf16>
    %c0_201 = arith.constant 0 : index
    %c0_202 = arith.constant 0 : index
    %506 = vector.load %arg14[%c0_201, %c0_202] : memref<640x128xbf16, #tpu.memory_space<vmem>>, vector<640x128xbf16>
    %cst_203 = arith.constant dense<0.000000e+00> : vector<16x128xf32>
    %507 = tpu.matmul %505, %506, %cst_203 {dimension_numbers = #tpu.dot_dimension_numbers<[1], [0], [0], [1], [0, 0, 1, 1], [], []>} : vector<16x640xbf16>, vector<640x128xbf16>, vector<16x128xf32> -> vector<16x128xf32>
    %c0_204 = arith.constant 0 : index
    %c0_205 = arith.constant 0 : index
    %508 = vector.load %arg15[%c0_204, %c0_205] : memref<1x128xf32, #tpu.memory_space<vmem>>, vector<1x128xf32>
    %509 = vector.broadcast %508 : vector<1x128xf32> to vector<16x128xf32>
    %510 = arith.addf %507, %509 : vector<16x128xf32>
    %cst_206 = arith.constant 0.000000e+00 : f32
    %511 = vector.broadcast %cst_206 : f32 to vector<16x128xf32>
    %512 = arith.maximumf %510, %511 : vector<16x128xf32>
    %c0_207 = arith.constant 0 : index
    %c0_208 = arith.constant 0 : index
    %513 = vector.load %arg37[%c0_207, %c0_208] : memref<64x128xf32, #tpu.memory_space<vmem>>, vector<16x128xf32>
    tpu.vector_store %arg37[%c0_207, %c0_208], %512 {strides = array<i32>} : memref<64x128xf32, #tpu.memory_space<vmem>>, vector<16x128xf32>,
    %c0_209 = arith.constant 0 : index
    %c0_210 = arith.constant 0 : index
    %514 = tpu.strided_load %arg37[%c0_209, %c0_210] {strides = array<i32: 2, 1>} : memref<64x128xf32, #tpu.memory_space<vmem>>, vector<8x128xf32>
    %c1_211 = arith.constant 1 : index
    %c0_212 = arith.constant 0 : index
    %515 = tpu.strided_load %arg37[%c1_211, %c0_212] {strides = array<i32: 2, 1>} : memref<64x128xf32, #tpu.memory_space<vmem>>, vector<8x128xf32>
    %516 = arith.maximumf %514, %515 : vector<8x128xf32>
    %517 = tpu.iota {dimensions = array<i32: 0>} : vector<8x1xi32>
    %c4_i32 = arith.constant 4 : i32
    %c0_i32_213 = arith.constant 0 : i32
    %518 = arith.cmpi eq, %c4_i32, %c0_i32_213 : i32
    %c1_i32_214 = arith.constant 1 : i32
    %519 = arith.select %518, %c1_i32_214, %c4_i32 : i32
    %520 = vector.broadcast %519 : i32 to vector<8x1xi32>
    %521 = arith.remsi %517, %520 : vector<8x1xi32>
    %c0_i32_215 = arith.constant 0 : i32
    %522 = vector.broadcast %c0_i32_215 : i32 to vector<8x1xi32>
    %523 = arith.cmpi ne, %521, %522 : vector<8x1xi32>
    %c0_i32_216 = arith.constant 0 : i32
    %524 = vector.broadcast %c0_i32_216 : i32 to vector<8x1xi32>
    %525 = arith.cmpi slt, %521, %524 : vector<8x1xi32>
    %c0_i32_217 = arith.constant 0 : i32
    %526 = arith.cmpi slt, %519, %c0_i32_217 : i32
    %527 = vector.broadcast %526 : i1 to vector<8x1xi1>
    %528 = vector.broadcast %527 : vector<8x1xi1> to vector<8x1xi1>
    %529 = arith.xori %525, %528 : vector<8x1xi1>
    %530 = arith.andi %529, %523 : vector<8x1xi1>
    %531 = vector.broadcast %519 : i32 to vector<8x1xi32>
    %532 = arith.addi %521, %531 : vector<8x1xi32>
    %533 = arith.select %530, %532, %521 : vector<8x1xi1>, vector<8x1xi32>
    %cst_218 = arith.constant 0.000000e+00 : f32
    %534 = vector.broadcast %cst_218 : f32 to vector<1x128xf32>
    %535 = vector.extract_strided_slice %516 {offsets = [0, 0], sizes = [7, 128], strides = [1, 1]} : vector<8x128xf32> to vector<7x128xf32>
    %536 = tpu.concatenate %534, %535 in 0 : vector<1x128xf32>, vector<7x128xf32> -> vector<8x128xf32>
    %c-1_i32_219 = arith.constant -1 : i32
    %537 = vector.broadcast %c-1_i32_219 : i32 to vector<8x1xi32>
    %538 = arith.addi %533, %537 : vector<8x1xi32>
    %c0_i32_220 = arith.constant 0 : i32
    %539 = vector.broadcast %c0_i32_220 : i32 to vector<8x1xi32>
    %540 = arith.cmpi sge, %538, %539 : vector<8x1xi32>
    %c-1_i32_221 = arith.constant -1 : i32
    %541 = vector.broadcast %c-1_i32_221 : i32 to vector<8x1xi32>
    %542 = arith.addi %533, %541 : vector<8x1xi32>
    %c4_i32_222 = arith.constant 4 : i32
    %543 = vector.broadcast %c4_i32_222 : i32 to vector<8x1xi32>
    %544 = arith.cmpi slt, %542, %543 : vector<8x1xi32>
    %545 = arith.andi %540, %544 : vector<8x1xi1>
    %cst_223 = arith.constant 0.000000e+00 : f32
    %546 = vector.shape_cast %545 : vector<8x1xi1> to vector<8x1xi1>
    %547 = vector.broadcast %546 : vector<8x1xi1> to vector<8x128xi1>
    %548 = vector.broadcast %cst_223 : f32 to vector<8x128xf32>
    %549 = arith.select %547, %536, %548 : vector<8x128xi1>, vector<8x128xf32>
    %cst_224 = arith.constant 0.000000e+00 : f32
    %550 = vector.broadcast %cst_224 : f32 to vector<1x128xf32>
    %551 = vector.extract_strided_slice %516 {offsets = [1, 0], sizes = [7, 128], strides = [1, 1]} : vector<8x128xf32> to vector<7x128xf32>
    %552 = tpu.concatenate %551, %550 in 0 : vector<7x128xf32>, vector<1x128xf32> -> vector<8x128xf32>
    %c1_i32_225 = arith.constant 1 : i32
    %553 = vector.broadcast %c1_i32_225 : i32 to vector<8x1xi32>
    %554 = arith.addi %533, %553 : vector<8x1xi32>
    %c0_i32_226 = arith.constant 0 : i32
    %555 = vector.broadcast %c0_i32_226 : i32 to vector<8x1xi32>
    %556 = arith.cmpi sge, %554, %555 : vector<8x1xi32>
    %c1_i32_227 = arith.constant 1 : i32
    %557 = vector.broadcast %c1_i32_227 : i32 to vector<8x1xi32>
    %558 = arith.addi %533, %557 : vector<8x1xi32>
    %c4_i32_228 = arith.constant 4 : i32
    %559 = vector.broadcast %c4_i32_228 : i32 to vector<8x1xi32>
    %560 = arith.cmpi slt, %558, %559 : vector<8x1xi32>
    %561 = arith.andi %556, %560 : vector<8x1xi1>
    %cst_229 = arith.constant 0.000000e+00 : f32
    %562 = vector.shape_cast %561 : vector<8x1xi1> to vector<8x1xi1>
    %563 = vector.broadcast %562 : vector<8x1xi1> to vector<8x128xi1>
    %564 = vector.broadcast %cst_229 : f32 to vector<8x128xf32>
    %565 = arith.select %563, %552, %564 : vector<8x128xi1>, vector<8x128xf32>
    %566 = tpu.concatenate %549, %516, %565 in 1 : vector<8x128xf32>, vector<8x128xf32>, vector<8x128xf32> -> vector<8x384xf32>
    %567 = arith.truncf %566 : vector<8x384xf32> to vector<8x384xbf16>
    %c0_230 = arith.constant 0 : index
    %c0_231 = arith.constant 0 : index
    %568 = vector.load %arg16[%c0_230, %c0_231] : memref<384x128xbf16, #tpu.memory_space<vmem>>, vector<384x128xbf16>
    %cst_232 = arith.constant dense<0.000000e+00> : vector<8x128xf32>
    %569 = tpu.matmul %567, %568, %cst_232 {dimension_numbers = #tpu.dot_dimension_numbers<[1], [0], [0], [1], [0, 0, 1, 1], [], []>} : vector<8x384xbf16>, vector<384x128xbf16>, vector<8x128xf32> -> vector<8x128xf32>
    %c0_233 = arith.constant 0 : index
    %c0_234 = arith.constant 0 : index
    %570 = vector.load %arg17[%c0_233, %c0_234] : memref<1x128xf32, #tpu.memory_space<vmem>>, vector<1x128xf32>
    %571 = vector.broadcast %570 : vector<1x128xf32> to vector<8x128xf32>
    %572 = arith.addf %569, %571 : vector<8x128xf32>
    %cst_235 = arith.constant 0.000000e+00 : f32
    %573 = vector.broadcast %cst_235 : f32 to vector<8x128xf32>
    %574 = arith.maximumf %572, %573 : vector<8x128xf32>
    %575 = tpu.iota {dimensions = array<i32: 0>} : vector<8x1xi32>
    %c4_i32_236 = arith.constant 4 : i32
    %c0_i32_237 = arith.constant 0 : i32
    %576 = arith.cmpi eq, %c4_i32_236, %c0_i32_237 : i32
    %c1_i32_238 = arith.constant 1 : i32
    %577 = arith.select %576, %c1_i32_238, %c4_i32_236 : i32
    %578 = vector.broadcast %577 : i32 to vector<8x1xi32>
    %579 = arith.remsi %575, %578 : vector<8x1xi32>
    %c0_i32_239 = arith.constant 0 : i32
    %580 = vector.broadcast %c0_i32_239 : i32 to vector<8x1xi32>
    %581 = arith.cmpi ne, %579, %580 : vector<8x1xi32>
    %c0_i32_240 = arith.constant 0 : i32
    %582 = vector.broadcast %c0_i32_240 : i32 to vector<8x1xi32>
    %583 = arith.cmpi slt, %579, %582 : vector<8x1xi32>
    %c0_i32_241 = arith.constant 0 : i32
    %584 = arith.cmpi slt, %577, %c0_i32_241 : i32
    %585 = vector.broadcast %584 : i1 to vector<8x1xi1>
    %586 = vector.broadcast %585 : vector<8x1xi1> to vector<8x1xi1>
    %587 = arith.xori %583, %586 : vector<8x1xi1>
    %588 = arith.andi %587, %581 : vector<8x1xi1>
    %589 = vector.broadcast %577 : i32 to vector<8x1xi32>
    %590 = arith.addi %579, %589 : vector<8x1xi32>
    %591 = arith.select %588, %590, %579 : vector<8x1xi1>, vector<8x1xi32>
    %cst_242 = arith.constant 0.000000e+00 : f32
    %592 = vector.broadcast %cst_242 : f32 to vector<1x128xf32>
    %593 = vector.extract_strided_slice %574 {offsets = [0, 0], sizes = [7, 128], strides = [1, 1]} : vector<8x128xf32> to vector<7x128xf32>
    %594 = tpu.concatenate %592, %593 in 0 : vector<1x128xf32>, vector<7x128xf32> -> vector<8x128xf32>
    %c-1_i32_243 = arith.constant -1 : i32
    %595 = vector.broadcast %c-1_i32_243 : i32 to vector<8x1xi32>
    %596 = arith.addi %591, %595 : vector<8x1xi32>
    %c0_i32_244 = arith.constant 0 : i32
    %597 = vector.broadcast %c0_i32_244 : i32 to vector<8x1xi32>
    %598 = arith.cmpi sge, %596, %597 : vector<8x1xi32>
    %c-1_i32_245 = arith.constant -1 : i32
    %599 = vector.broadcast %c-1_i32_245 : i32 to vector<8x1xi32>
    %600 = arith.addi %591, %599 : vector<8x1xi32>
    %c4_i32_246 = arith.constant 4 : i32
    %601 = vector.broadcast %c4_i32_246 : i32 to vector<8x1xi32>
    %602 = arith.cmpi slt, %600, %601 : vector<8x1xi32>
    %603 = arith.andi %598, %602 : vector<8x1xi1>
    %cst_247 = arith.constant 0.000000e+00 : f32
    %604 = vector.shape_cast %603 : vector<8x1xi1> to vector<8x1xi1>
    %605 = vector.broadcast %604 : vector<8x1xi1> to vector<8x128xi1>
    %606 = vector.broadcast %cst_247 : f32 to vector<8x128xf32>
    %607 = arith.select %605, %594, %606 : vector<8x128xi1>, vector<8x128xf32>
    %cst_248 = arith.constant 0.000000e+00 : f32
    %608 = vector.broadcast %cst_248 : f32 to vector<1x128xf32>
    %609 = vector.extract_strided_slice %574 {offsets = [1, 0], sizes = [7, 128], strides = [1, 1]} : vector<8x128xf32> to vector<7x128xf32>
    %610 = tpu.concatenate %609, %608 in 0 : vector<7x128xf32>, vector<1x128xf32> -> vector<8x128xf32>
    %c1_i32_249 = arith.constant 1 : i32
    %611 = vector.broadcast %c1_i32_249 : i32 to vector<8x1xi32>
    %612 = arith.addi %591, %611 : vector<8x1xi32>
    %c0_i32_250 = arith.constant 0 : i32
    %613 = vector.broadcast %c0_i32_250 : i32 to vector<8x1xi32>
    %614 = arith.cmpi sge, %612, %613 : vector<8x1xi32>
    %c1_i32_251 = arith.constant 1 : i32
    %615 = vector.broadcast %c1_i32_251 : i32 to vector<8x1xi32>
    %616 = arith.addi %591, %615 : vector<8x1xi32>
    %c4_i32_252 = arith.constant 4 : i32
    %617 = vector.broadcast %c4_i32_252 : i32 to vector<8x1xi32>
    %618 = arith.cmpi slt, %616, %617 : vector<8x1xi32>
    %619 = arith.andi %614, %618 : vector<8x1xi1>
    %cst_253 = arith.constant 0.000000e+00 : f32
    %620 = vector.shape_cast %619 : vector<8x1xi1> to vector<8x1xi1>
    %621 = vector.broadcast %620 : vector<8x1xi1> to vector<8x128xi1>
    %622 = vector.broadcast %cst_253 : f32 to vector<8x128xf32>
    %623 = arith.select %621, %610, %622 : vector<8x128xi1>, vector<8x128xf32>
    %624 = tpu.concatenate %607, %574, %623 in 1 : vector<8x128xf32>, vector<8x128xf32>, vector<8x128xf32> -> vector<8x384xf32>
    %625 = arith.truncf %624 : vector<8x384xf32> to vector<8x384xbf16>
    %c0_254 = arith.constant 0 : index
    %c0_255 = arith.constant 0 : index
    %626 = vector.load %arg18[%c0_254, %c0_255] : memref<384x128xbf16, #tpu.memory_space<vmem>>, vector<384x128xbf16>
    %cst_256 = arith.constant dense<0.000000e+00> : vector<8x128xf32>
    %627 = tpu.matmul %625, %626, %cst_256 {dimension_numbers = #tpu.dot_dimension_numbers<[1], [0], [0], [1], [0, 0, 1, 1], [], []>} : vector<8x384xbf16>, vector<384x128xbf16>, vector<8x128xf32> -> vector<8x128xf32>
    %c0_257 = arith.constant 0 : index
    %c0_258 = arith.constant 0 : index
    %628 = vector.load %arg19[%c0_257, %c0_258] : memref<1x128xf32, #tpu.memory_space<vmem>>, vector<1x128xf32>
    %629 = vector.broadcast %628 : vector<1x128xf32> to vector<8x128xf32>
    %630 = arith.addf %627, %629 : vector<8x128xf32>
    %631 = arith.addf %630, %516 : vector<8x128xf32>
    %cst_259 = arith.constant 0.000000e+00 : f32
    %632 = vector.broadcast %cst_259 : f32 to vector<8x128xf32>
    %633 = arith.maximumf %631, %632 : vector<8x128xf32>
    %634 = arith.truncf %633 : vector<8x128xf32> to vector<8x128xbf16>
    %c0_260 = arith.constant 0 : index
    %c0_261 = arith.constant 0 : index
    %635 = vector.load %arg20[%c0_260, %c0_261] : memref<128x256xbf16, #tpu.memory_space<vmem>>, vector<128x256xbf16>
    %cst_262 = arith.constant dense<0.000000e+00> : vector<8x256xf32>
    %636 = tpu.matmul %634, %635, %cst_262 {dimension_numbers = #tpu.dot_dimension_numbers<[1], [0], [0], [1], [0, 0, 1, 1], [], []>} : vector<8x128xbf16>, vector<128x256xbf16>, vector<8x256xf32> -> vector<8x256xf32>
    %c0_263 = arith.constant 0 : index
    %c0_264 = arith.constant 0 : index
    %637 = vector.load %arg21[%c0_263, %c0_264] : memref<1x256xf32, #tpu.memory_space<vmem>>, vector<1x256xf32>
    %638 = vector.broadcast %637 : vector<1x256xf32> to vector<8x256xf32>
    %639 = arith.addf %636, %638 : vector<8x256xf32>
    %cst_265 = arith.constant 0.000000e+00 : f32
    %640 = vector.broadcast %cst_265 : f32 to vector<8x256xf32>
    %641 = arith.maximumf %639, %640 : vector<8x256xf32>
    %c0_266 = arith.constant 0 : index
    %c0_267 = arith.constant 0 : index
    %642 = vector.load %arg35[%c0_266, %c0_267] : memref<2x8xf32, #tpu.memory_space<vmem>>, vector<2x8xf32>
    %cst_268 = arith.constant dense<0.000000e+00> : vector<2x256xf32>
    %643 = tpu.matmul %642, %641, %cst_268 {dimension_numbers = #tpu.dot_dimension_numbers<[1], [0], [0], [1], [0, 0, 1, 1], [], []>} : vector<2x8xf32>, vector<8x256xf32>, vector<2x256xf32> -> vector<2x256xf32>
    %644 = arith.truncf %643 : vector<2x256xf32> to vector<2x256xbf16>
    %c0_269 = arith.constant 0 : index
    %c0_270 = arith.constant 0 : index
    %645 = vector.load %arg22[%c0_269, %c0_270] : memref<256x128xbf16, #tpu.memory_space<vmem>>, vector<256x128xbf16>
    %cst_271 = arith.constant dense<0.000000e+00> : vector<2x128xf32>
    %646 = tpu.matmul %644, %645, %cst_271 {dimension_numbers = #tpu.dot_dimension_numbers<[1], [0], [0], [1], [0, 0, 1, 1], [], []>} : vector<2x256xbf16>, vector<256x128xbf16>, vector<2x128xf32> -> vector<2x128xf32>
    %c0_272 = arith.constant 0 : index
    %c0_273 = arith.constant 0 : index
    %647 = vector.load %arg23[%c0_272, %c0_273] : memref<1x128xf32, #tpu.memory_space<vmem>>, vector<1x128xf32>
    %648 = vector.broadcast %647 : vector<1x128xf32> to vector<2x128xf32>
    %649 = arith.addf %646, %648 : vector<2x128xf32>
    %cst_274 = arith.constant 0.000000e+00 : f32
    %650 = vector.broadcast %cst_274 : f32 to vector<2x128xf32>
    %651 = arith.maximumf %649, %650 : vector<2x128xf32>
    %652 = arith.truncf %651 : vector<2x128xf32> to vector<2x128xbf16>
    %c0_275 = arith.constant 0 : index
    %c0_276 = arith.constant 0 : index
    %653 = vector.load %arg24[%c0_275, %c0_276] : memref<128x128xbf16, #tpu.memory_space<vmem>>, vector<128x128xbf16>
    %cst_277 = arith.constant dense<0.000000e+00> : vector<2x128xf32>
    %654 = tpu.matmul %652, %653, %cst_277 {dimension_numbers = #tpu.dot_dimension_numbers<[1], [0], [0], [1], [0, 0, 1, 1], [], []>} : vector<2x128xbf16>, vector<128x128xbf16>, vector<2x128xf32> -> vector<2x128xf32>
    %c0_278 = arith.constant 0 : index
    %c0_279 = arith.constant 0 : index
    %655 = vector.load %arg25[%c0_278, %c0_279] : memref<1x128xf32, #tpu.memory_space<vmem>>, vector<1x128xf32>
    %656 = vector.broadcast %655 : vector<1x128xf32> to vector<2x128xf32>
    %657 = arith.addf %654, %656 : vector<2x128xf32>
    %c0_280 = arith.constant 0 : index
    %c0_281 = arith.constant 0 : index
    %658 = vector.load %arg1[%c0_280, %c0_281] : memref<2x128xf32, #tpu.memory_space<vmem>>, vector<2x128xf32>
    %659 = arith.truncf %658 : vector<2x128xf32> to vector<2x128xbf16>
    %c0_282 = arith.constant 0 : index
    %c0_283 = arith.constant 0 : index
    %660 = vector.load %arg26[%c0_282, %c0_283] : memref<128x128xbf16, #tpu.memory_space<vmem>>, vector<128x128xbf16>
    %cst_284 = arith.constant dense<0.000000e+00> : vector<2x128xf32>
    %661 = tpu.matmul %659, %660, %cst_284 {dimension_numbers = #tpu.dot_dimension_numbers<[1], [0], [0], [1], [0, 0, 1, 1], [], []>} : vector<2x128xbf16>, vector<128x128xbf16>, vector<2x128xf32> -> vector<2x128xf32>
    %c0_285 = arith.constant 0 : index
    %c0_286 = arith.constant 0 : index
    %662 = vector.load %arg27[%c0_285, %c0_286] : memref<1x128xf32, #tpu.memory_space<vmem>>, vector<1x128xf32>
    %663 = vector.broadcast %662 : vector<1x128xf32> to vector<2x128xf32>
    %664 = arith.addf %661, %663 : vector<2x128xf32>
    %cst_287 = arith.constant 0.000000e+00 : f32
    %665 = vector.broadcast %cst_287 : f32 to vector<2x128xf32>
    %666 = arith.maximumf %664, %665 : vector<2x128xf32>
    %667 = arith.truncf %666 : vector<2x128xf32> to vector<2x128xbf16>
    %c0_288 = arith.constant 0 : index
    %c0_289 = arith.constant 0 : index
    %668 = vector.load %arg28[%c0_288, %c0_289] : memref<128x128xbf16, #tpu.memory_space<vmem>>, vector<128x128xbf16>
    %cst_290 = arith.constant dense<0.000000e+00> : vector<2x128xf32>
    %669 = tpu.matmul %667, %668, %cst_290 {dimension_numbers = #tpu.dot_dimension_numbers<[1], [0], [0], [1], [0, 0, 1, 1], [], []>} : vector<2x128xbf16>, vector<128x128xbf16>, vector<2x128xf32> -> vector<2x128xf32>
    %c0_291 = arith.constant 0 : index
    %c0_292 = arith.constant 0 : index
    %670 = vector.load %arg29[%c0_291, %c0_292] : memref<1x128xf32, #tpu.memory_space<vmem>>, vector<1x128xf32>
    %671 = vector.broadcast %670 : vector<1x128xf32> to vector<2x128xf32>
    %672 = arith.addf %669, %671 : vector<2x128xf32>
    %cst_293 = arith.constant 0.000000e+00 : f32
    %673 = vector.broadcast %cst_293 : f32 to vector<2x128xf32>
    %674 = arith.maximumf %672, %673 : vector<2x128xf32>
    %675 = arith.truncf %657 : vector<2x128xf32> to vector<2x128xbf16>
    %c0_294 = arith.constant 0 : index
    %c0_295 = arith.constant 0 : index
    %676 = vector.load %arg30[%c0_294, %c0_295] : memref<128x256xbf16, #tpu.memory_space<vmem>>, vector<128x256xbf16>
    %cst_296 = arith.constant dense<0.000000e+00> : vector<2x256xf32>
    %677 = tpu.matmul %675, %676, %cst_296 {dimension_numbers = #tpu.dot_dimension_numbers<[1], [0], [0], [1], [0, 0, 1, 1], [], []>} : vector<2x128xbf16>, vector<128x256xbf16>, vector<2x256xf32> -> vector<2x256xf32>
    %678 = arith.truncf %674 : vector<2x128xf32> to vector<2x128xbf16>
    %c0_297 = arith.constant 0 : index
    %c0_298 = arith.constant 0 : index
    %679 = vector.load %arg31[%c0_297, %c0_298] : memref<128x256xbf16, #tpu.memory_space<vmem>>, vector<128x256xbf16>
    %cst_299 = arith.constant dense<0.000000e+00> : vector<2x256xf32>
    %680 = tpu.matmul %678, %679, %cst_299 {dimension_numbers = #tpu.dot_dimension_numbers<[1], [0], [0], [1], [0, 0, 1, 1], [], []>} : vector<2x128xbf16>, vector<128x256xbf16>, vector<2x256xf32> -> vector<2x256xf32>
    %681 = arith.addf %677, %680 : vector<2x256xf32>
    %c0_300 = arith.constant 0 : index
    %c0_301 = arith.constant 0 : index
    %682 = vector.load %arg32[%c0_300, %c0_301] : memref<1x256xf32, #tpu.memory_space<vmem>>, vector<1x256xf32>
    %683 = vector.broadcast %682 : vector<1x256xf32> to vector<2x256xf32>
    %684 = arith.addf %681, %683 : vector<2x256xf32>
    %cst_302 = arith.constant 0.000000e+00 : f32
    %685 = vector.broadcast %cst_302 : f32 to vector<2x256xf32>
    %686 = arith.maximumf %684, %685 : vector<2x256xf32>
    %687 = arith.truncf %686 : vector<2x256xf32> to vector<2x256xbf16>
    %c0_303 = arith.constant 0 : index
    %c0_304 = arith.constant 0 : index
    %688 = vector.load %arg33[%c0_303, %c0_304] : memref<256x128xbf16, #tpu.memory_space<vmem>>, vector<256x128xbf16>
    %cst_305 = arith.constant dense<0.000000e+00> : vector<2x128xf32>
    %689 = tpu.matmul %687, %688, %cst_305 {dimension_numbers = #tpu.dot_dimension_numbers<[1], [0], [0], [1], [0, 0, 1, 1], [], []>} : vector<2x256xbf16>, vector<256x128xbf16>, vector<2x128xf32> -> vector<2x128xf32>
    %c0_306 = arith.constant 0 : index
    %c0_307 = arith.constant 0 : index
    %690 = vector.load %arg34[%c0_306, %c0_307] : memref<1x128xf32, #tpu.memory_space<vmem>>, vector<1x128xf32>
    %691 = vector.broadcast %690 : vector<1x128xf32> to vector<2x128xf32>
    %692 = arith.addf %689, %691 : vector<2x128xf32>
    %c0_308 = arith.constant 0 : index
    %c0_309 = arith.constant 0 : index
    %693 = vector.load %arg36[%c0_308, %c0_309] : memref<2x128xf32, #tpu.memory_space<vmem>>, vector<2x128xf32>
    tpu.vector_store %arg36[%c0_308, %c0_309], %692 {strides = array<i32>} : memref<2x128xf32, #tpu.memory_space<vmem>>, vector<2x128xf32>,
    return
  }
}

</mosaic_0001>

<llo_original>
// kernel: ecg_concept_cnn_forward.1
$region0: #{ecg_concept_cnn_forward.1}
  #allocation0 [shape = 'u32[]', space=smem, size = 0x4, offset = 0x4, fixed_abs, tag = 'smem constant byte address 0x4 - core index']
  #allocation1 [shape = 'u32[72,128]{1,0:T(1,128)}', space=vmem, size = 0x9000, scoped, tag = 'internal scratch']
  #allocation2 [shape = 'f32[64,128]{1,0:T(8,128)}', space=vmem, size = 0x8000, scoped, tag = 'scratch operand']
  %s0 = inlined_call_operand.smem [shape: u32[37], index: -1, kind: input, shape index: {}]
  %s1 = sld [smem:[%s0]]
  %s2 = scalar_lea.smem %s0, 1
  %s3 = sld [smem:[%s2]]
  %s4 = scalar_lea.smem %s0, 2
  %s5 = sld [smem:[%s4]]
  %s6 = scalar_lea.smem %s0, 3
  %s7 = sld [smem:[%s6]]
  %s8 = scalar_lea.smem %s0, 4
  %s9 = sld [smem:[%s8]]
  %s10 = scalar_lea.smem %s0, 5
  %s11 = sld [smem:[%s10]]
  %s12 = scalar_lea.smem %s0, 6
  %s13 = sld [smem:[%s12]]
  %s14 = scalar_lea.smem %s0, 7
  %s15 = sld [smem:[%s14]]
  %s16 = scalar_lea.smem %s0, 8
  %s17 = sld [smem:[%s16]]
  %s18 = scalar_lea.smem %s0, 9
  %s19 = sld [smem:[%s18]]
  %s20 = scalar_lea.smem %s0, 10
  %s21 = sld [smem:[%s20]]
  %s22 = scalar_lea.smem %s0, 11
  %s23 = sld [smem:[%s22]]
  %s24 = scalar_lea.smem %s0, 12
  %s25 = sld [smem:[%s24]]
  %s26 = scalar_lea.smem %s0, 13
  %s27 = sld [smem:[%s26]]
  %s28 = scalar_lea.smem %s0, 14
  %s29 = sld [smem:[%s28]]
  %s30 = scalar_lea.smem %s0, 15
  %s31 = sld [smem:[%s30]]
  %s32 = scalar_lea.smem %s0, 16
  %s33 = sld [smem:[%s32]]
  %s34 = scalar_lea.smem %s0, 17
  %s35 = sld [smem:[%s34]]
  %s36 = scalar_lea.smem %s0, 18
  %s37 = sld [smem:[%s36]]
  %s38 = scalar_lea.smem %s0, 19
  %s39 = sld [smem:[%s38]]
  %s40 = scalar_lea.smem %s0, 20
  %s41 = sld [smem:[%s40]]
  %s42 = scalar_lea.smem %s0, 21
  %s43 = sld [smem:[%s42]]
  %s44 = scalar_lea.smem %s0, 22
  %s45 = sld [smem:[%s44]]
  %s46 = scalar_lea.smem %s0, 23
  %s47 = sld [smem:[%s46]]
  %s48 = scalar_lea.smem %s0, 24
  %s49 = sld [smem:[%s48]]
  %s50 = scalar_lea.smem %s0, 25
  %s51 = sld [smem:[%s50]]
  %s52 = scalar_lea.smem %s0, 26
  %s53 = sld [smem:[%s52]]
  %s54 = scalar_lea.smem %s0, 27
  %s55 = sld [smem:[%s54]]
  %s56 = scalar_lea.smem %s0, 28
  %s57 = sld [smem:[%s56]]
  %s58 = scalar_lea.smem %s0, 29
  %s59 = sld [smem:[%s58]]
  %s60 = scalar_lea.smem %s0, 30
  %s61 = sld [smem:[%s60]]
  %s62 = scalar_lea.smem %s0, 31
  %s63 = sld [smem:[%s62]]
  %s64 = scalar_lea.smem %s0, 32
  %s65 = sld [smem:[%s64]]
  %s66 = scalar_lea.smem %s0, 33
  %s67 = sld [smem:[%s66]]
  %s68 = scalar_lea.smem %s0, 34
  %s69 = sld [smem:[%s68]]
  %s70 = scalar_lea.smem %s0, 35
  %s71 = sld [smem:[%s70]]
  %s72 = scalar_lea.smem %s0, 36
  %s73 = sld [smem:[%s72]]
  %s74 = sld [smem:[#allocation0]]
  $region226: #{ecg_concept_cnn_forward.1} parent=0
    _
  %s76 = ssub.s32 1, %s74
  %s77 = scalar_select 0, %s76, %s74
  $region1: #{ecg_concept_cnn_forward.1} parent=0
    #allocation3 [shape = 'u8[163840]{0}', space=vmem, size = 0x28000, scoped, tag = 'input window, operand 2, single buffered']
    #allocation4 [shape = 's32[1]{0}', space=sflag, size = 0x4, scoped, tag = 'scoped memory for ecg_concept_cnn_forward.1']
    #allocation5 [shape = 's32[1]{0}', space=sflag, size = 0x4, scoped, tag = 'scoped memory for ecg_concept_cnn_forward.1']
    #allocation6 [shape = 'u8[98304]{0}', space=vmem, size = 0x18000, scoped, tag = 'input window, operand 6, single buffered']
    #allocation7 [shape = 's32[1]{0}', space=sflag, size = 0x4, scoped, tag = 'scoped memory for ecg_concept_cnn_forward.1']
    #allocation8 [shape = 'u8[163840]{0}', space=vmem, size = 0x28000, scoped, tag = 'input window, operand 8, single buffered']
    #allocation9 [shape = 'u8[98304]{0}', space=vmem, size = 0x18000, scoped, tag = 'input window, operand 10, single buffered']
    #allocation10 [shape = 's32[1]{0}', space=sflag, size = 0x4, scoped, tag = 'scoped memory for ecg_concept_cnn_forward.1']
    #allocation11 [shape = 'u8[98304]{0}', space=vmem, size = 0x18000, scoped, tag = 'input window, operand 12, single buffered']
    #allocation12 [shape = 'u8[163840]{0}', space=vmem, size = 0x28000, scoped, tag = 'input window, operand 14, single buffered']
    #allocation13 [shape = 's32[1]{0}', space=sflag, size = 0x4, scoped, tag = 'scoped memory for ecg_concept_cnn_forward.1']
    #allocation14 [shape = 'u8[98304]{0}', space=vmem, size = 0x18000, scoped, tag = 'input window, operand 16, single buffered']
    #allocation15 [shape = 'u8[512]{0}', space=vmem, size = 0x400, scoped, tag = 'input window, operand 17, single buffered']
    #allocation16 [shape = 's32[1]{0}', space=sflag, size = 0x4, scoped, tag = 'scoped memory for ecg_concept_cnn_forward.1']
    #allocation17 [shape = 'u8[98304]{0}', space=vmem, size = 0x18000, scoped, tag = 'input window, operand 18, single buffered']
    #allocation18 [shape = 'u8[512]{0}', space=vmem, size = 0x400, scoped, tag = 'input window, operand 19, single buffered']
    #allocation19 [shape = 's32[1]{0}', space=sflag, size = 0x4, scoped, tag = 'scoped memory for ecg_concept_cnn_forward.1']
    #allocation20 [shape = 'u8[65536]{0}', space=vmem, size = 0x10000, scoped, tag = 'input window, operand 20, single buffered']
    #allocation21 [shape = 'u8[65536]{0}', space=vmem, size = 0x10000, scoped, tag = 'input window, operand 22, single buffered']
    #allocation22 [shape = 's32[1]{0}', space=sflag, size = 0x4, scoped, tag = 'scoped memory for ecg_concept_cnn_forward.1']
    #allocation23 [shape = 'u8[32768]{0}', space=vmem, size = 0x8000, scoped, tag = 'input window, operand 24, single buffered']
    #allocation24 [shape = 'u8[32768]{0}', space=vmem, size = 0x8000, scoped, tag = 'input window, operand 26, single buffered']
    #allocation25 [shape = 's32[1]{0}', space=sflag, size = 0x4, scoped, tag = 'scoped memory for ecg_concept_cnn_forward.1']
    #allocation26 [shape = 'u8[32768]{0}', space=vmem, size = 0x8000, scoped, tag = 'input window, operand 28, single buffered']
    #allocation27 [shape = 'u8[65536]{0}', space=vmem, size = 0x10000, scoped, tag = 'input window, operand 30, single buffered']
    #allocation28 [shape = 's32[1]{0}', space=sflag, size = 0x4, scoped, tag = 'scoped memory for ecg_concept_cnn_forward.1']
    #allocation29 [shape = 'u8[65536]{0}', space=vmem, size = 0x10000, scoped, tag = 'input window, operand 31, single buffered']
    #allocation30 [shape = 'u8[65536]{0}', space=vmem, size = 0x10000, scoped, tag = 'input window, operand 33, single buffered']
    #allocation31 [shape = 's32[1]{0}', space=sflag, size = 0x4, scoped, tag = 'scoped memory for ecg_concept_cnn_forward.1']
    #allocation32 [shape = 'u8[1024]{0}', space=vmem, size = 0x400, scoped, tag = 'output window, operand 0, single buffered']
    %78 = vsyncpa [#allocation4], 0
    %79 = vsyncpa [#allocation7], 0
    %80 = vsyncpa [#allocation10], 0
    %81 = vsyncpa [#allocation13], 0
    %82 = vsyncpa [#allocation16], 0
    %83 = vsyncpa [#allocation19], 0
    %84 = vsyncpa [#allocation22], 0
    %85 = vsyncpa [#allocation25], 0
    %86 = vsyncpa [#allocation28], 0
    %87 = vsyncpa [#allocation31], 0
    %88 = vsyncpa [#allocation5], 0
    // Predicated region
    $region2: #{ecg_concept_cnn_forward.1} parent=1 // pred_check
      _
    $region3: #{ecg_concept_cnn_forward.1} parent=1 // pred_check_branch
      %90 = sbr.rel (0) target = $region5
    $region4: #{ecg_concept_cnn_forward.1} parent=1 // pred_region
      _
    $region5: #{ecg_concept_cnn_forward.1} parent=1 // pred_fallthru
      _
    // Predicated region
    $region6: #{ecg_concept_cnn_forward.1} parent=1 // pred_check
      _
    $region7: #{ecg_concept_cnn_forward.1} parent=1 // pred_check_branch
      %92 = sbr.rel (0) target = $region9
    $region8: #{ecg_concept_cnn_forward.1} parent=1 // pred_region
      _
    $region9: #{ecg_concept_cnn_forward.1} parent=1 // pred_fallthru
      _
    // Predicated region
    $region10: #{ecg_concept_cnn_forward.1} parent=1 // pred_check
      _
    $region11: #{ecg_concept_cnn_forward.1} parent=1 // pred_check_branch
      %94 = sbr.rel (0) target = $region13
    $region12: #{ecg_concept_cnn_forward.1} parent=1 // pred_region
      %96 = vsyncadd [#allocation4], 0
      %s97 = sshll.u32 %s5, 4
      %s98 = int_to_ptr.hbm [resolvable:$true] %s97
      %s99 = sshll.u32 [#allocation3], 4
      %s100 = int_to_ptr.vmem [resolvable:$true] %s99
      %105 = dma.hbm_to_vmem [thread:$0]  %s98, 5120, %s100, [#allocation4], 64, 64, 4
    $region13: #{ecg_concept_cnn_forward.1} parent=1 // pred_fallthru
      _
    // Predicated region
    $region14: #{ecg_concept_cnn_forward.1} parent=1 // pred_check
      _
    $region15: #{ecg_concept_cnn_forward.1} parent=1 // pred_check_branch
      %107 = sbr.rel (0) target = $region17
    $region16: #{ecg_concept_cnn_forward.1} parent=1 // pred_region
      _
    $region17: #{ecg_concept_cnn_forward.1} parent=1 // pred_fallthru
      _
    // Predicated region
    $region18: #{ecg_concept_cnn_forward.1} parent=1 // pred_check
      _
    $region19: #{ecg_concept_cnn_forward.1} parent=1 // pred_check_branch
      %109 = sbr.rel (0) target = $region21
    $region20: #{ecg_concept_cnn_forward.1} parent=1 // pred_region
      _
    $region21: #{ecg_concept_cnn_forward.1} parent=1 // pred_fallthru
      _
    // Predicated region
    $region22: #{ecg_concept_cnn_forward.1} parent=1 // pred_check
      _
    $region23: #{ecg_concept_cnn_forward.1} parent=1 // pred_check_branch
      %111 = sbr.rel (0) target = $region25
    $region24: #{ecg_concept_cnn_forward.1} parent=1 // pred_region
      _
    $region25: #{ecg_concept_cnn_forward.1} parent=1 // pred_fallthru
      _
    // Predicated region
    $region26: #{ecg_concept_cnn_forward.1} parent=1 // pred_check
      _
    $region27: #{ecg_concept_cnn_forward.1} parent=1 // pred_check_branch
      %113 = sbr.rel (0) target = $region29
    $region28: #{ecg_concept_cnn_forward.1} parent=1 // pred_region
      %115 = vsyncadd [#allocation7], 0
      %s116 = sshll.u32 %s13, 4
      %s117 = int_to_ptr.hbm [resolvable:$true] %s116
      %s118 = sshll.u32 [#allocation6], 4
      %s119 = int_to_ptr.vmem [resolvable:$true] %s118
      %124 = dma.hbm_to_vmem [thread:$0]  %s117, 3072, %s119, [#allocation7], 64, 64, 4
    $region29: #{ecg_concept_cnn_forward.1} parent=1 // pred_fallthru
      _
    // Predicated region
    $region30: #{ecg_concept_cnn_forward.1} parent=1 // pred_check
      _
    $region31: #{ecg_concept_cnn_forward.1} parent=1 // pred_check_branch
      %126 = sbr.rel (0) target = $region33
    $region32: #{ecg_concept_cnn_forward.1} parent=1 // pred_region
      _
    $region33: #{ecg_concept_cnn_forward.1} parent=1 // pred_fallthru
      _
    // Predicated region
    $region34: #{ecg_concept_cnn_forward.1} parent=1 // pred_check
      _
    $region35: #{ecg_concept_cnn_forward.1} parent=1 // pred_check_branch
      %128 = sbr.rel (0) target = $region37
    $region36: #{ecg_concept_cnn_forward.1} parent=1 // pred_region
      %130 = vsyncadd [#allocation7], 0
      %s131 = sshll.u32 %s17, 4
      %s132 = int_to_ptr.hbm [resolvable:$true] %s131
      %s133 = sshll.u32 [#allocation8], 4
      %s134 = int_to_ptr.vmem [resolvable:$true] %s133
      %139 = dma.hbm_to_vmem [thread:$0]  %s132, 5120, %s134, [#allocation7], 64, 64, 4
    $region37: #{ecg_concept_cnn_forward.1} parent=1 // pred_fallthru
      _
    // Predicated region
    $region38: #{ecg_concept_cnn_forward.1} parent=1 // pred_check
      _
    $region39: #{ecg_concept_cnn_forward.1} parent=1 // pred_check_branch
      %141 = sbr.rel (0) target = $region41
    $region40: #{ecg_concept_cnn_forward.1} parent=1 // pred_region
      _
    $region41: #{ecg_concept_cnn_forward.1} parent=1 // pred_fallthru
      _
    // Predicated region
    $region42: #{ecg_concept_cnn_forward.1} parent=1 // pred_check
      _
    $region43: #{ecg_concept_cnn_forward.1} parent=1 // pred_check_branch
      %143 = sbr.rel (0) target = $region45
    $region44: #{ecg_concept_cnn_forward.1} parent=1 // pred_region
      %145 = vsyncadd [#allocation10], 0
      %s146 = sshll.u32 %s21, 4
      %s147 = int_to_ptr.hbm [resolvable:$true] %s146
      %s148 = sshll.u32 [#allocation9], 4
      %s149 = int_to_ptr.vmem [resolvable:$true] %s148
      %154 = dma.hbm_to_vmem [thread:$0]  %s147, 3072, %s149, [#allocation10], 64, 64, 4
    $region45: #{ecg_concept_cnn_forward.1} parent=1 // pred_fallthru
      _
    // Predicated region
    $region46: #{ecg_concept_cnn_forward.1} parent=1 // pred_check
      _
    $region47: #{ecg_concept_cnn_forward.1} parent=1 // pred_check_branch
      %156 = sbr.rel (0) target = $region49
    $region48: #{ecg_concept_cnn_forward.1} parent=1 // pred_region
      _
    $region49: #{ecg_concept_cnn_forward.1} parent=1 // pred_fallthru
      _
    // Predicated region
    $region50: #{ecg_concept_cnn_forward.1} parent=1 // pred_check
      _
    $region51: #{ecg_concept_cnn_forward.1} parent=1 // pred_check_branch
      %158 = sbr.rel (0) target = $region53
    $region52: #{ecg_concept_cnn_forward.1} parent=1 // pred_region
      %160 = vsyncadd [#allocation10], 0
      %s161 = sshll.u32 %s25, 4
      %s162 = int_to_ptr.hbm [resolvable:$true] %s161
      %s163 = sshll.u32 [#allocation11], 4
      %s164 = int_to_ptr.vmem [resolvable:$true] %s163
      %169 = dma.hbm_to_vmem [thread:$0]  %s162, 3072, %s164, [#allocation10], 64, 64, 4
    $region53: #{ecg_concept_cnn_forward.1} parent=1 // pred_fallthru
      _
    // Predicated region
    $region54: #{ecg_concept_cnn_forward.1} parent=1 // pred_check
      _
    $region55: #{ecg_concept_cnn_forward.1} parent=1 // pred_check_branch
      %171 = sbr.rel (0) target = $region57
    $region56: #{ecg_concept_cnn_forward.1} parent=1 // pred_region
      _
    $region57: #{ecg_concept_cnn_forward.1} parent=1 // pred_fallthru
      _
    // Predicated region
    $region58: #{ecg_concept_cnn_forward.1} parent=1 // pred_check
      _
    $region59: #{ecg_concept_cnn_forward.1} parent=1 // pred_check_branch
      %173 = sbr.rel (0) target = $region61
    $region60: #{ecg_concept_cnn_forward.1} parent=1 // pred_region
      %175 = vsyncadd [#allocation13], 0
      %s176 = sshll.u32 %s29, 4
      %s177 = int_to_ptr.hbm [resolvable:$true] %s176
      %s178 = sshll.u32 [#allocation12], 4
      %s179 = int_to_ptr.vmem [resolvable:$true] %s178
      %184 = dma.hbm_to_vmem [thread:$0]  %s177, 5120, %s179, [#allocation13], 64, 64, 4
    $region61: #{ecg_concept_cnn_forward.1} parent=1 // pred_fallthru
      _
    // Predicated region
    $region62: #{ecg_concept_cnn_forward.1} parent=1 // pred_check
      _
    $region63: #{ecg_concept_cnn_forward.1} parent=1 // pred_check_branch
      %186 = sbr.rel (0) target = $region65
    $region64: #{ecg_concept_cnn_forward.1} parent=1 // pred_region
      _
    $region65: #{ecg_concept_cnn_forward.1} parent=1 // pred_fallthru
      _
    // Predicated region
    $region66: #{ecg_concept_cnn_forward.1} parent=1 // pred_check
      _
    $region67: #{ecg_concept_cnn_forward.1} parent=1 // pred_check_branch
      %188 = sbr.rel (0) target = $region69
    $region68: #{ecg_concept_cnn_forward.1} parent=1 // pred_region
      %190 = vsyncadd [#allocation13], 0
      %s191 = sshll.u32 %s33, 4
      %s192 = int_to_ptr.hbm [resolvable:$true] %s191
      %s193 = sshll.u32 [#allocation14], 4
      %s194 = int_to_ptr.vmem [resolvable:$true] %s193
      %199 = dma.hbm_to_vmem [thread:$0]  %s192, 3072, %s194, [#allocation13], 64, 64, 4
    $region69: #{ecg_concept_cnn_forward.1} parent=1 // pred_fallthru
      _
    // Predicated region
    $region70: #{ecg_concept_cnn_forward.1} parent=1 // pred_check
      _
    $region71: #{ecg_concept_cnn_forward.1} parent=1 // pred_check_branch
      %201 = sbr.rel (0) target = $region73
    $region72: #{ecg_concept_cnn_forward.1} parent=1 // pred_region
      %203 = vsyncadd [#allocation16], 0
      %s205 = sshll.u32 %s35, 4
      %s206 = int_to_ptr.hbm [resolvable:$true] %s205
      %s207 = sshll.u32 [#allocation15], 4
      %s208 = int_to_ptr.vmem [resolvable:$true] %s207
      %210 = dma.hbm_to_vmem [thread:$0]  %s206, 16, %s208, [#allocation16]
    $region73: #{ecg_concept_cnn_forward.1} parent=1 // pred_fallthru
      _
    // Predicated region
    $region74: #{ecg_concept_cnn_forward.1} parent=1 // pred_check
      _
    $region75: #{ecg_concept_cnn_forward.1} parent=1 // pred_check_branch
      %212 = sbr.rel (0) target = $region77
    $region76: #{ecg_concept_cnn_forward.1} parent=1 // pred_region
      %214 = vsyncadd [#allocation16], 0
      %s215 = sshll.u32 %s37, 4
      %s216 = int_to_ptr.hbm [resolvable:$true] %s215
      %s217 = sshll.u32 [#allocation17], 4
      %s218 = int_to_ptr.vmem [resolvable:$true] %s217
      %223 = dma.hbm_to_vmem [thread:$0]  %s216, 3072, %s218, [#allocation16], 64, 64, 4
    $region77: #{ecg_concept_cnn_forward.1} parent=1 // pred_fallthru
      _
    // Predicated region
    $region78: #{ecg_concept_cnn_forward.1} parent=1 // pred_check
      _
    $region79: #{ecg_concept_cnn_forward.1} parent=1 // pred_check_branch
      %225 = sbr.rel (0) target = $region81
    $region80: #{ecg_concept_cnn_forward.1} parent=1 // pred_region
      %227 = vsyncadd [#allocation19], 0
      %s229 = sshll.u32 %s39, 4
      %s230 = int_to_ptr.hbm [resolvable:$true] %s229
      %s231 = sshll.u32 [#allocation18], 4
      %s232 = int_to_ptr.vmem [resolvable:$true] %s231
      %234 = dma.hbm_to_vmem [thread:$0]  %s230, 16, %s232, [#allocation19]
    $region81: #{ecg_concept_cnn_forward.1} parent=1 // pred_fallthru
      _
    // Predicated region
    $region82: #{ecg_concept_cnn_forward.1} parent=1 // pred_check
      _
    $region83: #{ecg_concept_cnn_forward.1} parent=1 // pred_check_branch
      %236 = sbr.rel (0) target = $region85
    $region84: #{ecg_concept_cnn_forward.1} parent=1 // pred_region
      %238 = vsyncadd [#allocation19], 0
      %s239 = sshll.u32 %s41, 4
      %s240 = int_to_ptr.hbm [resolvable:$true] %s239
      %s241 = sshll.u32 [#allocation20], 4
      %s242 = int_to_ptr.vmem [resolvable:$true] %s241
      %247 = dma.hbm_to_vmem [thread:$0]  %s240, 2048, %s242, [#allocation19], 128, 128, 8
    $region85: #{ecg_concept_cnn_forward.1} parent=1 // pred_fallthru
      _
    // Predicated region
    $region86: #{ecg_concept_cnn_forward.1} parent=1 // pred_check
      _
    $region87: #{ecg_concept_cnn_forward.1} parent=1 // pred_check_branch
      %249 = sbr.rel (0) target = $region89
    $region88: #{ecg_concept_cnn_forward.1} parent=1 // pred_region
      _
    $region89: #{ecg_concept_cnn_forward.1} parent=1 // pred_fallthru
      _
    // Predicated region
    $region90: #{ecg_concept_cnn_forward.1} parent=1 // pred_check
      _
    $region91: #{ecg_concept_cnn_forward.1} parent=1 // pred_check_branch
      %251 = sbr.rel (0) target = $region93
    $region92: #{ecg_concept_cnn_forward.1} parent=1 // pred_region
      %253 = vsyncadd [#allocation22], 0
      %s254 = sshll.u32 %s45, 4
      %s255 = int_to_ptr.hbm [resolvable:$true] %s254
      %s256 = sshll.u32 [#allocation21], 4
      %s257 = int_to_ptr.vmem [resolvable:$true] %s256
      %262 = dma.hbm_to_vmem [thread:$0]  %s255, 2048, %s257, [#allocation22], 64, 64, 4
    $region93: #{ecg_concept_cnn_forward.1} parent=1 // pred_fallthru
      _
    // Predicated region
    $region94: #{ecg_concept_cnn_forward.1} parent=1 // pred_check
      _
    $region95: #{ecg_concept_cnn_forward.1} parent=1 // pred_check_branch
      %264 = sbr.rel (0) target = $region97
    $region96: #{ecg_concept_cnn_forward.1} parent=1 // pred_region
      _
    $region97: #{ecg_concept_cnn_forward.1} parent=1 // pred_fallthru
      _
    // Predicated region
    $region98: #{ecg_concept_cnn_forward.1} parent=1 // pred_check
      _
    $region99: #{ecg_concept_cnn_forward.1} parent=1 // pred_check_branch
      %266 = sbr.rel (0) target = $region101
    $region100: #{ecg_concept_cnn_forward.1} parent=1 // pred_region
      %268 = vsyncadd [#allocation22], 0
      %s269 = sshll.u32 %s49, 4
      %s270 = int_to_ptr.hbm [resolvable:$true] %s269
      %s271 = sshll.u32 [#allocation23], 4
      %s272 = int_to_ptr.vmem [resolvable:$true] %s271
      %277 = dma.hbm_to_vmem [thread:$0]  %s270, 1024, %s272, [#allocation22], 64, 64, 4
    $region101: #{ecg_concept_cnn_forward.1} parent=1 // pred_fallthru
      _
    // Predicated region
    $region102: #{ecg_concept_cnn_forward.1} parent=1 // pred_check
      _
    $region103: #{ecg_concept_cnn_forward.1} parent=1 // pred_check_branch
      %279 = sbr.rel (0) target = $region105
    $region104: #{ecg_concept_cnn_forward.1} parent=1 // pred_region
      _
    $region105: #{ecg_concept_cnn_forward.1} parent=1 // pred_fallthru
      _
    // Predicated region
    $region106: #{ecg_concept_cnn_forward.1} parent=1 // pred_check
      _
    $region107: #{ecg_concept_cnn_forward.1} parent=1 // pred_check_branch
      %281 = sbr.rel (0) target = $region109
    $region108: #{ecg_concept_cnn_forward.1} parent=1 // pred_region
      %283 = vsyncadd [#allocation25], 0
      %s284 = sshll.u32 %s53, 4
      %s285 = int_to_ptr.hbm [resolvable:$true] %s284
      %s286 = sshll.u32 [#allocation24], 4
      %s287 = int_to_ptr.vmem [resolvable:$true] %s286
      %292 = dma.hbm_to_vmem [thread:$0]  %s285, 1024, %s287, [#allocation25], 64, 64, 4
    $region109: #{ecg_concept_cnn_forward.1} parent=1 // pred_fallthru
      _
    // Predicated region
    $region110: #{ecg_concept_cnn_forward.1} parent=1 // pred_check
      _
    $region111: #{ecg_concept_cnn_forward.1} parent=1 // pred_check_branch
      %294 = sbr.rel (0) target = $region113
    $region112: #{ecg_concept_cnn_forward.1} parent=1 // pred_region
      _
    $region113: #{ecg_concept_cnn_forward.1} parent=1 // pred_fallthru
      _
    // Predicated region
    $region114: #{ecg_concept_cnn_forward.1} parent=1 // pred_check
      _
    $region115: #{ecg_concept_cnn_forward.1} parent=1 // pred_check_branch
      %296 = sbr.rel (0) target = $region117
    $region116: #{ecg_concept_cnn_forward.1} parent=1 // pred_region
      %298 = vsyncadd [#allocation25], 0
      %s299 = sshll.u32 %s57, 4
      %s300 = int_to_ptr.hbm [resolvable:$true] %s299
      %s301 = sshll.u32 [#allocation26], 4
      %s302 = int_to_ptr.vmem [resolvable:$true] %s301
      %307 = dma.hbm_to_vmem [thread:$0]  %s300, 1024, %s302, [#allocation25], 64, 64, 4
    $region117: #{ecg_concept_cnn_forward.1} parent=1 // pred_fallthru
      _
    // Predicated region
    $region118: #{ecg_concept_cnn_forward.1} parent=1 // pred_check
      _
    $region119: #{ecg_concept_cnn_forward.1} parent=1 // pred_check_branch
      %309 = sbr.rel (0) target = $region121
    $region120: #{ecg_concept_cnn_forward.1} parent=1 // pred_region
      _
    $region121: #{ecg_concept_cnn_forward.1} parent=1 // pred_fallthru
      _
    // Predicated region
    $region122: #{ecg_concept_cnn_forward.1} parent=1 // pred_check
      _
    $region123: #{ecg_concept_cnn_forward.1} parent=1 // pred_check_branch
      %311 = sbr.rel (0) target = $region125
    $region124: #{ecg_concept_cnn_forward.1} parent=1 // pred_region
      %313 = vsyncadd [#allocation28], 0
      %s314 = sshll.u32 %s61, 4
      %s315 = int_to_ptr.hbm [resolvable:$true] %s314
      %s316 = sshll.u32 [#allocation27], 4
      %s317 = int_to_ptr.vmem [resolvable:$true] %s316
      %322 = dma.hbm_to_vmem [thread:$0]  %s315, 2048, %s317, [#allocation28], 128, 128, 8
    $region125: #{ecg_concept_cnn_forward.1} parent=1 // pred_fallthru
      _
    // Predicated region
    $region126: #{ecg_concept_cnn_forward.1} parent=1 // pred_check
      _
    $region127: #{ecg_concept_cnn_forward.1} parent=1 // pred_check_branch
      %324 = sbr.rel (0) target = $region129
    $region128: #{ecg_concept_cnn_forward.1} parent=1 // pred_region
      %326 = vsyncadd [#allocation28], 0
      %s327 = sshll.u32 %s63, 4
      %s328 = int_to_ptr.hbm [resolvable:$true] %s327
      %s329 = sshll.u32 [#allocation29], 4
      %s330 = int_to_ptr.vmem [resolvable:$true] %s329
      %335 = dma.hbm_to_vmem [thread:$0]  %s328, 2048, %s330, [#allocation28], 128, 128, 8
    $region129: #{ecg_concept_cnn_forward.1} parent=1 // pred_fallthru
      _
    // Predicated region
    $region130: #{ecg_concept_cnn_forward.1} parent=1 // pred_check
      _
    $region131: #{ecg_concept_cnn_forward.1} parent=1 // pred_check_branch
      %337 = sbr.rel (0) target = $region133
    $region132: #{ecg_concept_cnn_forward.1} parent=1 // pred_region
      _
    $region133: #{ecg_concept_cnn_forward.1} parent=1 // pred_fallthru
      _
    // Predicated region
    $region134: #{ecg_concept_cnn_forward.1} parent=1 // pred_check
      _
    $region135: #{ecg_concept_cnn_forward.1} parent=1 // pred_check_branch
      %339 = sbr.rel (0) target = $region137
    $region136: #{ecg_concept_cnn_forward.1} parent=1 // pred_region
      %341 = vsyncadd [#allocation31], 0
      %s342 = sshll.u32 %s67, 4
      %s343 = int_to_ptr.hbm [resolvable:$true] %s342
      %s344 = sshll.u32 [#allocation30], 4
      %s345 = int_to_ptr.vmem [resolvable:$true] %s344
      %350 = dma.hbm_to_vmem [thread:$0]  %s343, 2048, %s345, [#allocation31], 64, 64, 4
    $region137: #{ecg_concept_cnn_forward.1} parent=1 // pred_fallthru
      _
    // Predicated region
    $region138: #{ecg_concept_cnn_forward.1} parent=1 // pred_check
      _
    $region139: #{ecg_concept_cnn_forward.1} parent=1 // pred_check_branch
      %352 = sbr.rel (0) target = $region141
    $region140: #{ecg_concept_cnn_forward.1} parent=1 // pred_region
      _
    $region141: #{ecg_concept_cnn_forward.1} parent=1 // pred_fallthru
      _
    // Predicated region
    $region142: #{ecg_concept_cnn_forward.1} parent=1 // pred_check
      _
    $region143: #{ecg_concept_cnn_forward.1} parent=1 // pred_check_branch
      %354 = sbr.rel (0) target = $region145
    $region144: #{ecg_concept_cnn_forward.1} parent=1 // pred_region
      _
    $region145: #{ecg_concept_cnn_forward.1} parent=1 // pred_fallthru
      _
    // Predicated region
    $region146: #{ecg_concept_cnn_forward.1} parent=1 // pred_check
      _
    $region147: #{ecg_concept_cnn_forward.1} parent=1 // pred_check_branch
      %356 = sbr.rel (0) target = $region149
    $region148: #{ecg_concept_cnn_forward.1} parent=1 // pred_region
      %358 = dma.done [#allocation4], 5120
    $region149: #{ecg_concept_cnn_forward.1} parent=1 // pred_fallthru
      _
    // Predicated region
    $region150: #{ecg_concept_cnn_forward.1} parent=1 // pred_check
      _
    $region151: #{ecg_concept_cnn_forward.1} parent=1 // pred_check_branch
      %360 = sbr.rel (0) target = $region153
    $region152: #{ecg_concept_cnn_forward.1} parent=1 // pred_region
      %362 = dma.done [#allocation7], 3072
    $region153: #{ecg_concept_cnn_forward.1} parent=1 // pred_fallthru
      _
    // Predicated region
    $region154: #{ecg_concept_cnn_forward.1} parent=1 // pred_check
      _
    $region155: #{ecg_concept_cnn_forward.1} parent=1 // pred_check_branch
      %364 = sbr.rel (0) target = $region157
    $region156: #{ecg_concept_cnn_forward.1} parent=1 // pred_region
      %366 = dma.done [#allocation7], 5120
    $region157: #{ecg_concept_cnn_forward.1} parent=1 // pred_fallthru
      _
    // Predicated region
    $region158: #{ecg_concept_cnn_forward.1} parent=1 // pred_check
      _
    $region159: #{ecg_concept_cnn_forward.1} parent=1 // pred_check_branch
      %368 = sbr.rel (0) target = $region161
    $region160: #{ecg_concept_cnn_forward.1} parent=1 // pred_region
      %370 = dma.done [#allocation10], 3072
    $region161: #{ecg_concept_cnn_forward.1} parent=1 // pred_fallthru
      _
    // Predicated region
    $region162: #{ecg_concept_cnn_forward.1} parent=1 // pred_check
      _
    $region163: #{ecg_concept_cnn_forward.1} parent=1 // pred_check_branch
      %372 = sbr.rel (0) target = $region165
    $region164: #{ecg_concept_cnn_forward.1} parent=1 // pred_region
      %374 = dma.done [#allocation10], 3072
    $region165: #{ecg_concept_cnn_forward.1} parent=1 // pred_fallthru
      _
    // Predicated region
    $region166: #{ecg_concept_cnn_forward.1} parent=1 // pred_check
      _
    $region167: #{ecg_concept_cnn_forward.1} parent=1 // pred_check_branch
      %376 = sbr.rel (0) target = $region169
    $region168: #{ecg_concept_cnn_forward.1} parent=1 // pred_region
      %378 = dma.done [#allocation13], 5120
    $region169: #{ecg_concept_cnn_forward.1} parent=1 // pred_fallthru
      _
    // Predicated region
    $region170: #{ecg_concept_cnn_forward.1} parent=1 // pred_check
      _
    $region171: #{ecg_concept_cnn_forward.1} parent=1 // pred_check_branch
      %380 = sbr.rel (0) target = $region173
    $region172: #{ecg_concept_cnn_forward.1} parent=1 // pred_region
      %382 = dma.done [#allocation13], 3072
    $region173: #{ecg_concept_cnn_forward.1} parent=1 // pred_fallthru
      _
    // Predicated region
    $region174: #{ecg_concept_cnn_forward.1} parent=1 // pred_check
      _
    $region175: #{ecg_concept_cnn_forward.1} parent=1 // pred_check_branch
      %384 = sbr.rel (0) target = $region177
    $region176: #{ecg_concept_cnn_forward.1} parent=1 // pred_region
      %386 = dma.done [#allocation16], 16
    $region177: #{ecg_concept_cnn_forward.1} parent=1 // pred_fallthru
      _
    // Predicated region
    $region178: #{ecg_concept_cnn_forward.1} parent=1 // pred_check
      _
    $region179: #{ecg_concept_cnn_forward.1} parent=1 // pred_check_branch
      %388 = sbr.rel (0) target = $region181
    $region180: #{ecg_concept_cnn_forward.1} parent=1 // pred_region
      %390 = dma.done [#allocation16], 3072
    $region181: #{ecg_concept_cnn_forward.1} parent=1 // pred_fallthru
      _
    // Predicated region
    $region182: #{ecg_concept_cnn_forward.1} parent=1 // pred_check
      _
    $region183: #{ecg_concept_cnn_forward.1} parent=1 // pred_check_branch
      %392 = sbr.rel (0) target = $region185
    $region184: #{ecg_concept_cnn_forward.1} parent=1 // pred_region
      %394 = dma.done [#allocation19], 16
    $region185: #{ecg_concept_cnn_forward.1} parent=1 // pred_fallthru
      _
    // Predicated region
    $region186: #{ecg_concept_cnn_forward.1} parent=1 // pred_check
      _
    $region187: #{ecg_concept_cnn_forward.1} parent=1 // pred_check_branch
      %396 = sbr.rel (0) target = $region189
    $region188: #{ecg_concept_cnn_forward.1} parent=1 // pred_region
      %398 = dma.done [#allocation19], 2048
    $region189: #{ecg_concept_cnn_forward.1} parent=1 // pred_fallthru
      _
    // Predicated region
    $region190: #{ecg_concept_cnn_forward.1} parent=1 // pred_check
      _
    $region191: #{ecg_concept_cnn_forward.1} parent=1 // pred_check_branch
      %400 = sbr.rel (0) target = $region193
    $region192: #{ecg_concept_cnn_forward.1} parent=1 // pred_region
      %402 = dma.done [#allocation22], 2048
    $region193: #{ecg_concept_cnn_forward.1} parent=1 // pred_fallthru
      _
    // Predicated region
    $region194: #{ecg_concept_cnn_forward.1} parent=1 // pred_check
      _
    $region195: #{ecg_concept_cnn_forward.1} parent=1 // pred_check_branch
      %404 = sbr.rel (0) target = $region197
    $region196: #{ecg_concept_cnn_forward.1} parent=1 // pred_region
      %406 = dma.done [#allocation22], 1024
    $region197: #{ecg_concept_cnn_forward.1} parent=1 // pred_fallthru
      _
    // Predicated region
    $region198: #{ecg_concept_cnn_forward.1} parent=1 // pred_check
      _
    $region199: #{ecg_concept_cnn_forward.1} parent=1 // pred_check_branch
      %408 = sbr.rel (0) target = $region201
    $region200: #{ecg_concept_cnn_forward.1} parent=1 // pred_region
      %410 = dma.done [#allocation25], 1024
    $region201: #{ecg_concept_cnn_forward.1} parent=1 // pred_fallthru
      _
    // Predicated region
    $region202: #{ecg_concept_cnn_forward.1} parent=1 // pred_check
      _
    $region203: #{ecg_concept_cnn_forward.1} parent=1 // pred_check_branch
      %412 = sbr.rel (0) target = $region205
    $region204: #{ecg_concept_cnn_forward.1} parent=1 // pred_region
      %414 = dma.done [#allocation25], 1024
    $region205: #{ecg_concept_cnn_forward.1} parent=1 // pred_fallthru
      _
    // Predicated region
    $region206: #{ecg_concept_cnn_forward.1} parent=1 // pred_check
      _
    $region207: #{ecg_concept_cnn_forward.1} parent=1 // pred_check_branch
      %416 = sbr.rel (0) target = $region209
    $region208: #{ecg_concept_cnn_forward.1} parent=1 // pred_region
      %418 = dma.done [#allocation28], 2048
    $region209: #{ecg_concept_cnn_forward.1} parent=1 // pred_fallthru
      _
    // Predicated region
    $region210: #{ecg_concept_cnn_forward.1} parent=1 // pred_check
      _
    $region211: #{ecg_concept_cnn_forward.1} parent=1 // pred_check_branch
      %420 = sbr.rel (0) target = $region213
    $region212: #{ecg_concept_cnn_forward.1} parent=1 // pred_region
      %422 = dma.done [#allocation28], 2048
    $region213: #{ecg_concept_cnn_forward.1} parent=1 // pred_fallthru
      _
    // Predicated region
    $region214: #{ecg_concept_cnn_forward.1} parent=1 // pred_check
      _
    $region215: #{ecg_concept_cnn_forward.1} parent=1 // pred_check_branch
      %424 = sbr.rel (0) target = $region217
    $region216: #{ecg_concept_cnn_forward.1} parent=1 // pred_region
      %426 = dma.done [#allocation31], 2048
    $region217: #{ecg_concept_cnn_forward.1} parent=1 // pred_fallthru
      _
    %v427 = vld [vmem:[%s1] sm:$0xff]
    %v428 = vld [vmem:[%s1 + $0x8] sm:$0xff]
    %v429 = vld [vmem:[%s1 + $0x10] sm:$0xff]
    %v430 = vld [vmem:[%s1 + $0x18] sm:$0xff]
    %v431 = vld [vmem:[%s1 + $0x20] sm:$0xff]
    %v432 = vld [vmem:[%s1 + $0x28] sm:$0xff]
    %v433 = vld [vmem:[%s1 + $0x30] sm:$0xff]
    %v434 = vld [vmem:[%s1 + $0x38] sm:$0xff]
    %v435 = vlaneseq
    %v436 = vshrl.u32 %v435, 7
    %v437 = vadd.s32 %v436, 8
    %v438 = vadd.s32 %v436, 16
    %v439 = vadd.s32 %v436, 24
    %v440 = vadd.s32 %v436, 32
    %v441 = vadd.s32 %v436, 40
    %v442 = vadd.s32 %v436, 48
    %v443 = vadd.s32 %v436, 56
    %vm444 = vcmp.lt.s32.totalorder %v436, 0
    %v445 = vsub.s32 0, %v436
    %v446 = vsel %vm444, %v445, %v436
    %v447 = vshrl.u32 %v446, 5
    %v448 = vand.u32 %v446, 31
    %v449 = vsub.s32 0, %v448
    %v450 = vsel %vm444, %v449, %v448
    %vm451 = vcmp.lt.s32.totalorder %v437, 0
    %v452 = vsub.s32 0, %v437
    %v453 = vsel %vm451, %v452, %v437
    %v454 = vshrl.u32 %v453, 5
    %v455 = vand.u32 %v453, 31
    %v456 = vsub.s32 0, %v455
    %v457 = vsel %vm451, %v456, %v455
    %vm458 = vcmp.lt.s32.totalorder %v438, 0
    %v459 = vsub.s32 0, %v438
    %v460 = vsel %vm458, %v459, %v438
    %v461 = vshrl.u32 %v460, 5
    %v462 = vand.u32 %v460, 31
    %v463 = vsub.s32 0, %v462
    %v464 = vsel %vm458, %v463, %v462
    %vm465 = vcmp.lt.s32.totalorder %v439, 0
    %v466 = vsub.s32 0, %v439
    %v467 = vsel %vm465, %v466, %v439
    %v468 = vshrl.u32 %v467, 5
    %v469 = vand.u32 %v467, 31
    %v470 = vsub.s32 0, %v469
    %v471 = vsel %vm465, %v470, %v469
    %vm472 = vcmp.lt.s32.totalorder %v440, 0
    %v473 = vsub.s32 0, %v440
    %v474 = vsel %vm472, %v473, %v440
    %v475 = vshrl.u32 %v474, 5
    %v476 = vand.u32 %v474, 31
    %v477 = vsub.s32 0, %v476
    %v478 = vsel %vm472, %v477, %v476
    %vm479 = vcmp.lt.s32.totalorder %v441, 0
    %v480 = vsub.s32 0, %v441
    %v481 = vsel %vm479, %v480, %v441
    %v482 = vshrl.u32 %v481, 5
    %v483 = vand.u32 %v481, 31
    %v484 = vsub.s32 0, %v483
    %v485 = vsel %vm479, %v484, %v483
    %vm486 = vcmp.lt.s32.totalorder %v442, 0
    %v487 = vsub.s32 0, %v442
    %v488 = vsel %vm486, %v487, %v442
    %v489 = vshrl.u32 %v488, 5
    %v490 = vand.u32 %v488, 31
    %v491 = vsub.s32 0, %v490
    %v492 = vsel %vm486, %v491, %v490
    %vm493 = vcmp.lt.s32.totalorder %v443, 0
    %v494 = vsub.s32 0, %v443
    %v495 = vsel %vm493, %v494, %v443
    %v496 = vshrl.u32 %v495, 5
    %v497 = vand.u32 %v495, 31
    %v498 = vsub.s32 0, %v497
    %v499 = vsel %vm493, %v498, %v497
    %vm500 = vcmp.ne.s32.totalorder %v450, 0
    %vm501 = vcmp.ne.s32.totalorder %v457, 0
    %vm502 = vcmp.ne.s32.totalorder %v464, 0
    %vm503 = vcmp.ne.s32.totalorder %v471, 0
    %vm504 = vcmp.ne.s32.totalorder %v478, 0
    %vm505 = vcmp.ne.s32.totalorder %v485, 0
    %vm506 = vcmp.ne.s32.totalorder %v492, 0
    %vm507 = vcmp.ne.s32.totalorder %v499, 0
    %vm508 = vcmp.lt.s32.totalorder %v450, 0
    %vm509 = vcmp.lt.s32.totalorder %v457, 0
    %vm510 = vcmp.lt.s32.totalorder %v464, 0
    %vm511 = vcmp.lt.s32.totalorder %v471, 0
    %vm512 = vcmp.lt.s32.totalorder %v478, 0
    %vm513 = vcmp.lt.s32.totalorder %v485, 0
    %vm514 = vcmp.lt.s32.totalorder %v492, 0
    %vm515 = vcmp.lt.s32.totalorder %v499, 0
    %vm516 = vmand %vm508, %vm500
    %vm517 = vmand %vm509, %vm501
    %vm518 = vmand %vm510, %vm502
    %vm519 = vmand %vm511, %vm503
    %vm520 = vmand %vm512, %vm504
    %vm521 = vmand %vm513, %vm505
    %vm522 = vmand %vm514, %vm506
    %vm523 = vmand %vm515, %vm507
    %v524 = vadd.s32 %v450, 32
    %v525 = vadd.s32 %v457, 32
    %v526 = vadd.s32 %v464, 32
    %v527 = vadd.s32 %v471, 32
    %v528 = vadd.s32 %v478, 32
    %v529 = vadd.s32 %v485, 32
    %v530 = vadd.s32 %v492, 32
    %v531 = vadd.s32 %v499, 32
    %v532 = vsel %vm516, %v524, %v450
    %v533 = vsel %vm517, %v525, %v457
    %v534 = vsel %vm518, %v526, %v464
    %v535 = vsel %vm519, %v527, %v471
    %v536 = vsel %vm520, %v528, %v478
    %v537 = vsel %vm521, %v529, %v485
    %v538 = vsel %vm522, %v530, %v492
    %v539 = vsel %vm523, %v531, %v499
    %vm548 = vcmask 1041408
    %v549 = vrot.slane %v427, 6
    %v550 = vrot.slane %v428, 6
    %v551 = vsel %vm548, %v549, %v550
    %v552 = vrot.slane %v429, 6
    %v553 = vsel %vm548, %v550, %v552
    %v554 = vrot.slane %v430, 6
    %v555 = vsel %vm548, %v552, %v554
    %v556 = vrot.slane %v431, 6
    %v557 = vsel %vm548, %v554, %v556
    %v558 = vrot.slane %v432, 6
    %v559 = vsel %vm548, %v556, %v558
    %v560 = vrot.slane %v433, 6
    %v561 = vsel %vm548, %v558, %v560
    %v562 = vrot.slane %v434, 6
    %v563 = vsel %vm548, %v560, %v562
    %v572 = vsel %vm548, 0.0, %v549
    %v573 = vadd.s32 %v532, 4294967294
    %v574 = vadd.s32 %v533, 4294967294
    %v575 = vadd.s32 %v534, 4294967294
    %v576 = vadd.s32 %v535, 4294967294
    %v577 = vadd.s32 %v536, 4294967294
    %v578 = vadd.s32 %v537, 4294967294
    %v579 = vadd.s32 %v538, 4294967294
    %v580 = vadd.s32 %v539, 4294967294
    %vm581 = vcmp.ge.s32.totalorder %v573, 0
    %vm582 = vcmp.ge.s32.totalorder %v574, 0
    %vm583 = vcmp.ge.s32.totalorder %v575, 0
    %vm584 = vcmp.ge.s32.totalorder %v576, 0
    %vm585 = vcmp.ge.s32.totalorder %v577, 0
    %vm586 = vcmp.ge.s32.totalorder %v578, 0
    %vm587 = vcmp.ge.s32.totalorder %v579, 0
    %vm588 = vcmp.ge.s32.totalorder %v580, 0
    %vm589 = vcmp.lt.s32.totalorder %v573, 32
    %vm590 = vcmp.lt.s32.totalorder %v574, 32
    %vm591 = vcmp.lt.s32.totalorder %v575, 32
    %vm592 = vcmp.lt.s32.totalorder %v576, 32
    %vm593 = vcmp.lt.s32.totalorder %v577, 32
    %vm594 = vcmp.lt.s32.totalorder %v578, 32
    %vm595 = vcmp.lt.s32.totalorder %v579, 32
    %vm596 = vcmp.lt.s32.totalorder %v580, 32
    %vm597 = vmand %vm581, %vm589
    %vm598 = vmand %vm582, %vm590
    %vm599 = vmand %vm583, %vm591
    %vm600 = vmand %vm584, %vm592
    %vm601 = vmand %vm585, %vm593
    %vm602 = vmand %vm586, %vm594
    %vm603 = vmand %vm587, %vm595
    %vm604 = vmand %vm588, %vm596
    %v605 = vsel %vm597, 1, 0
    %v606 = vsel %vm598, 1, 0
    %v607 = vsel %vm599, 1, 0
    %v608 = vsel %vm600, 1, 0
    %v609 = vsel %vm601, 1, 0
    %v610 = vsel %vm602, 1, 0
    %v611 = vsel %vm603, 1, 0
    %v612 = vsel %vm604, 1, 0
    %vm613 = vcmp.eq.s32.totalorder %v605, 1
    %vm614 = vcmp.eq.s32.totalorder %v606, 1
    %vm615 = vcmp.eq.s32.totalorder %v607, 1
    %vm616 = vcmp.eq.s32.totalorder %v608, 1
    %vm617 = vcmp.eq.s32.totalorder %v609, 1
    %vm618 = vcmp.eq.s32.totalorder %v610, 1
    %vm619 = vcmp.eq.s32.totalorder %v611, 1
    %vm620 = vcmp.eq.s32.totalorder %v612, 1
    %v621 = vsel %vm613, %v572, 0.0
    %v622 = vsel %vm614, %v551, 0.0
    %v623 = vsel %vm615, %v553, 0.0
    %v624 = vsel %vm616, %v555, 0.0
    %v625 = vsel %vm617, %v557, 0.0
    %v626 = vsel %vm618, %v559, 0.0
    %v627 = vsel %vm619, %v561, 0.0
    %v628 = vsel %vm620, %v563, 0.0
    %vm629 = vcmask 1040384
    %v630 = vrot.slane %v427, 7
    %v631 = vrot.slane %v428, 7
    %v632 = vsel %vm629, %v630, %v631
    %v633 = vrot.slane %v429, 7
    %v634 = vsel %vm629, %v631, %v633
    %v635 = vrot.slane %v430, 7
    %v636 = vsel %vm629, %v633, %v635
    %v637 = vrot.slane %v431, 7
    %v638 = vsel %vm629, %v635, %v637
    %v639 = vrot.slane %v432, 7
    %v640 = vsel %vm629, %v637, %v639
    %v641 = vrot.slane %v433, 7
    %v642 = vsel %vm629, %v639, %v641
    %v643 = vrot.slane %v434, 7
    %v644 = vsel %vm629, %v641, %v643
    %v653 = vsel %vm629, 0.0, %v630
    %v654 = vadd.s32 %v532, 4294967295
    %v655 = vadd.s32 %v533, 4294967295
    %v656 = vadd.s32 %v534, 4294967295
    %v657 = vadd.s32 %v535, 4294967295
    %v658 = vadd.s32 %v536, 4294967295
    %v659 = vadd.s32 %v537, 4294967295
    %v660 = vadd.s32 %v538, 4294967295
    %v661 = vadd.s32 %v539, 4294967295
    %vm662 = vcmp.ge.s32.totalorder %v654, 0
    %vm663 = vcmp.ge.s32.totalorder %v655, 0
    %vm664 = vcmp.ge.s32.totalorder %v656, 0
    %vm665 = vcmp.ge.s32.totalorder %v657, 0
    %vm666 = vcmp.ge.s32.totalorder %v658, 0
    %vm667 = vcmp.ge.s32.totalorder %v659, 0
    %vm668 = vcmp.ge.s32.totalorder %v660, 0
    %vm669 = vcmp.ge.s32.totalorder %v661, 0
    %vm670 = vcmp.lt.s32.totalorder %v654, 32
    %vm671 = vcmp.lt.s32.totalorder %v655, 32
    %vm672 = vcmp.lt.s32.totalorder %v656, 32
    %vm673 = vcmp.lt.s32.totalorder %v657, 32
    %vm674 = vcmp.lt.s32.totalorder %v658, 32
    %vm675 = vcmp.lt.s32.totalorder %v659, 32
    %vm676 = vcmp.lt.s32.totalorder %v660, 32
    %vm677 = vcmp.lt.s32.totalorder %v661, 32
    %vm678 = vmand %vm662, %vm670
    %vm679 = vmand %vm663, %vm671
    %vm680 = vmand %vm664, %vm672
    %vm681 = vmand %vm665, %vm673
    %vm682 = vmand %vm666, %vm674
    %vm683 = vmand %vm667, %vm675
    %vm684 = vmand %vm668, %vm676
    %vm685 = vmand %vm669, %vm677
    %v686 = vsel %vm678, 1, 0
    %v687 = vsel %vm679, 1, 0
    %v688 = vsel %vm680, 1, 0
    %v689 = vsel %vm681, 1, 0
    %v690 = vsel %vm682, 1, 0
    %v691 = vsel %vm683, 1, 0
    %v692 = vsel %vm684, 1, 0
    %v693 = vsel %vm685, 1, 0
    %vm694 = vcmp.eq.s32.totalorder %v686, 1
    %vm695 = vcmp.eq.s32.totalorder %v687, 1
    %vm696 = vcmp.eq.s32.totalorder %v688, 1
    %vm697 = vcmp.eq.s32.totalorder %v689, 1
    %vm698 = vcmp.eq.s32.totalorder %v690, 1
    %vm699 = vcmp.eq.s32.totalorder %v691, 1
    %vm700 = vcmp.eq.s32.totalorder %v692, 1
    %vm701 = vcmp.eq.s32.totalorder %v693, 1
    %v702 = vsel %vm694, %v653, 0.0
    %v703 = vsel %vm695, %v632, 0.0
    %v704 = vsel %vm696, %v634, 0.0
    %v705 = vsel %vm697, %v636, 0.0
    %v706 = vsel %vm698, %v638, 0.0
    %v707 = vsel %vm699, %v640, 0.0
    %v708 = vsel %vm700, %v642, 0.0
    %v709 = vsel %vm701, %v644, 0.0
    %vm710 = vcmask 1046528
    %v711 = vrot.slane %v427, 1
    %v712 = vrot.slane %v428, 1
    %v713 = vsel %vm710, %v711, %v712
    %v714 = vrot.slane %v429, 1
    %v715 = vsel %vm710, %v712, %v714
    %v716 = vrot.slane %v430, 1
    %v717 = vsel %vm710, %v714, %v716
    %v718 = vrot.slane %v431, 1
    %v719 = vsel %vm710, %v716, %v718
    %v720 = vrot.slane %v432, 1
    %v721 = vsel %vm710, %v718, %v720
    %v722 = vrot.slane %v433, 1
    %v723 = vsel %vm710, %v720, %v722
    %v724 = vrot.slane %v434, 1
    %v725 = vsel %vm710, %v722, %v724
    %v734 = vsel %vm710, %v724, 0.0
    %v735 = vadd.s32 %v532, 1
    %v736 = vadd.s32 %v533, 1
    %v737 = vadd.s32 %v534, 1
    %v738 = vadd.s32 %v535, 1
    %v739 = vadd.s32 %v536, 1
    %v740 = vadd.s32 %v537, 1
    %v741 = vadd.s32 %v538, 1
    %v742 = vadd.s32 %v539, 1
    %vm743 = vcmp.ge.s32.totalorder %v735, 0
    %vm744 = vcmp.ge.s32.totalorder %v736, 0
    %vm745 = vcmp.ge.s32.totalorder %v737, 0
    %vm746 = vcmp.ge.s32.totalorder %v738, 0
    %vm747 = vcmp.ge.s32.totalorder %v739, 0
    %vm748 = vcmp.ge.s32.totalorder %v740, 0
    %vm749 = vcmp.ge.s32.totalorder %v741, 0
    %vm750 = vcmp.ge.s32.totalorder %v742, 0
    %vm751 = vcmp.lt.s32.totalorder %v735, 32
    %vm752 = vcmp.lt.s32.totalorder %v736, 32
    %vm753 = vcmp.lt.s32.totalorder %v737, 32
    %vm754 = vcmp.lt.s32.totalorder %v738, 32
    %vm755 = vcmp.lt.s32.totalorder %v739, 32
    %vm756 = vcmp.lt.s32.totalorder %v740, 32
    %vm757 = vcmp.lt.s32.totalorder %v741, 32
    %vm758 = vcmp.lt.s32.totalorder %v742, 32
    %vm759 = vmand %vm743, %vm751
    %vm760 = vmand %vm744, %vm752
    %vm761 = vmand %vm745, %vm753
    %vm762 = vmand %vm746, %vm754
    %vm763 = vmand %vm747, %vm755
    %vm764 = vmand %vm748, %vm756
    %vm765 = vmand %vm749, %vm757
    %vm766 = vmand %vm750, %vm758
    %v767 = vsel %vm759, 1, 0
    %v768 = vsel %vm760, 1, 0
    %v769 = vsel %vm761, 1, 0
    %v770 = vsel %vm762, 1, 0
    %v771 = vsel %vm763, 1, 0
    %v772 = vsel %vm764, 1, 0
    %v773 = vsel %vm765, 1, 0
    %v774 = vsel %vm766, 1, 0
    %vm775 = vcmp.eq.s32.totalorder %v767, 1
    %vm776 = vcmp.eq.s32.totalorder %v768, 1
    %vm777 = vcmp.eq.s32.totalorder %v769, 1
    %vm778 = vcmp.eq.s32.totalorder %v770, 1
    %vm779 = vcmp.eq.s32.totalorder %v771, 1
    %vm780 = vcmp.eq.s32.totalorder %v772, 1
    %vm781 = vcmp.eq.s32.totalorder %v773, 1
    %vm782 = vcmp.eq.s32.totalorder %v774, 1
    %v783 = vsel %vm775, %v713, 0.0
    %v784 = vsel %vm776, %v715, 0.0
    %v785 = vsel %vm777, %v717, 0.0
    %v786 = vsel %vm778, %v719, 0.0
    %v787 = vsel %vm779, %v721, 0.0
    %v788 = vsel %vm780, %v723, 0.0
    %v789 = vsel %vm781, %v725, 0.0
    %v790 = vsel %vm782, %v734, 0.0
    %vm791 = vcmask 1045504
    %v792 = vrot.slane %v427, 2
    %v793 = vrot.slane %v428, 2
    %v794 = vsel %vm791, %v792, %v793
    %v795 = vrot.slane %v429, 2
    %v796 = vsel %vm791, %v793, %v795
    %v797 = vrot.slane %v430, 2
    %v798 = vsel %vm791, %v795, %v797
    %v799 = vrot.slane %v431, 2
    %v800 = vsel %vm791, %v797, %v799
    %v801 = vrot.slane %v432, 2
    %v802 = vsel %vm791, %v799, %v801
    %v803 = vrot.slane %v433, 2
    %v804 = vsel %vm791, %v801, %v803
    %v805 = vrot.slane %v434, 2
    %v806 = vsel %vm791, %v803, %v805
    %v815 = vsel %vm791, %v805, 0.0
    %v816 = vadd.s32 %v532, 2
    %v817 = vadd.s32 %v533, 2
    %v818 = vadd.s32 %v534, 2
    %v819 = vadd.s32 %v535, 2
    %v820 = vadd.s32 %v536, 2
    %v821 = vadd.s32 %v537, 2
    %v822 = vadd.s32 %v538, 2
    %v823 = vadd.s32 %v539, 2
    %vm824 = vcmp.ge.s32.totalorder %v816, 0
    %vm825 = vcmp.ge.s32.totalorder %v817, 0
    %vm826 = vcmp.ge.s32.totalorder %v818, 0
    %vm827 = vcmp.ge.s32.totalorder %v819, 0
    %vm828 = vcmp.ge.s32.totalorder %v820, 0
    %vm829 = vcmp.ge.s32.totalorder %v821, 0
    %vm830 = vcmp.ge.s32.totalorder %v822, 0
    %vm831 = vcmp.ge.s32.totalorder %v823, 0
    %vm832 = vcmp.lt.s32.totalorder %v816, 32
    %vm833 = vcmp.lt.s32.totalorder %v817, 32
    %vm834 = vcmp.lt.s32.totalorder %v818, 32
    %vm835 = vcmp.lt.s32.totalorder %v819, 32
    %vm836 = vcmp.lt.s32.totalorder %v820, 32
    %vm837 = vcmp.lt.s32.totalorder %v821, 32
    %vm838 = vcmp.lt.s32.totalorder %v822, 32
    %vm839 = vcmp.lt.s32.totalorder %v823, 32
    %vm840 = vmand %vm824, %vm832
    %vm841 = vmand %vm825, %vm833
    %vm842 = vmand %vm826, %vm834
    %vm843 = vmand %vm827, %vm835
    %vm844 = vmand %vm828, %vm836
    %vm845 = vmand %vm829, %vm837
    %vm846 = vmand %vm830, %vm838
    %vm847 = vmand %vm831, %vm839
    %v848 = vsel %vm840, 1, 0
    %v849 = vsel %vm841, 1, 0
    %v850 = vsel %vm842, 1, 0
    %v851 = vsel %vm843, 1, 0
    %v852 = vsel %vm844, 1, 0
    %v853 = vsel %vm845, 1, 0
    %v854 = vsel %vm846, 1, 0
    %v855 = vsel %vm847, 1, 0
    %vm856 = vcmp.eq.s32.totalorder %v848, 1
    %vm857 = vcmp.eq.s32.totalorder %v849, 1
    %vm858 = vcmp.eq.s32.totalorder %v850, 1
    %vm859 = vcmp.eq.s32.totalorder %v851, 1
    %vm860 = vcmp.eq.s32.totalorder %v852, 1
    %vm861 = vcmp.eq.s32.totalorder %v853, 1
    %vm862 = vcmp.eq.s32.totalorder %v854, 1
    %vm863 = vcmp.eq.s32.totalorder %v855, 1
    %v864 = vsel %vm856, %v794, 0.0
    %v865 = vsel %vm857, %v796, 0.0
    %v866 = vsel %vm858, %v798, 0.0
    %v867 = vsel %vm859, %v800, 0.0
    %v868 = vsel %vm860, %v802, 0.0
    %v869 = vsel %vm861, %v804, 0.0
    %v870 = vsel %vm862, %v806, 0.0
    %v871 = vsel %vm863, %v815, 0.0
    %v872 = vpack.c.bf16 %v622, %v621
    %v873 = vpack.c.bf16 %v703, %v702
    %v874 = vpack.c.bf16 %v428, %v427
    %v875 = vpack.c.bf16 %v784, %v783
    %v876 = vpack.c.bf16 %v865, %v864
    %v877 = vpack.c.bf16 %v624, %v623
    %v878 = vpack.c.bf16 %v705, %v704
    %v879 = vpack.c.bf16 %v430, %v429
    %v880 = vpack.c.bf16 %v786, %v785
    %v881 = vpack.c.bf16 %v867, %v866
    %v882 = vpack.c.bf16 %v626, %v625
    %v883 = vpack.c.bf16 %v707, %v706
    %v884 = vpack.c.bf16 %v432, %v431
    %v885 = vpack.c.bf16 %v788, %v787
    %v886 = vpack.c.bf16 %v869, %v868
    %v887 = vpack.c.bf16 %v628, %v627
    %v888 = vpack.c.bf16 %v709, %v708
    %v889 = vpack.c.bf16 %v434, %v433
    %v890 = vpack.c.bf16 %v790, %v789
    %v891 = vpack.c.bf16 %v871, %v870
    %v892 = vld [vmem:[#allocation3] sm:$0xf]
    %v893 = vld [vmem:[#allocation3 + $0x4] sm:$0xf]
    %v894 = vld [vmem:[#allocation3 + $0x8] sm:$0xf]
    %v895 = vld [vmem:[#allocation3 + $0xc] sm:$0xf]
    %v896 = vld [vmem:[#allocation3 + $0x10] sm:$0xf]
    %v897 = vld [vmem:[#allocation3 + $0x14] sm:$0xf]
    %v898 = vld [vmem:[#allocation3 + $0x18] sm:$0xf]
    %v899 = vld [vmem:[#allocation3 + $0x1c] sm:$0xf]
    %v900 = vld [vmem:[#allocation3 + $0x20] sm:$0xf]
    %v901 = vld [vmem:[#allocation3 + $0x24] sm:$0xf]
    %v902 = vld [vmem:[#allocation3 + $0x28] sm:$0xf]
    %v903 = vld [vmem:[#allocation3 + $0x2c] sm:$0xf]
    %v904 = vld [vmem:[#allocation3 + $0x30] sm:$0xf]
    %v905 = vld [vmem:[#allocation3 + $0x34] sm:$0xf]
    %v906 = vld [vmem:[#allocation3 + $0x38] sm:$0xf]
    %v907 = vld [vmem:[#allocation3 + $0x3c] sm:$0xf]
    %v908 = vld [vmem:[#allocation3 + $0x40] sm:$0xf]
    %v909 = vld [vmem:[#allocation3 + $0x44] sm:$0xf]
    %v910 = vld [vmem:[#allocation3 + $0x48] sm:$0xf]
    %v911 = vld [vmem:[#allocation3 + $0x4c] sm:$0xf]
    %v912 = vld [vmem:[#allocation3 + $0x50] sm:$0xf]
    %v913 = vld [vmem:[#allocation3 + $0x54] sm:$0xf]
    %v914 = vld [vmem:[#allocation3 + $0x58] sm:$0xf]
    %v915 = vld [vmem:[#allocation3 + $0x5c] sm:$0xf]
    %v916 = vld [vmem:[#allocation3 + $0x60] sm:$0xf]
    %v917 = vld [vmem:[#allocation3 + $0x64] sm:$0xf]
    %v918 = vld [vmem:[#allocation3 + $0x68] sm:$0xf]
    %v919 = vld [vmem:[#allocation3 + $0x6c] sm:$0xf]
    %v920 = vld [vmem:[#allocation3 + $0x70] sm:$0xf]
    %v921 = vld [vmem:[#allocation3 + $0x74] sm:$0xf]
    %v922 = vld [vmem:[#allocation3 + $0x78] sm:$0xf]
    %v923 = vld [vmem:[#allocation3 + $0x7c] sm:$0xf]
    %v924 = vld [vmem:[#allocation3 + $0x80] sm:$0xf]
    %v925 = vld [vmem:[#allocation3 + $0x84] sm:$0xf]
    %v926 = vld [vmem:[#allocation3 + $0x88] sm:$0xf]
    %v927 = vld [vmem:[#allocation3 + $0x8c] sm:$0xf]
    %v928 = vld [vmem:[#allocation3 + $0x90] sm:$0xf]
    %v929 = vld [vmem:[#allocation3 + $0x94] sm:$0xf]
    %v930 = vld [vmem:[#allocation3 + $0x98] sm:$0xf]
    %v931 = vld [vmem:[#allocation3 + $0x9c] sm:$0xf]
    %v932 = vld [vmem:[#allocation3 + $0xa0] sm:$0xf]
    %v933 = vld [vmem:[#allocation3 + $0xa4] sm:$0xf]
    %v934 = vld [vmem:[#allocation3 + $0xa8] sm:$0xf]
    %v935 = vld [vmem:[#allocation3 + $0xac] sm:$0xf]
    %v936 = vld [vmem:[#allocation3 + $0xb0] sm:$0xf]
    %v937 = vld [vmem:[#allocation3 + $0xb4] sm:$0xf]
    %v938 = vld [vmem:[#allocation3 + $0xb8] sm:$0xf]
    %v939 = vld [vmem:[#allocation3 + $0xbc] sm:$0xf]
    %v940 = vld [vmem:[#allocation3 + $0xc0] sm:$0xf]
    %v941 = vld [vmem:[#allocation3 + $0xc4] sm:$0xf]
    %v942 = vld [vmem:[#allocation3 + $0xc8] sm:$0xf]
    %v943 = vld [vmem:[#allocation3 + $0xcc] sm:$0xf]
    %v944 = vld [vmem:[#allocation3 + $0xd0] sm:$0xf]
    %v945 = vld [vmem:[#allocation3 + $0xd4] sm:$0xf]
    %v946 = vld [vmem:[#allocation3 + $0xd8] sm:$0xf]
    %v947 = vld [vmem:[#allocation3 + $0xdc] sm:$0xf]
    %v948 = vld [vmem:[#allocation3 + $0xe0] sm:$0xf]
    %v949 = vld [vmem:[#allocation3 + $0xe4] sm:$0xf]
    %v950 = vld [vmem:[#allocation3 + $0xe8] sm:$0xf]
    %v951 = vld [vmem:[#allocation3 + $0xec] sm:$0xf]
    %v952 = vld [vmem:[#allocation3 + $0xf0] sm:$0xf]
    %v953 = vld [vmem:[#allocation3 + $0xf4] sm:$0xf]
    %v954 = vld [vmem:[#allocation3 + $0xf8] sm:$0xf]
    %v955 = vld [vmem:[#allocation3 + $0xfc] sm:$0xf]
    %v956 = vld [vmem:[#allocation3 + $0x100] sm:$0xf]
    %v957 = vld [vmem:[#allocation3 + $0x104] sm:$0xf]
    %v958 = vld [vmem:[#allocation3 + $0x108] sm:$0xf]
    %v959 = vld [vmem:[#allocation3 + $0x10c] sm:$0xf]
    %v960 = vld [vmem:[#allocation3 + $0x110] sm:$0xf]
    %v961 = vld [vmem:[#allocation3 + $0x114] sm:$0xf]
    %v962 = vld [vmem:[#allocation3 + $0x118] sm:$0xf]
    %v963 = vld [vmem:[#allocation3 + $0x11c] sm:$0xf]
    %v964 = vld [vmem:[#allocation3 + $0x120] sm:$0xf]
    %v965 = vld [vmem:[#allocation3 + $0x124] sm:$0xf]
    %v966 = vld [vmem:[#allocation3 + $0x128] sm:$0xf]
    %v967 = vld [vmem:[#allocation3 + $0x12c] sm:$0xf]
    %v968 = vld [vmem:[#allocation3 + $0x130] sm:$0xf]
    %v969 = vld [vmem:[#allocation3 + $0x134] sm:$0xf]
    %v970 = vld [vmem:[#allocation3 + $0x138] sm:$0xf]
    %v971 = vld [vmem:[#allocation3 + $0x13c] sm:$0xf]
    %v972 = vld [vmem:[%s7] sm:$0x1]
    %v974 = vperm.slane %v972, 0
    %v1056 = vunpack.c.l.b16 %v892
    %v1057 = vunpack.c.l.b16 %v893
    %v1058 = vunpack.c.l.b16 %v894
    %v1059 = vunpack.c.l.b16 %v895
    %v1060 = vunpack.c.l.b16 %v896
    %v1061 = vunpack.c.l.b16 %v897
    %v1062 = vunpack.c.l.b16 %v898
    %v1063 = vunpack.c.l.b16 %v899
    %v1064 = vunpack.c.l.b16 %v900
    %v1065 = vunpack.c.l.b16 %v901
    %v1066 = vunpack.c.l.b16 %v902
    %v1067 = vunpack.c.l.b16 %v903
    %v1068 = vunpack.c.l.b16 %v904
    %v1069 = vunpack.c.l.b16 %v905
    %v1070 = vunpack.c.l.b16 %v906
    %v1071 = vunpack.c.l.b16 %v907
    %v1072 = vunpack.c.l.b16 %v908
    %v1073 = vunpack.c.l.b16 %v909
    %v1074 = vunpack.c.l.b16 %v910
    %v1075 = vunpack.c.l.b16 %v911
    %v1076 = vunpack.c.l.b16 %v912
    %v1077 = vunpack.c.l.b16 %v913
    %v1078 = vunpack.c.l.b16 %v914
    %v1079 = vunpack.c.l.b16 %v915
    %v1080 = vunpack.c.l.b16 %v916
    %v1081 = vunpack.c.l.b16 %v917
    %v1082 = vunpack.c.l.b16 %v918
    %v1083 = vunpack.c.l.b16 %v919
    %v1084 = vunpack.c.l.b16 %v920
    %v1085 = vunpack.c.l.b16 %v921
    %v1086 = vunpack.c.l.b16 %v922
    %v1087 = vunpack.c.l.b16 %v923
    %v1088 = vunpack.c.l.b16 %v924
    %v1089 = vunpack.c.l.b16 %v925
    %v1090 = vunpack.c.l.b16 %v926
    %v1091 = vunpack.c.l.b16 %v927
    %v1092 = vunpack.c.l.b16 %v928
    %v1093 = vunpack.c.l.b16 %v929
    %v1094 = vunpack.c.l.b16 %v930
    %v1095 = vunpack.c.l.b16 %v931
    %v1096 = vunpack.c.l.b16 %v932
    %v1097 = vunpack.c.l.b16 %v933
    %v1098 = vunpack.c.l.b16 %v934
    %v1099 = vunpack.c.l.b16 %v935
    %v1100 = vunpack.c.l.b16 %v936
    %v1101 = vunpack.c.l.b16 %v937
    %v1102 = vunpack.c.l.b16 %v938
    %v1103 = vunpack.c.l.b16 %v939
    %v1104 = vunpack.c.l.b16 %v940
    %v1105 = vunpack.c.l.b16 %v941
    %v1106 = vunpack.c.l.b16 %v942
    %v1107 = vunpack.c.l.b16 %v943
    %v1108 = vunpack.c.l.b16 %v944
    %v1109 = vunpack.c.l.b16 %v945
    %v1110 = vunpack.c.l.b16 %v946
    %v1111 = vunpack.c.l.b16 %v947
    %v1112 = vunpack.c.l.b16 %v948
    %v1113 = vunpack.c.l.b16 %v949
    %v1114 = vunpack.c.l.b16 %v950
    %v1115 = vunpack.c.l.b16 %v951
    %v1116 = vunpack.c.l.b16 %v952
    %v1117 = vunpack.c.l.b16 %v953
    %v1118 = vunpack.c.l.b16 %v954
    %v1119 = vunpack.c.l.b16 %v955
    %v1120 = vunpack.c.l.b16 %v956
    %v1121 = vunpack.c.l.b16 %v957
    %v1122 = vunpack.c.l.b16 %v958
    %v1123 = vunpack.c.l.b16 %v959
    %v1124 = vunpack.c.l.b16 %v960
    %v1125 = vunpack.c.l.b16 %v961
    %v1126 = vunpack.c.l.b16 %v962
    %v1127 = vunpack.c.l.b16 %v963
    %v1128 = vunpack.c.l.b16 %v964
    %v1129 = vunpack.c.l.b16 %v965
    %v1130 = vunpack.c.l.b16 %v966
    %v1131 = vunpack.c.l.b16 %v967
    %v1132 = vunpack.c.l.b16 %v968
    %v1133 = vunpack.c.l.b16 %v969
    %v1134 = vunpack.c.l.b16 %v970
    %v1135 = vunpack.c.l.b16 %v971
    %v1136 = vpack.c.b16 %v1057, %v1056
    %v1137 = vpack.c.b16 %v1059, %v1058
    %v1138 = vpack.c.b16 %v1061, %v1060
    %v1139 = vpack.c.b16 %v1063, %v1062
    %v1140 = vpack.c.b16 %v1065, %v1064
    %v1141 = vpack.c.b16 %v1067, %v1066
    %v1142 = vpack.c.b16 %v1069, %v1068
    %v1143 = vpack.c.b16 %v1071, %v1070
    %v1144 = vpack.c.b16 %v1073, %v1072
    %v1145 = vpack.c.b16 %v1075, %v1074
    %v1146 = vpack.c.b16 %v1077, %v1076
    %v1147 = vpack.c.b16 %v1079, %v1078
    %v1148 = vpack.c.b16 %v1081, %v1080
    %v1149 = vpack.c.b16 %v1083, %v1082
    %v1150 = vpack.c.b16 %v1085, %v1084
    %v1151 = vpack.c.b16 %v1087, %v1086
    %v1152 = vpack.c.b16 %v1089, %v1088
    %v1153 = vpack.c.b16 %v1091, %v1090
    %v1154 = vpack.c.b16 %v1093, %v1092
    %v1155 = vpack.c.b16 %v1095, %v1094
    %v1156 = vpack.c.b16 %v1097, %v1096
    %v1157 = vpack.c.b16 %v1099, %v1098
    %v1158 = vpack.c.b16 %v1101, %v1100
    %v1159 = vpack.c.b16 %v1103, %v1102
    %v1160 = vpack.c.b16 %v1105, %v1104
    %v1161 = vpack.c.b16 %v1107, %v1106
    %v1162 = vpack.c.b16 %v1109, %v1108
    %v1163 = vpack.c.b16 %v1111, %v1110
    %v1164 = vpack.c.b16 %v1113, %v1112
    %v1165 = vpack.c.b16 %v1115, %v1114
    %v1166 = vpack.c.b16 %v1117, %v1116
    %v1167 = vpack.c.b16 %v1119, %v1118
    %v1168 = vpack.c.b16 %v1121, %v1120
    %v1169 = vpack.c.b16 %v1123, %v1122
    %v1170 = vpack.c.b16 %v1125, %v1124
    %v1171 = vpack.c.b16 %v1127, %v1126
    %v1172 = vpack.c.b16 %v1129, %v1128
    %v1173 = vpack.c.b16 %v1131, %v1130
    %v1174 = vpack.c.b16 %v1133, %v1132
    %v1175 = vpack.c.b16 %v1135, %v1134
    %1216 = vmatpush.bf16.msra.mxu0 %v1143
    %1217 = vmatpush.bf16.msra.mxu0 %v1142
    %1218 = vmatpush.bf16.msra.mxu0 %v1141
    %1219 = vmatpush.bf16.msra.mxu0 %v1140
    %1220 = vmatpush.bf16.msra.mxu0 %v1139
    %1221 = vmatpush.bf16.msra.mxu0 %v1138
    %1222 = vmatpush.bf16.msra.mxu0 %v1137
    %1223 = vmatpush.bf16.msra.mxu0 %v1136
    %1224 = vmatmul.bf16.gmra.mxu0 %v872
    %v1225 = vpop.f32.mrf.mxu0
    %v1226 = vadd.f32 %v974, %v1225
    %v1227 = vpop.f32.mrf.mxu0
    %v1228 = vadd.f32 %v974, %v1227
    %1229 = vmatmul.bf16.gmra.mxu0 %v877
    %v1230 = vpop.f32.mrf.mxu0
    %v1231 = vadd.f32 %v974, %v1230
    %v1232 = vpop.f32.mrf.mxu0
    %v1233 = vadd.f32 %v974, %v1232
    %1234 = vmatmul.bf16.gmra.mxu0 %v882
    %v1235 = vpop.f32.mrf.mxu0
    %v1236 = vadd.f32 %v974, %v1235
    %v1237 = vpop.f32.mrf.mxu0
    %v1238 = vadd.f32 %v974, %v1237
    %1239 = vmatmul.bf16.gmra.mxu0 %v887
    %v1240 = vpop.f32.mrf.mxu0
    %v1241 = vadd.f32 %v974, %v1240
    %v1242 = vpop.f32.mrf.mxu0
    %v1243 = vadd.f32 %v974, %v1242
    %1244 = vdwg.mxu0
    %1245 = vmatpush.bf16.msra.mxu0 %v1151
    %1246 = vmatpush.bf16.msra.mxu0 %v1150
    %1247 = vmatpush.bf16.msra.mxu0 %v1149
    %1248 = vmatpush.bf16.msra.mxu0 %v1148
    %1249 = vmatpush.bf16.msra.mxu0 %v1147
    %1250 = vmatpush.bf16.msra.mxu0 %v1146
    %1251 = vmatpush.bf16.msra.mxu0 %v1145
    %1252 = vmatpush.bf16.msra.mxu0 %v1144
    %1253 = vmatmul.bf16.gmra.mxu0 %v873
    %v1254 = vpop.f32.mrf.mxu0
    %v1255 = vadd.f32 %v1226, %v1254
    %v1256 = vpop.f32.mrf.mxu0
    %v1257 = vadd.f32 %v1228, %v1256
    %1258 = vmatmul.bf16.gmra.mxu0 %v878
    %v1259 = vpop.f32.mrf.mxu0
    %v1260 = vadd.f32 %v1231, %v1259
    %v1261 = vpop.f32.mrf.mxu0
    %v1262 = vadd.f32 %v1233, %v1261
    %1263 = vmatmul.bf16.gmra.mxu0 %v883
    %v1264 = vpop.f32.mrf.mxu0
    %v1265 = vadd.f32 %v1236, %v1264
    %v1266 = vpop.f32.mrf.mxu0
    %v1267 = vadd.f32 %v1238, %v1266
    %1268 = vmatmul.bf16.gmra.mxu0 %v888
    %v1269 = vpop.f32.mrf.mxu0
    %v1270 = vadd.f32 %v1241, %v1269
    %v1271 = vpop.f32.mrf.mxu0
    %v1272 = vadd.f32 %v1243, %v1271
    %1273 = vdwg.mxu0
    %1274 = vmatpush.bf16.msra.mxu0 %v1159
    %1275 = vmatpush.bf16.msra.mxu0 %v1158
    %1276 = vmatpush.bf16.msra.mxu0 %v1157
    %1277 = vmatpush.bf16.msra.mxu0 %v1156
    %1278 = vmatpush.bf16.msra.mxu0 %v1155
    %1279 = vmatpush.bf16.msra.mxu0 %v1154
    %1280 = vmatpush.bf16.msra.mxu0 %v1153
    %1281 = vmatpush.bf16.msra.mxu0 %v1152
    %1282 = vmatmul.bf16.gmra.mxu0 %v874
    %v1283 = vpop.f32.mrf.mxu0
    %v1284 = vadd.f32 %v1255, %v1283
    %v1285 = vpop.f32.mrf.mxu0
    %v1286 = vadd.f32 %v1257, %v1285
    %1287 = vmatmul.bf16.gmra.mxu0 %v879
    %v1288 = vpop.f32.mrf.mxu0
    %v1289 = vadd.f32 %v1260, %v1288
    %v1290 = vpop.f32.mrf.mxu0
    %v1291 = vadd.f32 %v1262, %v1290
    %1292 = vmatmul.bf16.gmra.mxu0 %v884
    %v1293 = vpop.f32.mrf.mxu0
    %v1294 = vadd.f32 %v1265, %v1293
    %v1295 = vpop.f32.mrf.mxu0
    %v1296 = vadd.f32 %v1267, %v1295
    %1297 = vmatmul.bf16.gmra.mxu0 %v889
    %v1298 = vpop.f32.mrf.mxu0
    %v1299 = vadd.f32 %v1270, %v1298
    %v1300 = vpop.f32.mrf.mxu0
    %v1301 = vadd.f32 %v1272, %v1300
    %1302 = vdwg.mxu0
    %1303 = vmatpush.bf16.msra.mxu0 %v1167
    %1304 = vmatpush.bf16.msra.mxu0 %v1166
    %1305 = vmatpush.bf16.msra.mxu0 %v1165
    %1306 = vmatpush.bf16.msra.mxu0 %v1164
    %1307 = vmatpush.bf16.msra.mxu0 %v1163
    %1308 = vmatpush.bf16.msra.mxu0 %v1162
    %1309 = vmatpush.bf16.msra.mxu0 %v1161
    %1310 = vmatpush.bf16.msra.mxu0 %v1160
    %1311 = vmatmul.bf16.gmra.mxu0 %v875
    %v1312 = vpop.f32.mrf.mxu0
    %v1313 = vadd.f32 %v1284, %v1312
    %v1314 = vpop.f32.mrf.mxu0
    %v1315 = vadd.f32 %v1286, %v1314
    %1316 = vmatmul.bf16.gmra.mxu0 %v880
    %v1317 = vpop.f32.mrf.mxu0
    %v1318 = vadd.f32 %v1289, %v1317
    %v1319 = vpop.f32.mrf.mxu0
    %v1320 = vadd.f32 %v1291, %v1319
    %1321 = vmatmul.bf16.gmra.mxu0 %v885
    %v1322 = vpop.f32.mrf.mxu0
    %v1323 = vadd.f32 %v1294, %v1322
    %v1324 = vpop.f32.mrf.mxu0
    %v1325 = vadd.f32 %v1296, %v1324
    %1326 = vmatmul.bf16.gmra.mxu0 %v890
    %v1327 = vpop.f32.mrf.mxu0
    %v1328 = vadd.f32 %v1299, %v1327
    %v1329 = vpop.f32.mrf.mxu0
    %v1330 = vadd.f32 %v1301, %v1329
    %1331 = vdwg.mxu0
    %1332 = vmatpush.bf16.msra.mxu0 %v1175
    %1333 = vmatpush.bf16.msra.mxu0 %v1174
    %1334 = vmatpush.bf16.msra.mxu0 %v1173
    %1335 = vmatpush.bf16.msra.mxu0 %v1172
    %1336 = vmatpush.bf16.msra.mxu0 %v1171
    %1337 = vmatpush.bf16.msra.mxu0 %v1170
    %1338 = vmatpush.bf16.msra.mxu0 %v1169
    %1339 = vmatpush.bf16.msra.mxu0 %v1168
    %1340 = vmatmul.bf16.gmra.mxu0 %v876
    %v1341 = vpop.f32.mrf.mxu0
    %v1342 = vadd.f32 %v1313, %v1341
    %v1343 = vpop.f32.mrf.mxu0
    %v1344 = vadd.f32 %v1315, %v1343
    %1345 = vmatmul.bf16.gmra.mxu0 %v881
    %v1346 = vpop.f32.mrf.mxu0
    %v1347 = vadd.f32 %v1318, %v1346
    %v1348 = vpop.f32.mrf.mxu0
    %v1349 = vadd.f32 %v1320, %v1348
    %1350 = vmatmul.bf16.gmra.mxu0 %v886
    %v1351 = vpop.f32.mrf.mxu0
    %v1352 = vadd.f32 %v1323, %v1351
    %v1353 = vpop.f32.mrf.mxu0
    %v1354 = vadd.f32 %v1325, %v1353
    %1355 = vmatmul.bf16.gmra.mxu0 %v891
    %v1356 = vpop.f32.mrf.mxu0
    %v1357 = vadd.f32 %v1328, %v1356
    %v1358 = vpop.f32.mrf.mxu0
    %v1359 = vadd.f32 %v1330, %v1358
    %1360 = vdwg.mxu0
    %v1361 = vmax.f32 %v1342, 0.0
    %v1362 = vmax.f32 %v1344, 0.0
    %v1363 = vmax.f32 %v1347, 0.0
    %v1364 = vmax.f32 %v1349, 0.0
    %v1365 = vmax.f32 %v1352, 0.0
    %v1366 = vmax.f32 %v1354, 0.0
    %v1367 = vmax.f32 %v1357, 0.0
    %v1368 = vmax.f32 %v1359, 0.0
    %1369 = vst [vmem:[#allocation2] sm:$0xff] %v1361
    %1370 = vst [vmem:[#allocation2 + $0x8] sm:$0xff] %v1362
    %1371 = vst [vmem:[#allocation2 + $0x10] sm:$0xff] %v1363
    %1372 = vst [vmem:[#allocation2 + $0x18] sm:$0xff] %v1364
    %1373 = vst [vmem:[#allocation2 + $0x20] sm:$0xff] %v1365
    %1374 = vst [vmem:[#allocation2 + $0x28] sm:$0xff] %v1366
    %1375 = vst [vmem:[#allocation2 + $0x30] sm:$0xff] %v1367
    %1376 = vst [vmem:[#allocation2 + $0x38] sm:$0xff] %v1368
    %v1377 = vld [vmem:[#allocation2] ss:$2 sm:$0xff]
    %s1378 = scalar_lea.vmem [#allocation2], 16
    %v1379 = vld [vmem:[%s1378] ss:$2 sm:$0xff]
    %s1380 = scalar_lea.vmem [#allocation2], 32
    %v1381 = vld [vmem:[%s1380] ss:$2 sm:$0xff]
    %s1382 = scalar_lea.vmem [#allocation2], 48
    %v1383 = vld [vmem:[%s1382] ss:$2 sm:$0xff]
    %s1384 = scalar_lea.vmem [#allocation2], 1
    %v1385 = vld [vmem:[%s1384] ss:$2 sm:$0xff]
    %s1386 = scalar_lea.vmem [#allocation2], 17
    %v1387 = vld [vmem:[%s1386] ss:$2 sm:$0xff]
    %s1388 = scalar_lea.vmem [#allocation2], 33
    %v1389 = vld [vmem:[%s1388] ss:$2 sm:$0xff]
    %s1390 = scalar_lea.vmem [#allocation2], 49
    %v1391 = vld [vmem:[%s1390] ss:$2 sm:$0xff]
    %v1392 = vmax.f32 %v1377, %v1385
    %v1393 = vmax.f32 %v1379, %v1387
    %v1394 = vmax.f32 %v1381, %v1389
    %v1395 = vmax.f32 %v1383, %v1391
    %vm1396 = vcmp.lt.s32.totalorder %v436, 0
    %v1397 = vsub.s32 0, %v436
    %v1398 = vsel %vm1396, %v1397, %v436
    %v1399 = vshrl.u32 %v1398, 4
    %v1400 = vand.u32 %v1398, 15
    %v1401 = vsub.s32 0, %v1400
    %v1402 = vsel %vm1396, %v1401, %v1400
    %vm1403 = vcmp.lt.s32.totalorder %v437, 0
    %v1404 = vsub.s32 0, %v437
    %v1405 = vsel %vm1403, %v1404, %v437
    %v1406 = vshrl.u32 %v1405, 4
    %v1407 = vand.u32 %v1405, 15
    %v1408 = vsub.s32 0, %v1407
    %v1409 = vsel %vm1403, %v1408, %v1407
    %vm1410 = vcmp.lt.s32.totalorder %v438, 0
    %v1411 = vsub.s32 0, %v438
    %v1412 = vsel %vm1410, %v1411, %v438
    %v1413 = vshrl.u32 %v1412, 4
    %v1414 = vand.u32 %v1412, 15
    %v1415 = vsub.s32 0, %v1414
    %v1416 = vsel %vm1410, %v1415, %v1414
    %vm1417 = vcmp.lt.s32.totalorder %v439, 0
    %v1418 = vsub.s32 0, %v439
    %v1419 = vsel %vm1417, %v1418, %v439
    %v1420 = vshrl.u32 %v1419, 4
    %v1421 = vand.u32 %v1419, 15
    %v1422 = vsub.s32 0, %v1421
    %v1423 = vsel %vm1417, %v1422, %v1421
    %vm1424 = vcmp.ne.s32.totalorder %v1402, 0
    %vm1425 = vcmp.ne.s32.totalorder %v1409, 0
    %vm1426 = vcmp.ne.s32.totalorder %v1416, 0
    %vm1427 = vcmp.ne.s32.totalorder %v1423, 0
    %vm1428 = vcmp.lt.s32.totalorder %v1402, 0
    %vm1429 = vcmp.lt.s32.totalorder %v1409, 0
    %vm1430 = vcmp.lt.s32.totalorder %v1416, 0
    %vm1431 = vcmp.lt.s32.totalorder %v1423, 0
    %vm1432 = vmand %vm1428, %vm1424
    %vm1433 = vmand %vm1429, %vm1425
    %vm1434 = vmand %vm1430, %vm1426
    %vm1435 = vmand %vm1431, %vm1427
    %v1436 = vadd.s32 %v1402, 16
    %v1437 = vadd.s32 %v1409, 16
    %v1438 = vadd.s32 %v1416, 16
    %v1439 = vadd.s32 %v1423, 16
    %v1440 = vsel %vm1432, %v1436, %v1402
    %v1441 = vsel %vm1433, %v1437, %v1409
    %v1442 = vsel %vm1434, %v1438, %v1416
    %v1443 = vsel %vm1435, %v1439, %v1423
    %v1448 = vrot.slane %v1392, 7
    %v1449 = vrot.slane %v1393, 7
    %v1450 = vsel %vm629, %v1448, %v1449
    %v1451 = vrot.slane %v1394, 7
    %v1452 = vsel %vm629, %v1449, %v1451
    %v1453 = vrot.slane %v1395, 7
    %v1454 = vsel %vm629, %v1451, %v1453
    %v1459 = vsel %vm629, 0.0, %v1448
    %v1460 = vadd.s32 %v1440, 4294967295
    %v1461 = vadd.s32 %v1441, 4294967295
    %v1462 = vadd.s32 %v1442, 4294967295
    %v1463 = vadd.s32 %v1443, 4294967295
    %vm1464 = vcmp.ge.s32.totalorder %v1460, 0
    %vm1465 = vcmp.ge.s32.totalorder %v1461, 0
    %vm1466 = vcmp.ge.s32.totalorder %v1462, 0
    %vm1467 = vcmp.ge.s32.totalorder %v1463, 0
    %vm1468 = vcmp.lt.s32.totalorder %v1460, 16
    %vm1469 = vcmp.lt.s32.totalorder %v1461, 16
    %vm1470 = vcmp.lt.s32.totalorder %v1462, 16
    %vm1471 = vcmp.lt.s32.totalorder %v1463, 16
    %vm1472 = vmand %vm1464, %vm1468
    %vm1473 = vmand %vm1465, %vm1469
    %vm1474 = vmand %vm1466, %vm1470
    %vm1475 = vmand %vm1467, %vm1471
    %v1476 = vsel %vm1472, 1, 0
    %v1477 = vsel %vm1473, 1, 0
    %v1478 = vsel %vm1474, 1, 0
    %v1479 = vsel %vm1475, 1, 0
    %vm1480 = vcmp.eq.s32.totalorder %v1476, 1
    %vm1481 = vcmp.eq.s32.totalorder %v1477, 1
    %vm1482 = vcmp.eq.s32.totalorder %v1478, 1
    %vm1483 = vcmp.eq.s32.totalorder %v1479, 1
    %v1484 = vsel %vm1480, %v1459, 0.0
    %v1485 = vsel %vm1481, %v1450, 0.0
    %v1486 = vsel %vm1482, %v1452, 0.0
    %v1487 = vsel %vm1483, %v1454, 0.0
    %v1488 = vrot.slane %v1392, 1
    %v1489 = vrot.slane %v1393, 1
    %v1490 = vsel %vm710, %v1488, %v1489
    %v1491 = vrot.slane %v1394, 1
    %v1492 = vsel %vm710, %v1489, %v1491
    %v1493 = vrot.slane %v1395, 1
    %v1494 = vsel %vm710, %v1491, %v1493
    %v1499 = vsel %vm710, %v1493, 0.0
    %v1500 = vadd.s32 %v1440, 1
    %v1501 = vadd.s32 %v1441, 1
    %v1502 = vadd.s32 %v1442, 1
    %v1503 = vadd.s32 %v1443, 1
    %vm1504 = vcmp.ge.s32.totalorder %v1500, 0
    %vm1505 = vcmp.ge.s32.totalorder %v1501, 0
    %vm1506 = vcmp.ge.s32.totalorder %v1502, 0
    %vm1507 = vcmp.ge.s32.totalorder %v1503, 0
    %vm1508 = vcmp.lt.s32.totalorder %v1500, 16
    %vm1509 = vcmp.lt.s32.totalorder %v1501, 16
    %vm1510 = vcmp.lt.s32.totalorder %v1502, 16
    %vm1511 = vcmp.lt.s32.totalorder %v1503, 16
    %vm1512 = vmand %vm1504, %vm1508
    %vm1513 = vmand %vm1505, %vm1509
    %vm1514 = vmand %vm1506, %vm1510
    %vm1515 = vmand %vm1507, %vm1511
    %v1516 = vsel %vm1512, 1, 0
    %v1517 = vsel %vm1513, 1, 0
    %v1518 = vsel %vm1514, 1, 0
    %v1519 = vsel %vm1515, 1, 0
    %vm1520 = vcmp.eq.s32.totalorder %v1516, 1
    %vm1521 = vcmp.eq.s32.totalorder %v1517, 1
    %vm1522 = vcmp.eq.s32.totalorder %v1518, 1
    %vm1523 = vcmp.eq.s32.totalorder %v1519, 1
    %v1524 = vsel %vm1520, %v1490, 0.0
    %v1525 = vsel %vm1521, %v1492, 0.0
    %v1526 = vsel %vm1522, %v1494, 0.0
    %v1527 = vsel %vm1523, %v1499, 0.0
    %v1528 = vpack.c.bf16 %v1485, %v1484
    %v1529 = vpack.c.bf16 %v1393, %v1392
    %v1530 = vpack.c.bf16 %v1525, %v1524
    %v1531 = vpack.c.bf16 %v1487, %v1486
    %v1532 = vpack.c.bf16 %v1395, %v1394
    %v1533 = vpack.c.bf16 %v1527, %v1526
    %v1534 = vld [vmem:[%s9] sm:$0xf]
    %v1535 = vld [vmem:[%s9 + $0x4] sm:$0xf]
    %v1536 = vld [vmem:[%s9 + $0x8] sm:$0xf]
    %v1537 = vld [vmem:[%s9 + $0xc] sm:$0xf]
    %v1538 = vld [vmem:[%s9 + $0x10] sm:$0xf]
    %v1539 = vld [vmem:[%s9 + $0x14] sm:$0xf]
    %v1540 = vld [vmem:[%s9 + $0x18] sm:$0xf]
    %v1541 = vld [vmem:[%s9 + $0x1c] sm:$0xf]
    %v1542 = vld [vmem:[%s9 + $0x20] sm:$0xf]
    %v1543 = vld [vmem:[%s9 + $0x24] sm:$0xf]
    %v1544 = vld [vmem:[%s9 + $0x28] sm:$0xf]
    %v1545 = vld [vmem:[%s9 + $0x2c] sm:$0xf]
    %v1546 = vld [vmem:[%s9 + $0x30] sm:$0xf]
    %v1547 = vld [vmem:[%s9 + $0x34] sm:$0xf]
    %v1548 = vld [vmem:[%s9 + $0x38] sm:$0xf]
    %v1549 = vld [vmem:[%s9 + $0x3c] sm:$0xf]
    %v1550 = vld [vmem:[%s9 + $0x40] sm:$0xf]
    %v1551 = vld [vmem:[%s9 + $0x44] sm:$0xf]
    %v1552 = vld [vmem:[%s9 + $0x48] sm:$0xf]
    %v1553 = vld [vmem:[%s9 + $0x4c] sm:$0xf]
    %v1554 = vld [vmem:[%s9 + $0x50] sm:$0xf]
    %v1555 = vld [vmem:[%s9 + $0x54] sm:$0xf]
    %v1556 = vld [vmem:[%s9 + $0x58] sm:$0xf]
    %v1557 = vld [vmem:[%s9 + $0x5c] sm:$0xf]
    %v1558 = vld [vmem:[%s9 + $0x60] sm:$0xf]
    %v1559 = vld [vmem:[%s9 + $0x64] sm:$0xf]
    %v1560 = vld [vmem:[%s9 + $0x68] sm:$0xf]
    %v1561 = vld [vmem:[%s9 + $0x6c] sm:$0xf]
    %v1562 = vld [vmem:[%s9 + $0x70] sm:$0xf]
    %v1563 = vld [vmem:[%s9 + $0x74] sm:$0xf]
    %v1564 = vld [vmem:[%s9 + $0x78] sm:$0xf]
    %v1565 = vld [vmem:[%s9 + $0x7c] sm:$0xf]
    %v1566 = vld [vmem:[%s9 + $0x80] sm:$0xf]
    %v1567 = vld [vmem:[%s9 + $0x84] sm:$0xf]
    %v1568 = vld [vmem:[%s9 + $0x88] sm:$0xf]
    %v1569 = vld [vmem:[%s9 + $0x8c] sm:$0xf]
    %v1570 = vld [vmem:[%s9 + $0x90] sm:$0xf]
    %v1571 = vld [vmem:[%s9 + $0x94] sm:$0xf]
    %v1572 = vld [vmem:[%s9 + $0x98] sm:$0xf]
    %v1573 = vld [vmem:[%s9 + $0x9c] sm:$0xf]
    %v1574 = vld [vmem:[%s9 + $0xa0] sm:$0xf]
    %v1575 = vld [vmem:[%s9 + $0xa4] sm:$0xf]
    %v1576 = vld [vmem:[%s9 + $0xa8] sm:$0xf]
    %v1577 = vld [vmem:[%s9 + $0xac] sm:$0xf]
    %v1578 = vld [vmem:[%s9 + $0xb0] sm:$0xf]
    %v1579 = vld [vmem:[%s9 + $0xb4] sm:$0xf]
    %v1580 = vld [vmem:[%s9 + $0xb8] sm:$0xf]
    %v1581 = vld [vmem:[%s9 + $0xbc] sm:$0xf]
    %v1582 = vld [vmem:[%s11] sm:$0x1]
    %v1584 = vperm.slane %v1582, 0
    %v1634 = vunpack.c.l.b16 %v1534
    %v1635 = vunpack.c.l.b16 %v1535
    %v1636 = vunpack.c.l.b16 %v1536
    %v1637 = vunpack.c.l.b16 %v1537
    %v1638 = vunpack.c.l.b16 %v1538
    %v1639 = vunpack.c.l.b16 %v1539
    %v1640 = vunpack.c.l.b16 %v1540
    %v1641 = vunpack.c.l.b16 %v1541
    %v1642 = vunpack.c.l.b16 %v1542
    %v1643 = vunpack.c.l.b16 %v1543
    %v1644 = vunpack.c.l.b16 %v1544
    %v1645 = vunpack.c.l.b16 %v1545
    %v1646 = vunpack.c.l.b16 %v1546
    %v1647 = vunpack.c.l.b16 %v1547
    %v1648 = vunpack.c.l.b16 %v1548
    %v1649 = vunpack.c.l.b16 %v1549
    %v1650 = vunpack.c.l.b16 %v1550
    %v1651 = vunpack.c.l.b16 %v1551
    %v1652 = vunpack.c.l.b16 %v1552
    %v1653 = vunpack.c.l.b16 %v1553
    %v1654 = vunpack.c.l.b16 %v1554
    %v1655 = vunpack.c.l.b16 %v1555
    %v1656 = vunpack.c.l.b16 %v1556
    %v1657 = vunpack.c.l.b16 %v1557
    %v1658 = vunpack.c.l.b16 %v1558
    %v1659 = vunpack.c.l.b16 %v1559
    %v1660 = vunpack.c.l.b16 %v1560
    %v1661 = vunpack.c.l.b16 %v1561
    %v1662 = vunpack.c.l.b16 %v1562
    %v1663 = vunpack.c.l.b16 %v1563
    %v1664 = vunpack.c.l.b16 %v1564
    %v1665 = vunpack.c.l.b16 %v1565
    %v1666 = vunpack.c.l.b16 %v1566
    %v1667 = vunpack.c.l.b16 %v1567
    %v1668 = vunpack.c.l.b16 %v1568
    %v1669 = vunpack.c.l.b16 %v1569
    %v1670 = vunpack.c.l.b16 %v1570
    %v1671 = vunpack.c.l.b16 %v1571
    %v1672 = vunpack.c.l.b16 %v1572
    %v1673 = vunpack.c.l.b16 %v1573
    %v1674 = vunpack.c.l.b16 %v1574
    %v1675 = vunpack.c.l.b16 %v1575
    %v1676 = vunpack.c.l.b16 %v1576
    %v1677 = vunpack.c.l.b16 %v1577
    %v1678 = vunpack.c.l.b16 %v1578
    %v1679 = vunpack.c.l.b16 %v1579
    %v1680 = vunpack.c.l.b16 %v1580
    %v1681 = vunpack.c.l.b16 %v1581
    %v1682 = vpack.c.b16 %v1635, %v1634
    %v1683 = vpack.c.b16 %v1637, %v1636
    %v1684 = vpack.c.b16 %v1639, %v1638
    %v1685 = vpack.c.b16 %v1641, %v1640
    %v1686 = vpack.c.b16 %v1643, %v1642
    %v1687 = vpack.c.b16 %v1645, %v1644
    %v1688 = vpack.c.b16 %v1647, %v1646
    %v1689 = vpack.c.b16 %v1649, %v1648
    %v1690 = vpack.c.b16 %v1651, %v1650
    %v1691 = vpack.c.b16 %v1653, %v1652
    %v1692 = vpack.c.b16 %v1655, %v1654
    %v1693 = vpack.c.b16 %v1657, %v1656
    %v1694 = vpack.c.b16 %v1659, %v1658
    %v1695 = vpack.c.b16 %v1661, %v1660
    %v1696 = vpack.c.b16 %v1663, %v1662
    %v1697 = vpack.c.b16 %v1665, %v1664
    %v1698 = vpack.c.b16 %v1667, %v1666
    %v1699 = vpack.c.b16 %v1669, %v1668
    %v1700 = vpack.c.b16 %v1671, %v1670
    %v1701 = vpack.c.b16 %v1673, %v1672
    %v1702 = vpack.c.b16 %v1675, %v1674
    %v1703 = vpack.c.b16 %v1677, %v1676
    %v1704 = vpack.c.b16 %v1679, %v1678
    %v1705 = vpack.c.b16 %v1681, %v1680
    %1730 = vmatpush.bf16.msra.mxu0 %v1689
    %1731 = vmatpush.bf16.msra.mxu0 %v1688
    %1732 = vmatpush.bf16.msra.mxu0 %v1687
    %1733 = vmatpush.bf16.msra.mxu0 %v1686
    %1734 = vmatpush.bf16.msra.mxu0 %v1685
    %1735 = vmatpush.bf16.msra.mxu0 %v1684
    %1736 = vmatpush.bf16.msra.mxu0 %v1683
    %1737 = vmatpush.bf16.msra.mxu0 %v1682
    %1738 = vmatmul.bf16.gmra.mxu0 %v1528
    %v1739 = vpop.f32.mrf.mxu0
    %v1740 = vadd.f32 %v1584, %v1739
    %v1741 = vpop.f32.mrf.mxu0
    %v1742 = vadd.f32 %v1584, %v1741
    %1743 = vmatmul.bf16.gmra.mxu0 %v1531
    %v1744 = vpop.f32.mrf.mxu0
    %v1745 = vadd.f32 %v1584, %v1744
    %v1746 = vpop.f32.mrf.mxu0
    %v1747 = vadd.f32 %v1584, %v1746
    %1748 = vdwg.mxu0
    %1749 = vmatpush.bf16.msra.mxu0 %v1697
    %1750 = vmatpush.bf16.msra.mxu0 %v1696
    %1751 = vmatpush.bf16.msra.mxu0 %v1695
    %1752 = vmatpush.bf16.msra.mxu0 %v1694
    %1753 = vmatpush.bf16.msra.mxu0 %v1693
    %1754 = vmatpush.bf16.msra.mxu0 %v1692
    %1755 = vmatpush.bf16.msra.mxu0 %v1691
    %1756 = vmatpush.bf16.msra.mxu0 %v1690
    %1757 = vmatmul.bf16.gmra.mxu0 %v1529
    %v1758 = vpop.f32.mrf.mxu0
    %v1759 = vadd.f32 %v1740, %v1758
    %v1760 = vpop.f32.mrf.mxu0
    %v1761 = vadd.f32 %v1742, %v1760
    %1762 = vmatmul.bf16.gmra.mxu0 %v1532
    %v1763 = vpop.f32.mrf.mxu0
    %v1764 = vadd.f32 %v1745, %v1763
    %v1765 = vpop.f32.mrf.mxu0
    %v1766 = vadd.f32 %v1747, %v1765
    %1767 = vdwg.mxu0
    %1768 = vmatpush.bf16.msra.mxu0 %v1705
    %1769 = vmatpush.bf16.msra.mxu0 %v1704
    %1770 = vmatpush.bf16.msra.mxu0 %v1703
    %1771 = vmatpush.bf16.msra.mxu0 %v1702
    %1772 = vmatpush.bf16.msra.mxu0 %v1701
    %1773 = vmatpush.bf16.msra.mxu0 %v1700
    %1774 = vmatpush.bf16.msra.mxu0 %v1699
    %1775 = vmatpush.bf16.msra.mxu0 %v1698
    %1776 = vmatmul.bf16.gmra.mxu0 %v1530
    %v1777 = vpop.f32.mrf.mxu0
    %v1778 = vadd.f32 %v1759, %v1777
    %v1779 = vpop.f32.mrf.mxu0
    %v1780 = vadd.f32 %v1761, %v1779
    %1781 = vmatmul.bf16.gmra.mxu0 %v1533
    %v1782 = vpop.f32.mrf.mxu0
    %v1783 = vadd.f32 %v1764, %v1782
    %v1784 = vpop.f32.mrf.mxu0
    %v1785 = vadd.f32 %v1766, %v1784
    %1786 = vdwg.mxu0
    %v1787 = vmax.f32 %v1778, 0.0
    %v1788 = vmax.f32 %v1780, 0.0
    %v1789 = vmax.f32 %v1783, 0.0
    %v1790 = vmax.f32 %v1785, 0.0
    %v1795 = vrot.slane %v1787, 7
    %v1796 = vrot.slane %v1788, 7
    %v1797 = vsel %vm629, %v1795, %v1796
    %v1798 = vrot.slane %v1789, 7
    %v1799 = vsel %vm629, %v1796, %v1798
    %v1800 = vrot.slane %v1790, 7
    %v1801 = vsel %vm629, %v1798, %v1800
    %v1806 = vsel %vm629, 0.0, %v1795
    %v1807 = vsel %vm1480, %v1806, 0.0
    %v1808 = vsel %vm1481, %v1797, 0.0
    %v1809 = vsel %vm1482, %v1799, 0.0
    %v1810 = vsel %vm1483, %v1801, 0.0
    %v1811 = vrot.slane %v1787, 1
    %v1812 = vrot.slane %v1788, 1
    %v1813 = vsel %vm710, %v1811, %v1812
    %v1814 = vrot.slane %v1789, 1
    %v1815 = vsel %vm710, %v1812, %v1814
    %v1816 = vrot.slane %v1790, 1
    %v1817 = vsel %vm710, %v1814, %v1816
    %v1822 = vsel %vm710, %v1816, 0.0
    %v1823 = vsel %vm1520, %v1813, 0.0
    %v1824 = vsel %vm1521, %v1815, 0.0
    %v1825 = vsel %vm1522, %v1817, 0.0
    %v1826 = vsel %vm1523, %v1822, 0.0
    %v1827 = vpack.c.bf16 %v1808, %v1807
    %v1828 = vpack.c.bf16 %v1788, %v1787
    %v1829 = vpack.c.bf16 %v1824, %v1823
    %v1830 = vpack.c.bf16 %v1810, %v1809
    %v1831 = vpack.c.bf16 %v1790, %v1789
    %v1832 = vpack.c.bf16 %v1826, %v1825
    %v1833 = vld [vmem:[#allocation6] sm:$0xf]
    %v1834 = vld [vmem:[#allocation6 + $0x4] sm:$0xf]
    %v1835 = vld [vmem:[#allocation6 + $0x8] sm:$0xf]
    %v1836 = vld [vmem:[#allocation6 + $0xc] sm:$0xf]
    %v1837 = vld [vmem:[#allocation6 + $0x10] sm:$0xf]
    %v1838 = vld [vmem:[#allocation6 + $0x14] sm:$0xf]
    %v1839 = vld [vmem:[#allocation6 + $0x18] sm:$0xf]
    %v1840 = vld [vmem:[#allocation6 + $0x1c] sm:$0xf]
    %v1841 = vld [vmem:[#allocation6 + $0x20] sm:$0xf]
    %v1842 = vld [vmem:[#allocation6 + $0x24] sm:$0xf]
    %v1843 = vld [vmem:[#allocation6 + $0x28] sm:$0xf]
    %v1844 = vld [vmem:[#allocation6 + $0x2c] sm:$0xf]
    %v1845 = vld [vmem:[#allocation6 + $0x30] sm:$0xf]
    %v1846 = vld [vmem:[#allocation6 + $0x34] sm:$0xf]
    %v1847 = vld [vmem:[#allocation6 + $0x38] sm:$0xf]
    %v1848 = vld [vmem:[#allocation6 + $0x3c] sm:$0xf]
    %v1849 = vld [vmem:[#allocation6 + $0x40] sm:$0xf]
    %v1850 = vld [vmem:[#allocation6 + $0x44] sm:$0xf]
    %v1851 = vld [vmem:[#allocation6 + $0x48] sm:$0xf]
    %v1852 = vld [vmem:[#allocation6 + $0x4c] sm:$0xf]
    %v1853 = vld [vmem:[#allocation6 + $0x50] sm:$0xf]
    %v1854 = vld [vmem:[#allocation6 + $0x54] sm:$0xf]
    %v1855 = vld [vmem:[#allocation6 + $0x58] sm:$0xf]
    %v1856 = vld [vmem:[#allocation6 + $0x5c] sm:$0xf]
    %v1857 = vld [vmem:[#allocation6 + $0x60] sm:$0xf]
    %v1858 = vld [vmem:[#allocation6 + $0x64] sm:$0xf]
    %v1859 = vld [vmem:[#allocation6 + $0x68] sm:$0xf]
    %v1860 = vld [vmem:[#allocation6 + $0x6c] sm:$0xf]
    %v1861 = vld [vmem:[#allocation6 + $0x70] sm:$0xf]
    %v1862 = vld [vmem:[#allocation6 + $0x74] sm:$0xf]
    %v1863 = vld [vmem:[#allocation6 + $0x78] sm:$0xf]
    %v1864 = vld [vmem:[#allocation6 + $0x7c] sm:$0xf]
    %v1865 = vld [vmem:[#allocation6 + $0x80] sm:$0xf]
    %v1866 = vld [vmem:[#allocation6 + $0x84] sm:$0xf]
    %v1867 = vld [vmem:[#allocation6 + $0x88] sm:$0xf]
    %v1868 = vld [vmem:[#allocation6 + $0x8c] sm:$0xf]
    %v1869 = vld [vmem:[#allocation6 + $0x90] sm:$0xf]
    %v1870 = vld [vmem:[#allocation6 + $0x94] sm:$0xf]
    %v1871 = vld [vmem:[#allocation6 + $0x98] sm:$0xf]
    %v1872 = vld [vmem:[#allocation6 + $0x9c] sm:$0xf]
    %v1873 = vld [vmem:[#allocation6 + $0xa0] sm:$0xf]
    %v1874 = vld [vmem:[#allocation6 + $0xa4] sm:$0xf]
    %v1875 = vld [vmem:[#allocation6 + $0xa8] sm:$0xf]
    %v1876 = vld [vmem:[#allocation6 + $0xac] sm:$0xf]
    %v1877 = vld [vmem:[#allocation6 + $0xb0] sm:$0xf]
    %v1878 = vld [vmem:[#allocation6 + $0xb4] sm:$0xf]
    %v1879 = vld [vmem:[#allocation6 + $0xb8] sm:$0xf]
    %v1880 = vld [vmem:[#allocation6 + $0xbc] sm:$0xf]
    %v1881 = vld [vmem:[%s15] sm:$0x1]
    %v1883 = vperm.slane %v1881, 0
    %v1933 = vunpack.c.l.b16 %v1833
    %v1934 = vunpack.c.l.b16 %v1834
    %v1935 = vunpack.c.l.b16 %v1835
    %v1936 = vunpack.c.l.b16 %v1836
    %v1937 = vunpack.c.l.b16 %v1837
    %v1938 = vunpack.c.l.b16 %v1838
    %v1939 = vunpack.c.l.b16 %v1839
    %v1940 = vunpack.c.l.b16 %v1840
    %v1941 = vunpack.c.l.b16 %v1841
    %v1942 = vunpack.c.l.b16 %v1842
    %v1943 = vunpack.c.l.b16 %v1843
    %v1944 = vunpack.c.l.b16 %v1844
    %v1945 = vunpack.c.l.b16 %v1845
    %v1946 = vunpack.c.l.b16 %v1846
    %v1947 = vunpack.c.l.b16 %v1847
    %v1948 = vunpack.c.l.b16 %v1848
    %v1949 = vunpack.c.l.b16 %v1849
    %v1950 = vunpack.c.l.b16 %v1850
    %v1951 = vunpack.c.l.b16 %v1851
    %v1952 = vunpack.c.l.b16 %v1852
    %v1953 = vunpack.c.l.b16 %v1853
    %v1954 = vunpack.c.l.b16 %v1854
    %v1955 = vunpack.c.l.b16 %v1855
    %v1956 = vunpack.c.l.b16 %v1856
    %v1957 = vunpack.c.l.b16 %v1857
    %v1958 = vunpack.c.l.b16 %v1858
    %v1959 = vunpack.c.l.b16 %v1859
    %v1960 = vunpack.c.l.b16 %v1860
    %v1961 = vunpack.c.l.b16 %v1861
    %v1962 = vunpack.c.l.b16 %v1862
    %v1963 = vunpack.c.l.b16 %v1863
    %v1964 = vunpack.c.l.b16 %v1864
    %v1965 = vunpack.c.l.b16 %v1865
    %v1966 = vunpack.c.l.b16 %v1866
    %v1967 = vunpack.c.l.b16 %v1867
    %v1968 = vunpack.c.l.b16 %v1868
    %v1969 = vunpack.c.l.b16 %v1869
    %v1970 = vunpack.c.l.b16 %v1870
    %v1971 = vunpack.c.l.b16 %v1871
    %v1972 = vunpack.c.l.b16 %v1872
    %v1973 = vunpack.c.l.b16 %v1873
    %v1974 = vunpack.c.l.b16 %v1874
    %v1975 = vunpack.c.l.b16 %v1875
    %v1976 = vunpack.c.l.b16 %v1876
    %v1977 = vunpack.c.l.b16 %v1877
    %v1978 = vunpack.c.l.b16 %v1878
    %v1979 = vunpack.c.l.b16 %v1879
    %v1980 = vunpack.c.l.b16 %v1880
    %v1981 = vpack.c.b16 %v1934, %v1933
    %v1982 = vpack.c.b16 %v1936, %v1935
    %v1983 = vpack.c.b16 %v1938, %v1937
    %v1984 = vpack.c.b16 %v1940, %v1939
    %v1985 = vpack.c.b16 %v1942, %v1941
    %v1986 = vpack.c.b16 %v1944, %v1943
    %v1987 = vpack.c.b16 %v1946, %v1945
    %v1988 = vpack.c.b16 %v1948, %v1947
    %v1989 = vpack.c.b16 %v1950, %v1949
    %v1990 = vpack.c.b16 %v1952, %v1951
    %v1991 = vpack.c.b16 %v1954, %v1953
    %v1992 = vpack.c.b16 %v1956, %v1955
    %v1993 = vpack.c.b16 %v1958, %v1957
    %v1994 = vpack.c.b16 %v1960, %v1959
    %v1995 = vpack.c.b16 %v1962, %v1961
    %v1996 = vpack.c.b16 %v1964, %v1963
    %v1997 = vpack.c.b16 %v1966, %v1965
    %v1998 = vpack.c.b16 %v1968, %v1967
    %v1999 = vpack.c.b16 %v1970, %v1969
    %v2000 = vpack.c.b16 %v1972, %v1971
    %v2001 = vpack.c.b16 %v1974, %v1973
    %v2002 = vpack.c.b16 %v1976, %v1975
    %v2003 = vpack.c.b16 %v1978, %v1977
    %v2004 = vpack.c.b16 %v1980, %v1979
    %2029 = vmatpush.bf16.msra.mxu0 %v1988
    %2030 = vmatpush.bf16.msra.mxu0 %v1987
    %2031 = vmatpush.bf16.msra.mxu0 %v1986
    %2032 = vmatpush.bf16.msra.mxu0 %v1985
    %2033 = vmatpush.bf16.msra.mxu0 %v1984
    %2034 = vmatpush.bf16.msra.mxu0 %v1983
    %2035 = vmatpush.bf16.msra.mxu0 %v1982
    %2036 = vmatpush.bf16.msra.mxu0 %v1981
    %2037 = vmatmul.bf16.gmra.mxu0 %v1827
    %v2038 = vpop.f32.mrf.mxu0
    %v2039 = vadd.f32 %v1883, %v2038
    %v2040 = vpop.f32.mrf.mxu0
    %v2041 = vadd.f32 %v1883, %v2040
    %2042 = vmatmul.bf16.gmra.mxu0 %v1830
    %v2043 = vpop.f32.mrf.mxu0
    %v2044 = vadd.f32 %v1883, %v2043
    %v2045 = vpop.f32.mrf.mxu0
    %v2046 = vadd.f32 %v1883, %v2045
    %2047 = vdwg.mxu0
    %2048 = vmatpush.bf16.msra.mxu0 %v1996
    %2049 = vmatpush.bf16.msra.mxu0 %v1995
    %2050 = vmatpush.bf16.msra.mxu0 %v1994
    %2051 = vmatpush.bf16.msra.mxu0 %v1993
    %2052 = vmatpush.bf16.msra.mxu0 %v1992
    %2053 = vmatpush.bf16.msra.mxu0 %v1991
    %2054 = vmatpush.bf16.msra.mxu0 %v1990
    %2055 = vmatpush.bf16.msra.mxu0 %v1989
    %2056 = vmatmul.bf16.gmra.mxu0 %v1828
    %v2057 = vpop.f32.mrf.mxu0
    %v2058 = vadd.f32 %v2039, %v2057
    %v2059 = vpop.f32.mrf.mxu0
    %v2060 = vadd.f32 %v2041, %v2059
    %2061 = vmatmul.bf16.gmra.mxu0 %v1831
    %v2062 = vpop.f32.mrf.mxu0
    %v2063 = vadd.f32 %v2044, %v2062
    %v2064 = vpop.f32.mrf.mxu0
    %v2065 = vadd.f32 %v2046, %v2064
    %2066 = vdwg.mxu0
    %2067 = vmatpush.bf16.msra.mxu0 %v2004
    %2068 = vmatpush.bf16.msra.mxu0 %v2003
    %2069 = vmatpush.bf16.msra.mxu0 %v2002
    %2070 = vmatpush.bf16.msra.mxu0 %v2001
    %2071 = vmatpush.bf16.msra.mxu0 %v2000
    %2072 = vmatpush.bf16.msra.mxu0 %v1999
    %2073 = vmatpush.bf16.msra.mxu0 %v1998
    %2074 = vmatpush.bf16.msra.mxu0 %v1997
    %2075 = vmatmul.bf16.gmra.mxu0 %v1829
    %v2076 = vpop.f32.mrf.mxu0
    %v2077 = vadd.f32 %v2058, %v2076
    %v2078 = vpop.f32.mrf.mxu0
    %v2079 = vadd.f32 %v2060, %v2078
    %2080 = vmatmul.bf16.gmra.mxu0 %v1832
    %v2081 = vpop.f32.mrf.mxu0
    %v2082 = vadd.f32 %v2063, %v2081
    %v2083 = vpop.f32.mrf.mxu0
    %v2084 = vadd.f32 %v2065, %v2083
    %2085 = vdwg.mxu0
    %v2086 = vadd.f32 %v2077, %v1392
    %v2087 = vadd.f32 %v2079, %v1393
    %v2088 = vadd.f32 %v2082, %v1394
    %v2089 = vadd.f32 %v2084, %v1395
    %v2090 = vmax.f32 %v2086, 0.0
    %v2091 = vmax.f32 %v2087, 0.0
    %v2092 = vmax.f32 %v2088, 0.0
    %v2093 = vmax.f32 %v2089, 0.0
    %v2098 = vrot.slane %v2090, 6
    %v2099 = vrot.slane %v2091, 6
    %v2100 = vsel %vm548, %v2098, %v2099
    %v2101 = vrot.slane %v2092, 6
    %v2102 = vsel %vm548, %v2099, %v2101
    %v2103 = vrot.slane %v2093, 6
    %v2104 = vsel %vm548, %v2101, %v2103
    %v2109 = vsel %vm548, 0.0, %v2098
    %v2110 = vadd.s32 %v1440, 4294967294
    %v2111 = vadd.s32 %v1441, 4294967294
    %v2112 = vadd.s32 %v1442, 4294967294
    %v2113 = vadd.s32 %v1443, 4294967294
    %vm2114 = vcmp.ge.s32.totalorder %v2110, 0
    %vm2115 = vcmp.ge.s32.totalorder %v2111, 0
    %vm2116 = vcmp.ge.s32.totalorder %v2112, 0
    %vm2117 = vcmp.ge.s32.totalorder %v2113, 0
    %vm2118 = vcmp.lt.s32.totalorder %v2110, 16
    %vm2119 = vcmp.lt.s32.totalorder %v2111, 16
    %vm2120 = vcmp.lt.s32.totalorder %v2112, 16
    %vm2121 = vcmp.lt.s32.totalorder %v2113, 16
    %vm2122 = vmand %vm2114, %vm2118
    %vm2123 = vmand %vm2115, %vm2119
    %vm2124 = vmand %vm2116, %vm2120
    %vm2125 = vmand %vm2117, %vm2121
    %v2126 = vsel %vm2122, 1, 0
    %v2127 = vsel %vm2123, 1, 0
    %v2128 = vsel %vm2124, 1, 0
    %v2129 = vsel %vm2125, 1, 0
    %vm2130 = vcmp.eq.s32.totalorder %v2126, 1
    %vm2131 = vcmp.eq.s32.totalorder %v2127, 1
    %vm2132 = vcmp.eq.s32.totalorder %v2128, 1
    %vm2133 = vcmp.eq.s32.totalorder %v2129, 1
    %v2134 = vsel %vm2130, %v2109, 0.0
    %v2135 = vsel %vm2131, %v2100, 0.0
    %v2136 = vsel %vm2132, %v2102, 0.0
    %v2137 = vsel %vm2133, %v2104, 0.0
    %v2138 = vrot.slane %v2090, 7
    %v2139 = vrot.slane %v2091, 7
    %v2140 = vsel %vm629, %v2138, %v2139
    %v2141 = vrot.slane %v2092, 7
    %v2142 = vsel %vm629, %v2139, %v2141
    %v2143 = vrot.slane %v2093, 7
    %v2144 = vsel %vm629, %v2141, %v2143
    %v2149 = vsel %vm629, 0.0, %v2138
    %v2150 = vsel %vm1480, %v2149, 0.0
    %v2151 = vsel %vm1481, %v2140, 0.0
    %v2152 = vsel %vm1482, %v2142, 0.0
    %v2153 = vsel %vm1483, %v2144, 0.0
    %v2154 = vrot.slane %v2090, 1
    %v2155 = vrot.slane %v2091, 1
    %v2156 = vsel %vm710, %v2154, %v2155
    %v2157 = vrot.slane %v2092, 1
    %v2158 = vsel %vm710, %v2155, %v2157
    %v2159 = vrot.slane %v2093, 1
    %v2160 = vsel %vm710, %v2157, %v2159
    %v2165 = vsel %vm710, %v2159, 0.0
    %v2166 = vsel %vm1520, %v2156, 0.0
    %v2167 = vsel %vm1521, %v2158, 0.0
    %v2168 = vsel %vm1522, %v2160, 0.0
    %v2169 = vsel %vm1523, %v2165, 0.0
    %v2170 = vrot.slane %v2090, 2
    %v2171 = vrot.slane %v2091, 2
    %v2172 = vsel %vm791, %v2170, %v2171
    %v2173 = vrot.slane %v2092, 2
    %v2174 = vsel %vm791, %v2171, %v2173
    %v2175 = vrot.slane %v2093, 2
    %v2176 = vsel %vm791, %v2173, %v2175
    %v2181 = vsel %vm791, %v2175, 0.0
    %v2182 = vadd.s32 %v1440, 2
    %v2183 = vadd.s32 %v1441, 2
    %v2184 = vadd.s32 %v1442, 2
    %v2185 = vadd.s32 %v1443, 2
    %vm2186 = vcmp.ge.s32.totalorder %v2182, 0
    %vm2187 = vcmp.ge.s32.totalorder %v2183, 0
    %vm2188 = vcmp.ge.s32.totalorder %v2184, 0
    %vm2189 = vcmp.ge.s32.totalorder %v2185, 0
    %vm2190 = vcmp.lt.s32.totalorder %v2182, 16
    %vm2191 = vcmp.lt.s32.totalorder %v2183, 16
    %vm2192 = vcmp.lt.s32.totalorder %v2184, 16
    %vm2193 = vcmp.lt.s32.totalorder %v2185, 16
    %vm2194 = vmand %vm2186, %vm2190
    %vm2195 = vmand %vm2187, %vm2191
    %vm2196 = vmand %vm2188, %vm2192
    %vm2197 = vmand %vm2189, %vm2193
    %v2198 = vsel %vm2194, 1, 0
    %v2199 = vsel %vm2195, 1, 0
    %v2200 = vsel %vm2196, 1, 0
    %v2201 = vsel %vm2197, 1, 0
    %vm2202 = vcmp.eq.s32.totalorder %v2198, 1
    %vm2203 = vcmp.eq.s32.totalorder %v2199, 1
    %vm2204 = vcmp.eq.s32.totalorder %v2200, 1
    %vm2205 = vcmp.eq.s32.totalorder %v2201, 1
    %v2206 = vsel %vm2202, %v2172, 0.0
    %v2207 = vsel %vm2203, %v2174, 0.0
    %v2208 = vsel %vm2204, %v2176, 0.0
    %v2209 = vsel %vm2205, %v2181, 0.0
    %v2210 = vpack.c.bf16 %v2135, %v2134
    %v2211 = vpack.c.bf16 %v2151, %v2150
    %v2212 = vpack.c.bf16 %v2091, %v2090
    %v2213 = vpack.c.bf16 %v2167, %v2166
    %v2214 = vpack.c.bf16 %v2207, %v2206
    %v2215 = vpack.c.bf16 %v2137, %v2136
    %v2216 = vpack.c.bf16 %v2153, %v2152
    %v2217 = vpack.c.bf16 %v2093, %v2092
    %v2218 = vpack.c.bf16 %v2169, %v2168
    %v2219 = vpack.c.bf16 %v2209, %v2208
    %v2220 = vld [vmem:[#allocation8] sm:$0xf]
    %v2221 = vld [vmem:[#allocation8 + $0x4] sm:$0xf]
    %v2222 = vld [vmem:[#allocation8 + $0x8] sm:$0xf]
    %v2223 = vld [vmem:[#allocation8 + $0xc] sm:$0xf]
    %v2224 = vld [vmem:[#allocation8 + $0x10] sm:$0xf]
    %v2225 = vld [vmem:[#allocation8 + $0x14] sm:$0xf]
    %v2226 = vld [vmem:[#allocation8 + $0x18] sm:$0xf]
    %v2227 = vld [vmem:[#allocation8 + $0x1c] sm:$0xf]
    %v2228 = vld [vmem:[#allocation8 + $0x20] sm:$0xf]
    %v2229 = vld [vmem:[#allocation8 + $0x24] sm:$0xf]
    %v2230 = vld [vmem:[#allocation8 + $0x28] sm:$0xf]
    %v2231 = vld [vmem:[#allocation8 + $0x2c] sm:$0xf]
    %v2232 = vld [vmem:[#allocation8 + $0x30] sm:$0xf]
    %v2233 = vld [vmem:[#allocation8 + $0x34] sm:$0xf]
    %v2234 = vld [vmem:[#allocation8 + $0x38] sm:$0xf]
    %v2235 = vld [vmem:[#allocation8 + $0x3c] sm:$0xf]
    %v2236 = vld [vmem:[#allocation8 + $0x40] sm:$0xf]
    %v2237 = vld [vmem:[#allocation8 + $0x44] sm:$0xf]
    %v2238 = vld [vmem:[#allocation8 + $0x48] sm:$0xf]
    %v2239 = vld [vmem:[#allocation8 + $0x4c] sm:$0xf]
    %v2240 = vld [vmem:[#allocation8 + $0x50] sm:$0xf]
    %v2241 = vld [vmem:[#allocation8 + $0x54] sm:$0xf]
    %v2242 = vld [vmem:[#allocation8 + $0x58] sm:$0xf]
    %v2243 = vld [vmem:[#allocation8 + $0x5c] sm:$0xf]
    %v2244 = vld [vmem:[#allocation8 + $0x60] sm:$0xf]
    %v2245 = vld [vmem:[#allocation8 + $0x64] sm:$0xf]
    %v2246 = vld [vmem:[#allocation8 + $0x68] sm:$0xf]
    %v2247 = vld [vmem:[#allocation8 + $0x6c] sm:$0xf]
    %v2248 = vld [vmem:[#allocation8 + $0x70] sm:$0xf]
    %v2249 = vld [vmem:[#allocation8 + $0x74] sm:$0xf]
    %v2250 = vld [vmem:[#allocation8 + $0x78] sm:$0xf]
    %v2251 = vld [vmem:[#allocation8 + $0x7c] sm:$0xf]
    %v2252 = vld [vmem:[#allocation8 + $0x80] sm:$0xf]
    %v2253 = vld [vmem:[#allocation8 + $0x84] sm:$0xf]
    %v2254 = vld [vmem:[#allocation8 + $0x88] sm:$0xf]
    %v2255 = vld [vmem:[#allocation8 + $0x8c] sm:$0xf]
    %v2256 = vld [vmem:[#allocation8 + $0x90] sm:$0xf]
    %v2257 = vld [vmem:[#allocation8 + $0x94] sm:$0xf]
    %v2258 = vld [vmem:[#allocation8 + $0x98] sm:$0xf]
    %v2259 = vld [vmem:[#allocation8 + $0x9c] sm:$0xf]
    %v2260 = vld [vmem:[#allocation8 + $0xa0] sm:$0xf]
    %v2261 = vld [vmem:[#allocation8 + $0xa4] sm:$0xf]
    %v2262 = vld [vmem:[#allocation8 + $0xa8] sm:$0xf]
    %v2263 = vld [vmem:[#allocation8 + $0xac] sm:$0xf]
    %v2264 = vld [vmem:[#allocation8 + $0xb0] sm:$0xf]
    %v2265 = vld [vmem:[#allocation8 + $0xb4] sm:$0xf]
    %v2266 = vld [vmem:[#allocation8 + $0xb8] sm:$0xf]
    %v2267 = vld [vmem:[#allocation8 + $0xbc] sm:$0xf]
    %v2268 = vld [vmem:[#allocation8 + $0xc0] sm:$0xf]
    %v2269 = vld [vmem:[#allocation8 + $0xc4] sm:$0xf]
    %v2270 = vld [vmem:[#allocation8 + $0xc8] sm:$0xf]
    %v2271 = vld [vmem:[#allocation8 + $0xcc] sm:$0xf]
    %v2272 = vld [vmem:[#allocation8 + $0xd0] sm:$0xf]
    %v2273 = vld [vmem:[#allocation8 + $0xd4] sm:$0xf]
    %v2274 = vld [vmem:[#allocation8 + $0xd8] sm:$0xf]
    %v2275 = vld [vmem:[#allocation8 + $0xdc] sm:$0xf]
    %v2276 = vld [vmem:[#allocation8 + $0xe0] sm:$0xf]
    %v2277 = vld [vmem:[#allocation8 + $0xe4] sm:$0xf]
    %v2278 = vld [vmem:[#allocation8 + $0xe8] sm:$0xf]
    %v2279 = vld [vmem:[#allocation8 + $0xec] sm:$0xf]
    %v2280 = vld [vmem:[#allocation8 + $0xf0] sm:$0xf]
    %v2281 = vld [vmem:[#allocation8 + $0xf4] sm:$0xf]
    %v2282 = vld [vmem:[#allocation8 + $0xf8] sm:$0xf]
    %v2283 = vld [vmem:[#allocation8 + $0xfc] sm:$0xf]
    %v2284 = vld [vmem:[#allocation8 + $0x100] sm:$0xf]
    %v2285 = vld [vmem:[#allocation8 + $0x104] sm:$0xf]
    %v2286 = vld [vmem:[#allocation8 + $0x108] sm:$0xf]
    %v2287 = vld [vmem:[#allocation8 + $0x10c] sm:$0xf]
    %v2288 = vld [vmem:[#allocation8 + $0x110] sm:$0xf]
    %v2289 = vld [vmem:[#allocation8 + $0x114] sm:$0xf]
    %v2290 = vld [vmem:[#allocation8 + $0x118] sm:$0xf]
    %v2291 = vld [vmem:[#allocation8 + $0x11c] sm:$0xf]
    %v2292 = vld [vmem:[#allocation8 + $0x120] sm:$0xf]
    %v2293 = vld [vmem:[#allocation8 + $0x124] sm:$0xf]
    %v2294 = vld [vmem:[#allocation8 + $0x128] sm:$0xf]
    %v2295 = vld [vmem:[#allocation8 + $0x12c] sm:$0xf]
    %v2296 = vld [vmem:[#allocation8 + $0x130] sm:$0xf]
    %v2297 = vld [vmem:[#allocation8 + $0x134] sm:$0xf]
    %v2298 = vld [vmem:[#allocation8 + $0x138] sm:$0xf]
    %v2299 = vld [vmem:[#allocation8 + $0x13c] sm:$0xf]
    %v2300 = vld [vmem:[%s19] sm:$0x1]
    %v2302 = vperm.slane %v2300, 0
    %v2384 = vunpack.c.l.b16 %v2220
    %v2385 = vunpack.c.l.b16 %v2221
    %v2386 = vunpack.c.l.b16 %v2222
    %v2387 = vunpack.c.l.b16 %v2223
    %v2388 = vunpack.c.l.b16 %v2224
    %v2389 = vunpack.c.l.b16 %v2225
    %v2390 = vunpack.c.l.b16 %v2226
    %v2391 = vunpack.c.l.b16 %v2227
    %v2392 = vunpack.c.l.b16 %v2228
    %v2393 = vunpack.c.l.b16 %v2229
    %v2394 = vunpack.c.l.b16 %v2230
    %v2395 = vunpack.c.l.b16 %v2231
    %v2396 = vunpack.c.l.b16 %v2232
    %v2397 = vunpack.c.l.b16 %v2233
    %v2398 = vunpack.c.l.b16 %v2234
    %v2399 = vunpack.c.l.b16 %v2235
    %v2400 = vunpack.c.l.b16 %v2236
    %v2401 = vunpack.c.l.b16 %v2237
    %v2402 = vunpack.c.l.b16 %v2238
    %v2403 = vunpack.c.l.b16 %v2239
    %v2404 = vunpack.c.l.b16 %v2240
    %v2405 = vunpack.c.l.b16 %v2241
    %v2406 = vunpack.c.l.b16 %v2242
    %v2407 = vunpack.c.l.b16 %v2243
    %v2408 = vunpack.c.l.b16 %v2244
    %v2409 = vunpack.c.l.b16 %v2245
    %v2410 = vunpack.c.l.b16 %v2246
    %v2411 = vunpack.c.l.b16 %v2247
    %v2412 = vunpack.c.l.b16 %v2248
    %v2413 = vunpack.c.l.b16 %v2249
    %v2414 = vunpack.c.l.b16 %v2250
    %v2415 = vunpack.c.l.b16 %v2251
    %v2416 = vunpack.c.l.b16 %v2252
    %v2417 = vunpack.c.l.b16 %v2253
    %v2418 = vunpack.c.l.b16 %v2254
    %v2419 = vunpack.c.l.b16 %v2255
    %v2420 = vunpack.c.l.b16 %v2256
    %v2421 = vunpack.c.l.b16 %v2257
    %v2422 = vunpack.c.l.b16 %v2258
    %v2423 = vunpack.c.l.b16 %v2259
    %v2424 = vunpack.c.l.b16 %v2260
    %v2425 = vunpack.c.l.b16 %v2261
    %v2426 = vunpack.c.l.b16 %v2262
    %v2427 = vunpack.c.l.b16 %v2263
    %v2428 = vunpack.c.l.b16 %v2264
    %v2429 = vunpack.c.l.b16 %v2265
    %v2430 = vunpack.c.l.b16 %v2266
    %v2431 = vunpack.c.l.b16 %v2267
    %v2432 = vunpack.c.l.b16 %v2268
    %v2433 = vunpack.c.l.b16 %v2269
    %v2434 = vunpack.c.l.b16 %v2270
    %v2435 = vunpack.c.l.b16 %v2271
    %v2436 = vunpack.c.l.b16 %v2272
    %v2437 = vunpack.c.l.b16 %v2273
    %v2438 = vunpack.c.l.b16 %v2274
    %v2439 = vunpack.c.l.b16 %v2275
    %v2440 = vunpack.c.l.b16 %v2276
    %v2441 = vunpack.c.l.b16 %v2277
    %v2442 = vunpack.c.l.b16 %v2278
    %v2443 = vunpack.c.l.b16 %v2279
    %v2444 = vunpack.c.l.b16 %v2280
    %v2445 = vunpack.c.l.b16 %v2281
    %v2446 = vunpack.c.l.b16 %v2282
    %v2447 = vunpack.c.l.b16 %v2283
    %v2448 = vunpack.c.l.b16 %v2284
    %v2449 = vunpack.c.l.b16 %v2285
    %v2450 = vunpack.c.l.b16 %v2286
    %v2451 = vunpack.c.l.b16 %v2287
    %v2452 = vunpack.c.l.b16 %v2288
    %v2453 = vunpack.c.l.b16 %v2289
    %v2454 = vunpack.c.l.b16 %v2290
    %v2455 = vunpack.c.l.b16 %v2291
    %v2456 = vunpack.c.l.b16 %v2292
    %v2457 = vunpack.c.l.b16 %v2293
    %v2458 = vunpack.c.l.b16 %v2294
    %v2459 = vunpack.c.l.b16 %v2295
    %v2460 = vunpack.c.l.b16 %v2296
    %v2461 = vunpack.c.l.b16 %v2297
    %v2462 = vunpack.c.l.b16 %v2298
    %v2463 = vunpack.c.l.b16 %v2299
    %v2464 = vpack.c.b16 %v2385, %v2384
    %v2465 = vpack.c.b16 %v2387, %v2386
    %v2466 = vpack.c.b16 %v2389, %v2388
    %v2467 = vpack.c.b16 %v2391, %v2390
    %v2468 = vpack.c.b16 %v2393, %v2392
    %v2469 = vpack.c.b16 %v2395, %v2394
    %v2470 = vpack.c.b16 %v2397, %v2396
    %v2471 = vpack.c.b16 %v2399, %v2398
    %v2472 = vpack.c.b16 %v2401, %v2400
    %v2473 = vpack.c.b16 %v2403, %v2402
    %v2474 = vpack.c.b16 %v2405, %v2404
    %v2475 = vpack.c.b16 %v2407, %v2406
    %v2476 = vpack.c.b16 %v2409, %v2408
    %v2477 = vpack.c.b16 %v2411, %v2410
    %v2478 = vpack.c.b16 %v2413, %v2412
    %v2479 = vpack.c.b16 %v2415, %v2414
    %v2480 = vpack.c.b16 %v2417, %v2416
    %v2481 = vpack.c.b16 %v2419, %v2418
    %v2482 = vpack.c.b16 %v2421, %v2420
    %v2483 = vpack.c.b16 %v2423, %v2422
    %v2484 = vpack.c.b16 %v2425, %v2424
    %v2485 = vpack.c.b16 %v2427, %v2426
    %v2486 = vpack.c.b16 %v2429, %v2428
    %v2487 = vpack.c.b16 %v2431, %v2430
    %v2488 = vpack.c.b16 %v2433, %v2432
    %v2489 = vpack.c.b16 %v2435, %v2434
    %v2490 = vpack.c.b16 %v2437, %v2436
    %v2491 = vpack.c.b16 %v2439, %v2438
    %v2492 = vpack.c.b16 %v2441, %v2440
    %v2493 = vpack.c.b16 %v2443, %v2442
    %v2494 = vpack.c.b16 %v2445, %v2444
    %v2495 = vpack.c.b16 %v2447, %v2446
    %v2496 = vpack.c.b16 %v2449, %v2448
    %v2497 = vpack.c.b16 %v2451, %v2450
    %v2498 = vpack.c.b16 %v2453, %v2452
    %v2499 = vpack.c.b16 %v2455, %v2454
    %v2500 = vpack.c.b16 %v2457, %v2456
    %v2501 = vpack.c.b16 %v2459, %v2458
    %v2502 = vpack.c.b16 %v2461, %v2460
    %v2503 = vpack.c.b16 %v2463, %v2462
    %2544 = vmatpush.bf16.msra.mxu0 %v2471
    %2545 = vmatpush.bf16.msra.mxu0 %v2470
    %2546 = vmatpush.bf16.msra.mxu0 %v2469
    %2547 = vmatpush.bf16.msra.mxu0 %v2468
    %2548 = vmatpush.bf16.msra.mxu0 %v2467
    %2549 = vmatpush.bf16.msra.mxu0 %v2466
    %2550 = vmatpush.bf16.msra.mxu0 %v2465
    %2551 = vmatpush.bf16.msra.mxu0 %v2464
    %2552 = vmatmul.bf16.gmra.mxu0 %v2210
    %v2553 = vpop.f32.mrf.mxu0
    %v2554 = vadd.f32 %v2302, %v2553
    %v2555 = vpop.f32.mrf.mxu0
    %v2556 = vadd.f32 %v2302, %v2555
    %2557 = vmatmul.bf16.gmra.mxu0 %v2215
    %v2558 = vpop.f32.mrf.mxu0
    %v2559 = vadd.f32 %v2302, %v2558
    %v2560 = vpop.f32.mrf.mxu0
    %v2561 = vadd.f32 %v2302, %v2560
    %2562 = vdwg.mxu0
    %2563 = vmatpush.bf16.msra.mxu0 %v2479
    %2564 = vmatpush.bf16.msra.mxu0 %v2478
    %2565 = vmatpush.bf16.msra.mxu0 %v2477
    %2566 = vmatpush.bf16.msra.mxu0 %v2476
    %2567 = vmatpush.bf16.msra.mxu0 %v2475
    %2568 = vmatpush.bf16.msra.mxu0 %v2474
    %2569 = vmatpush.bf16.msra.mxu0 %v2473
    %2570 = vmatpush.bf16.msra.mxu0 %v2472
    %2571 = vmatmul.bf16.gmra.mxu0 %v2211
    %v2572 = vpop.f32.mrf.mxu0
    %v2573 = vadd.f32 %v2554, %v2572
    %v2574 = vpop.f32.mrf.mxu0
    %v2575 = vadd.f32 %v2556, %v2574
    %2576 = vmatmul.bf16.gmra.mxu0 %v2216
    %v2577 = vpop.f32.mrf.mxu0
    %v2578 = vadd.f32 %v2559, %v2577
    %v2579 = vpop.f32.mrf.mxu0
    %v2580 = vadd.f32 %v2561, %v2579
    %2581 = vdwg.mxu0
    %2582 = vmatpush.bf16.msra.mxu0 %v2487
    %2583 = vmatpush.bf16.msra.mxu0 %v2486
    %2584 = vmatpush.bf16.msra.mxu0 %v2485
    %2585 = vmatpush.bf16.msra.mxu0 %v2484
    %2586 = vmatpush.bf16.msra.mxu0 %v2483
    %2587 = vmatpush.bf16.msra.mxu0 %v2482
    %2588 = vmatpush.bf16.msra.mxu0 %v2481
    %2589 = vmatpush.bf16.msra.mxu0 %v2480
    %2590 = vmatmul.bf16.gmra.mxu0 %v2212
    %v2591 = vpop.f32.mrf.mxu0
    %v2592 = vadd.f32 %v2573, %v2591
    %v2593 = vpop.f32.mrf.mxu0
    %v2594 = vadd.f32 %v2575, %v2593
    %2595 = vmatmul.bf16.gmra.mxu0 %v2217
    %v2596 = vpop.f32.mrf.mxu0
    %v2597 = vadd.f32 %v2578, %v2596
    %v2598 = vpop.f32.mrf.mxu0
    %v2599 = vadd.f32 %v2580, %v2598
    %2600 = vdwg.mxu0
    %2601 = vmatpush.bf16.msra.mxu0 %v2495
    %2602 = vmatpush.bf16.msra.mxu0 %v2494
    %2603 = vmatpush.bf16.msra.mxu0 %v2493
    %2604 = vmatpush.bf16.msra.mxu0 %v2492
    %2605 = vmatpush.bf16.msra.mxu0 %v2491
    %2606 = vmatpush.bf16.msra.mxu0 %v2490
    %2607 = vmatpush.bf16.msra.mxu0 %v2489
    %2608 = vmatpush.bf16.msra.mxu0 %v2488
    %2609 = vmatmul.bf16.gmra.mxu0 %v2213
    %v2610 = vpop.f32.mrf.mxu0
    %v2611 = vadd.f32 %v2592, %v2610
    %v2612 = vpop.f32.mrf.mxu0
    %v2613 = vadd.f32 %v2594, %v2612
    %2614 = vmatmul.bf16.gmra.mxu0 %v2218
    %v2615 = vpop.f32.mrf.mxu0
    %v2616 = vadd.f32 %v2597, %v2615
    %v2617 = vpop.f32.mrf.mxu0
    %v2618 = vadd.f32 %v2599, %v2617
    %2619 = vdwg.mxu0
    %2620 = vmatpush.bf16.msra.mxu0 %v2503
    %2621 = vmatpush.bf16.msra.mxu0 %v2502
    %2622 = vmatpush.bf16.msra.mxu0 %v2501
    %2623 = vmatpush.bf16.msra.mxu0 %v2500
    %2624 = vmatpush.bf16.msra.mxu0 %v2499
    %2625 = vmatpush.bf16.msra.mxu0 %v2498
    %2626 = vmatpush.bf16.msra.mxu0 %v2497
    %2627 = vmatpush.bf16.msra.mxu0 %v2496
    %2628 = vmatmul.bf16.gmra.mxu0 %v2214
    %v2629 = vpop.f32.mrf.mxu0
    %v2630 = vadd.f32 %v2611, %v2629
    %v2631 = vpop.f32.mrf.mxu0
    %v2632 = vadd.f32 %v2613, %v2631
    %2633 = vmatmul.bf16.gmra.mxu0 %v2219
    %v2634 = vpop.f32.mrf.mxu0
    %v2635 = vadd.f32 %v2616, %v2634
    %v2636 = vpop.f32.mrf.mxu0
    %v2637 = vadd.f32 %v2618, %v2636
    %2638 = vdwg.mxu0
    %v2639 = vmax.f32 %v2630, 0.0
    %v2640 = vmax.f32 %v2632, 0.0
    %v2641 = vmax.f32 %v2635, 0.0
    %v2642 = vmax.f32 %v2637, 0.0
    %2643 = vst [vmem:[#allocation2] sm:$0xff] %v2639
    %2644 = vst [vmem:[#allocation2 + $0x8] sm:$0xff] %v2640
    %2645 = vst [vmem:[#allocation2 + $0x10] sm:$0xff] %v2641
    %2646 = vst [vmem:[#allocation2 + $0x18] sm:$0xff] %v2642
    %v2647 = vld [vmem:[#allocation2] ss:$2 sm:$0xff]
    %s2648 = scalar_lea.vmem [#allocation2], 16
    %v2649 = vld [vmem:[%s2648] ss:$2 sm:$0xff]
    %v2650 = vld [vmem:[%s1384] ss:$2 sm:$0xff]
    %v2651 = vld [vmem:[%s1386] ss:$2 sm:$0xff]
    %v2652 = vmax.f32 %v2647, %v2650
    %v2653 = vmax.f32 %v2649, %v2651
    %vm2654 = vcmp.lt.s32.totalorder %v436, 0
    %v2655 = vsub.s32 0, %v436
    %v2656 = vsel %vm2654, %v2655, %v436
    %v2657 = vshrl.u32 %v2656, 3
    %v2658 = vand.u32 %v2656, 7
    %v2659 = vsub.s32 0, %v2658
    %v2660 = vsel %vm2654, %v2659, %v2658
    %vm2661 = vcmp.lt.s32.totalorder %v437, 0
    %v2662 = vsub.s32 0, %v437
    %v2663 = vsel %vm2661, %v2662, %v437
    %v2664 = vshrl.u32 %v2663, 3
    %v2665 = vand.u32 %v2663, 7
    %v2666 = vsub.s32 0, %v2665
    %v2667 = vsel %vm2661, %v2666, %v2665
    %vm2668 = vcmp.ne.s32.totalorder %v2660, 0
    %vm2669 = vcmp.ne.s32.totalorder %v2667, 0
    %vm2670 = vcmp.lt.s32.totalorder %v2660, 0
    %vm2671 = vcmp.lt.s32.totalorder %v2667, 0
    %vm2672 = vmand %vm2670, %vm2668
    %vm2673 = vmand %vm2671, %vm2669
    %v2674 = vadd.s32 %v2660, 8
    %v2675 = vadd.s32 %v2667, 8
    %v2676 = vsel %vm2672, %v2674, %v2660
    %v2677 = vsel %vm2673, %v2675, %v2667
    %v2680 = vrot.slane %v2652, 7
    %v2681 = vrot.slane %v2653, 7
    %v2682 = vsel %vm629, %v2680, %v2681
    %v2685 = vsel %vm629, 0.0, %v2680
    %v2686 = vadd.s32 %v2676, 4294967295
    %v2687 = vadd.s32 %v2677, 4294967295
    %vm2688 = vcmp.ge.s32.totalorder %v2686, 0
    %vm2689 = vcmp.ge.s32.totalorder %v2687, 0
    %vm2690 = vcmp.lt.s32.totalorder %v2686, 8
    %vm2691 = vcmp.lt.s32.totalorder %v2687, 8
    %vm2692 = vmand %vm2688, %vm2690
    %vm2693 = vmand %vm2689, %vm2691
    %v2694 = vsel %vm2692, 1, 0
    %v2695 = vsel %vm2693, 1, 0
    %vm2696 = vcmp.eq.s32.totalorder %v2694, 1
    %vm2697 = vcmp.eq.s32.totalorder %v2695, 1
    %v2698 = vsel %vm2696, %v2685, 0.0
    %v2699 = vsel %vm2697, %v2682, 0.0
    %v2700 = vrot.slane %v2652, 1
    %v2701 = vrot.slane %v2653, 1
    %v2702 = vsel %vm710, %v2700, %v2701
    %v2705 = vsel %vm710, %v2701, 0.0
    %v2706 = vadd.s32 %v2676, 1
    %v2707 = vadd.s32 %v2677, 1
    %vm2708 = vcmp.ge.s32.totalorder %v2706, 0
    %vm2709 = vcmp.ge.s32.totalorder %v2707, 0
    %vm2710 = vcmp.lt.s32.totalorder %v2706, 8
    %vm2711 = vcmp.lt.s32.totalorder %v2707, 8
    %vm2712 = vmand %vm2708, %vm2710
    %vm2713 = vmand %vm2709, %vm2711
    %v2714 = vsel %vm2712, 1, 0
    %v2715 = vsel %vm2713, 1, 0
    %vm2716 = vcmp.eq.s32.totalorder %v2714, 1
    %vm2717 = vcmp.eq.s32.totalorder %v2715, 1
    %v2718 = vsel %vm2716, %v2702, 0.0
    %v2719 = vsel %vm2717, %v2705, 0.0
    %v2720 = vpack.c.bf16 %v2699, %v2698
    %v2721 = vpack.c.bf16 %v2653, %v2652
    %v2722 = vpack.c.bf16 %v2719, %v2718
    %v2723 = vld [vmem:[#allocation9] sm:$0xf]
    %v2724 = vld [vmem:[#allocation9 + $0x4] sm:$0xf]
    %v2725 = vld [vmem:[#allocation9 + $0x8] sm:$0xf]
    %v2726 = vld [vmem:[#allocation9 + $0xc] sm:$0xf]
    %v2727 = vld [vmem:[#allocation9 + $0x10] sm:$0xf]
    %v2728 = vld [vmem:[#allocation9 + $0x14] sm:$0xf]
    %v2729 = vld [vmem:[#allocation9 + $0x18] sm:$0xf]
    %v2730 = vld [vmem:[#allocation9 + $0x1c] sm:$0xf]
    %v2731 = vld [vmem:[#allocation9 + $0x20] sm:$0xf]
    %v2732 = vld [vmem:[#allocation9 + $0x24] sm:$0xf]
    %v2733 = vld [vmem:[#allocation9 + $0x28] sm:$0xf]
    %v2734 = vld [vmem:[#allocation9 + $0x2c] sm:$0xf]
    %v2735 = vld [vmem:[#allocation9 + $0x30] sm:$0xf]
    %v2736 = vld [vmem:[#allocation9 + $0x34] sm:$0xf]
    %v2737 = vld [vmem:[#allocation9 + $0x38] sm:$0xf]
    %v2738 = vld [vmem:[#allocation9 + $0x3c] sm:$0xf]
    %v2739 = vld [vmem:[#allocation9 + $0x40] sm:$0xf]
    %v2740 = vld [vmem:[#allocation9 + $0x44] sm:$0xf]
    %v2741 = vld [vmem:[#allocation9 + $0x48] sm:$0xf]
    %v2742 = vld [vmem:[#allocation9 + $0x4c] sm:$0xf]
    %v2743 = vld [vmem:[#allocation9 + $0x50] sm:$0xf]
    %v2744 = vld [vmem:[#allocation9 + $0x54] sm:$0xf]
    %v2745 = vld [vmem:[#allocation9 + $0x58] sm:$0xf]
    %v2746 = vld [vmem:[#allocation9 + $0x5c] sm:$0xf]
    %v2747 = vld [vmem:[#allocation9 + $0x60] sm:$0xf]
    %v2748 = vld [vmem:[#allocation9 + $0x64] sm:$0xf]
    %v2749 = vld [vmem:[#allocation9 + $0x68] sm:$0xf]
    %v2750 = vld [vmem:[#allocation9 + $0x6c] sm:$0xf]
    %v2751 = vld [vmem:[#allocation9 + $0x70] sm:$0xf]
    %v2752 = vld [vmem:[#allocation9 + $0x74] sm:$0xf]
    %v2753 = vld [vmem:[#allocation9 + $0x78] sm:$0xf]
    %v2754 = vld [vmem:[#allocation9 + $0x7c] sm:$0xf]
    %v2755 = vld [vmem:[#allocation9 + $0x80] sm:$0xf]
    %v2756 = vld [vmem:[#allocation9 + $0x84] sm:$0xf]
    %v2757 = vld [vmem:[#allocation9 + $0x88] sm:$0xf]
    %v2758 = vld [vmem:[#allocation9 + $0x8c] sm:$0xf]
    %v2759 = vld [vmem:[#allocation9 + $0x90] sm:$0xf]
    %v2760 = vld [vmem:[#allocation9 + $0x94] sm:$0xf]
    %v2761 = vld [vmem:[#allocation9 + $0x98] sm:$0xf]
    %v2762 = vld [vmem:[#allocation9 + $0x9c] sm:$0xf]
    %v2763 = vld [vmem:[#allocation9 + $0xa0] sm:$0xf]
    %v2764 = vld [vmem:[#allocation9 + $0xa4] sm:$0xf]
    %v2765 = vld [vmem:[#allocation9 + $0xa8] sm:$0xf]
    %v2766 = vld [vmem:[#allocation9 + $0xac] sm:$0xf]
    %v2767 = vld [vmem:[#allocation9 + $0xb0] sm:$0xf]
    %v2768 = vld [vmem:[#allocation9 + $0xb4] sm:$0xf]
    %v2769 = vld [vmem:[#allocation9 + $0xb8] sm:$0xf]
    %v2770 = vld [vmem:[#allocation9 + $0xbc] sm:$0xf]
    %v2771 = vld [vmem:[%s23] sm:$0x1]
    %v2773 = vperm.slane %v2771, 0
    %v2823 = vunpack.c.l.b16 %v2723
    %v2824 = vunpack.c.l.b16 %v2724
    %v2825 = vunpack.c.l.b16 %v2725
    %v2826 = vunpack.c.l.b16 %v2726
    %v2827 = vunpack.c.l.b16 %v2727
    %v2828 = vunpack.c.l.b16 %v2728
    %v2829 = vunpack.c.l.b16 %v2729
    %v2830 = vunpack.c.l.b16 %v2730
    %v2831 = vunpack.c.l.b16 %v2731
    %v2832 = vunpack.c.l.b16 %v2732
    %v2833 = vunpack.c.l.b16 %v2733
    %v2834 = vunpack.c.l.b16 %v2734
    %v2835 = vunpack.c.l.b16 %v2735
    %v2836 = vunpack.c.l.b16 %v2736
    %v2837 = vunpack.c.l.b16 %v2737
    %v2838 = vunpack.c.l.b16 %v2738
    %v2839 = vunpack.c.l.b16 %v2739
    %v2840 = vunpack.c.l.b16 %v2740
    %v2841 = vunpack.c.l.b16 %v2741
    %v2842 = vunpack.c.l.b16 %v2742
    %v2843 = vunpack.c.l.b16 %v2743
    %v2844 = vunpack.c.l.b16 %v2744
    %v2845 = vunpack.c.l.b16 %v2745
    %v2846 = vunpack.c.l.b16 %v2746
    %v2847 = vunpack.c.l.b16 %v2747
    %v2848 = vunpack.c.l.b16 %v2748
    %v2849 = vunpack.c.l.b16 %v2749
    %v2850 = vunpack.c.l.b16 %v2750
    %v2851 = vunpack.c.l.b16 %v2751
    %v2852 = vunpack.c.l.b16 %v2752
    %v2853 = vunpack.c.l.b16 %v2753
    %v2854 = vunpack.c.l.b16 %v2754
    %v2855 = vunpack.c.l.b16 %v2755
    %v2856 = vunpack.c.l.b16 %v2756
    %v2857 = vunpack.c.l.b16 %v2757
    %v2858 = vunpack.c.l.b16 %v2758
    %v2859 = vunpack.c.l.b16 %v2759
    %v2860 = vunpack.c.l.b16 %v2760
    %v2861 = vunpack.c.l.b16 %v2761
    %v2862 = vunpack.c.l.b16 %v2762
    %v2863 = vunpack.c.l.b16 %v2763
    %v2864 = vunpack.c.l.b16 %v2764
    %v2865 = vunpack.c.l.b16 %v2765
    %v2866 = vunpack.c.l.b16 %v2766
    %v2867 = vunpack.c.l.b16 %v2767
    %v2868 = vunpack.c.l.b16 %v2768
    %v2869 = vunpack.c.l.b16 %v2769
    %v2870 = vunpack.c.l.b16 %v2770
    %v2871 = vpack.c.b16 %v2824, %v2823
    %v2872 = vpack.c.b16 %v2826, %v2825
    %v2873 = vpack.c.b16 %v2828, %v2827
    %v2874 = vpack.c.b16 %v2830, %v2829
    %v2875 = vpack.c.b16 %v2832, %v2831
    %v2876 = vpack.c.b16 %v2834, %v2833
    %v2877 = vpack.c.b16 %v2836, %v2835
    %v2878 = vpack.c.b16 %v2838, %v2837
    %v2879 = vpack.c.b16 %v2840, %v2839
    %v2880 = vpack.c.b16 %v2842, %v2841
    %v2881 = vpack.c.b16 %v2844, %v2843
    %v2882 = vpack.c.b16 %v2846, %v2845
    %v2883 = vpack.c.b16 %v2848, %v2847
    %v2884 = vpack.c.b16 %v2850, %v2849
    %v2885 = vpack.c.b16 %v2852, %v2851
    %v2886 = vpack.c.b16 %v2854, %v2853
    %v2887 = vpack.c.b16 %v2856, %v2855
    %v2888 = vpack.c.b16 %v2858, %v2857
    %v2889 = vpack.c.b16 %v2860, %v2859
    %v2890 = vpack.c.b16 %v2862, %v2861
    %v2891 = vpack.c.b16 %v2864, %v2863
    %v2892 = vpack.c.b16 %v2866, %v2865
    %v2893 = vpack.c.b16 %v2868, %v2867
    %v2894 = vpack.c.b16 %v2870, %v2869
    %2919 = vmatpush.bf16.msra.mxu0 %v2878
    %2920 = vmatpush.bf16.msra.mxu0 %v2877
    %2921 = vmatpush.bf16.msra.mxu0 %v2876
    %2922 = vmatpush.bf16.msra.mxu0 %v2875
    %2923 = vmatpush.bf16.msra.mxu0 %v2874
    %2924 = vmatpush.bf16.msra.mxu0 %v2873
    %2925 = vmatpush.bf16.msra.mxu0 %v2872
    %2926 = vmatpush.bf16.msra.mxu0 %v2871
    %2927 = vmatmul.bf16.gmra.mxu0 %v2720
    %v2928 = vpop.f32.mrf.mxu0
    %v2929 = vadd.f32 %v2773, %v2928
    %v2930 = vpop.f32.mrf.mxu0
    %v2931 = vadd.f32 %v2773, %v2930
    %2932 = vdwg.mxu0
    %2933 = vmatpush.bf16.msra.mxu0 %v2886
    %2934 = vmatpush.bf16.msra.mxu0 %v2885
    %2935 = vmatpush.bf16.msra.mxu0 %v2884
    %2936 = vmatpush.bf16.msra.mxu0 %v2883
    %2937 = vmatpush.bf16.msra.mxu0 %v2882
    %2938 = vmatpush.bf16.msra.mxu0 %v2881
    %2939 = vmatpush.bf16.msra.mxu0 %v2880
    %2940 = vmatpush.bf16.msra.mxu0 %v2879
    %2941 = vmatmul.bf16.gmra.mxu0 %v2721
    %v2942 = vpop.f32.mrf.mxu0
    %v2943 = vadd.f32 %v2929, %v2942
    %v2944 = vpop.f32.mrf.mxu0
    %v2945 = vadd.f32 %v2931, %v2944
    %2946 = vdwg.mxu0
    %2947 = vmatpush.bf16.msra.mxu0 %v2894
    %2948 = vmatpush.bf16.msra.mxu0 %v2893
    %2949 = vmatpush.bf16.msra.mxu0 %v2892
    %2950 = vmatpush.bf16.msra.mxu0 %v2891
    %2951 = vmatpush.bf16.msra.mxu0 %v2890
    %2952 = vmatpush.bf16.msra.mxu0 %v2889
    %2953 = vmatpush.bf16.msra.mxu0 %v2888
    %2954 = vmatpush.bf16.msra.mxu0 %v2887
    %2955 = vmatmul.bf16.gmra.mxu0 %v2722
    %v2956 = vpop.f32.mrf.mxu0
    %v2957 = vadd.f32 %v2943, %v2956
    %v2958 = vpop.f32.mrf.mxu0
    %v2959 = vadd.f32 %v2945, %v2958
    %2960 = vdwg.mxu0
    %v2961 = vmax.f32 %v2957, 0.0
    %v2962 = vmax.f32 %v2959, 0.0
    %v2965 = vrot.slane %v2961, 7
    %v2966 = vrot.slane %v2962, 7
    %v2967 = vsel %vm629, %v2965, %v2966
    %v2970 = vsel %vm629, 0.0, %v2965
    %v2971 = vsel %vm2696, %v2970, 0.0
    %v2972 = vsel %vm2697, %v2967, 0.0
    %v2973 = vrot.slane %v2961, 1
    %v2974 = vrot.slane %v2962, 1
    %v2975 = vsel %vm710, %v2973, %v2974
    %v2978 = vsel %vm710, %v2974, 0.0
    %v2979 = vsel %vm2716, %v2975, 0.0
    %v2980 = vsel %vm2717, %v2978, 0.0
    %v2981 = vpack.c.bf16 %v2972, %v2971
    %v2982 = vpack.c.bf16 %v2962, %v2961
    %v2983 = vpack.c.bf16 %v2980, %v2979
    %v2984 = vld [vmem:[#allocation11] sm:$0xf]
    %v2985 = vld [vmem:[#allocation11 + $0x4] sm:$0xf]
    %v2986 = vld [vmem:[#allocation11 + $0x8] sm:$0xf]
    %v2987 = vld [vmem:[#allocation11 + $0xc] sm:$0xf]
    %v2988 = vld [vmem:[#allocation11 + $0x10] sm:$0xf]
    %v2989 = vld [vmem:[#allocation11 + $0x14] sm:$0xf]
    %v2990 = vld [vmem:[#allocation11 + $0x18] sm:$0xf]
    %v2991 = vld [vmem:[#allocation11 + $0x1c] sm:$0xf]
    %v2992 = vld [vmem:[#allocation11 + $0x20] sm:$0xf]
    %v2993 = vld [vmem:[#allocation11 + $0x24] sm:$0xf]
    %v2994 = vld [vmem:[#allocation11 + $0x28] sm:$0xf]
    %v2995 = vld [vmem:[#allocation11 + $0x2c] sm:$0xf]
    %v2996 = vld [vmem:[#allocation11 + $0x30] sm:$0xf]
    %v2997 = vld [vmem:[#allocation11 + $0x34] sm:$0xf]
    %v2998 = vld [vmem:[#allocation11 + $0x38] sm:$0xf]
    %v2999 = vld [vmem:[#allocation11 + $0x3c] sm:$0xf]
    %v3000 = vld [vmem:[#allocation11 + $0x40] sm:$0xf]
    %v3001 = vld [vmem:[#allocation11 + $0x44] sm:$0xf]
    %v3002 = vld [vmem:[#allocation11 + $0x48] sm:$0xf]
    %v3003 = vld [vmem:[#allocation11 + $0x4c] sm:$0xf]
    %v3004 = vld [vmem:[#allocation11 + $0x50] sm:$0xf]
    %v3005 = vld [vmem:[#allocation11 + $0x54] sm:$0xf]
    %v3006 = vld [vmem:[#allocation11 + $0x58] sm:$0xf]
    %v3007 = vld [vmem:[#allocation11 + $0x5c] sm:$0xf]
    %v3008 = vld [vmem:[#allocation11 + $0x60] sm:$0xf]
    %v3009 = vld [vmem:[#allocation11 + $0x64] sm:$0xf]
    %v3010 = vld [vmem:[#allocation11 + $0x68] sm:$0xf]
    %v3011 = vld [vmem:[#allocation11 + $0x6c] sm:$0xf]
    %v3012 = vld [vmem:[#allocation11 + $0x70] sm:$0xf]
    %v3013 = vld [vmem:[#allocation11 + $0x74] sm:$0xf]
    %v3014 = vld [vmem:[#allocation11 + $0x78] sm:$0xf]
    %v3015 = vld [vmem:[#allocation11 + $0x7c] sm:$0xf]
    %v3016 = vld [vmem:[#allocation11 + $0x80] sm:$0xf]
    %v3017 = vld [vmem:[#allocation11 + $0x84] sm:$0xf]
    %v3018 = vld [vmem:[#allocation11 + $0x88] sm:$0xf]
    %v3019 = vld [vmem:[#allocation11 + $0x8c] sm:$0xf]
    %v3020 = vld [vmem:[#allocation11 + $0x90] sm:$0xf]
    %v3021 = vld [vmem:[#allocation11 + $0x94] sm:$0xf]
    %v3022 = vld [vmem:[#allocation11 + $0x98] sm:$0xf]
    %v3023 = vld [vmem:[#allocation11 + $0x9c] sm:$0xf]
    %v3024 = vld [vmem:[#allocation11 + $0xa0] sm:$0xf]
    %v3025 = vld [vmem:[#allocation11 + $0xa4] sm:$0xf]
    %v3026 = vld [vmem:[#allocation11 + $0xa8] sm:$0xf]
    %v3027 = vld [vmem:[#allocation11 + $0xac] sm:$0xf]
    %v3028 = vld [vmem:[#allocation11 + $0xb0] sm:$0xf]
    %v3029 = vld [vmem:[#allocation11 + $0xb4] sm:$0xf]
    %v3030 = vld [vmem:[#allocation11 + $0xb8] sm:$0xf]
    %v3031 = vld [vmem:[#allocation11 + $0xbc] sm:$0xf]
    %v3032 = vld [vmem:[%s27] sm:$0x1]
    %v3034 = vperm.slane %v3032, 0
    %v3084 = vunpack.c.l.b16 %v2984
    %v3085 = vunpack.c.l.b16 %v2985
    %v3086 = vunpack.c.l.b16 %v2986
    %v3087 = vunpack.c.l.b16 %v2987
    %v3088 = vunpack.c.l.b16 %v2988
    %v3089 = vunpack.c.l.b16 %v2989
    %v3090 = vunpack.c.l.b16 %v2990
    %v3091 = vunpack.c.l.b16 %v2991
    %v3092 = vunpack.c.l.b16 %v2992
    %v3093 = vunpack.c.l.b16 %v2993
    %v3094 = vunpack.c.l.b16 %v2994
    %v3095 = vunpack.c.l.b16 %v2995
    %v3096 = vunpack.c.l.b16 %v2996
    %v3097 = vunpack.c.l.b16 %v2997
    %v3098 = vunpack.c.l.b16 %v2998
    %v3099 = vunpack.c.l.b16 %v2999
    %v3100 = vunpack.c.l.b16 %v3000
    %v3101 = vunpack.c.l.b16 %v3001
    %v3102 = vunpack.c.l.b16 %v3002
    %v3103 = vunpack.c.l.b16 %v3003
    %v3104 = vunpack.c.l.b16 %v3004
    %v3105 = vunpack.c.l.b16 %v3005
    %v3106 = vunpack.c.l.b16 %v3006
    %v3107 = vunpack.c.l.b16 %v3007
    %v3108 = vunpack.c.l.b16 %v3008
    %v3109 = vunpack.c.l.b16 %v3009
    %v3110 = vunpack.c.l.b16 %v3010
    %v3111 = vunpack.c.l.b16 %v3011
    %v3112 = vunpack.c.l.b16 %v3012
    %v3113 = vunpack.c.l.b16 %v3013
    %v3114 = vunpack.c.l.b16 %v3014
    %v3115 = vunpack.c.l.b16 %v3015
    %v3116 = vunpack.c.l.b16 %v3016
    %v3117 = vunpack.c.l.b16 %v3017
    %v3118 = vunpack.c.l.b16 %v3018
    %v3119 = vunpack.c.l.b16 %v3019
    %v3120 = vunpack.c.l.b16 %v3020
    %v3121 = vunpack.c.l.b16 %v3021
    %v3122 = vunpack.c.l.b16 %v3022
    %v3123 = vunpack.c.l.b16 %v3023
    %v3124 = vunpack.c.l.b16 %v3024
    %v3125 = vunpack.c.l.b16 %v3025
    %v3126 = vunpack.c.l.b16 %v3026
    %v3127 = vunpack.c.l.b16 %v3027
    %v3128 = vunpack.c.l.b16 %v3028
    %v3129 = vunpack.c.l.b16 %v3029
    %v3130 = vunpack.c.l.b16 %v3030
    %v3131 = vunpack.c.l.b16 %v3031
    %v3132 = vpack.c.b16 %v3085, %v3084
    %v3133 = vpack.c.b16 %v3087, %v3086
    %v3134 = vpack.c.b16 %v3089, %v3088
    %v3135 = vpack.c.b16 %v3091, %v3090
    %v3136 = vpack.c.b16 %v3093, %v3092
    %v3137 = vpack.c.b16 %v3095, %v3094
    %v3138 = vpack.c.b16 %v3097, %v3096
    %v3139 = vpack.c.b16 %v3099, %v3098
    %v3140 = vpack.c.b16 %v3101, %v3100
    %v3141 = vpack.c.b16 %v3103, %v3102
    %v3142 = vpack.c.b16 %v3105, %v3104
    %v3143 = vpack.c.b16 %v3107, %v3106
    %v3144 = vpack.c.b16 %v3109, %v3108
    %v3145 = vpack.c.b16 %v3111, %v3110
    %v3146 = vpack.c.b16 %v3113, %v3112
    %v3147 = vpack.c.b16 %v3115, %v3114
    %v3148 = vpack.c.b16 %v3117, %v3116
    %v3149 = vpack.c.b16 %v3119, %v3118
    %v3150 = vpack.c.b16 %v3121, %v3120
    %v3151 = vpack.c.b16 %v3123, %v3122
    %v3152 = vpack.c.b16 %v3125, %v3124
    %v3153 = vpack.c.b16 %v3127, %v3126
    %v3154 = vpack.c.b16 %v3129, %v3128
    %v3155 = vpack.c.b16 %v3131, %v3130
    %3180 = vmatpush.bf16.msra.mxu0 %v3139
    %3181 = vmatpush.bf16.msra.mxu0 %v3138
    %3182 = vmatpush.bf16.msra.mxu0 %v3137
    %3183 = vmatpush.bf16.msra.mxu0 %v3136
    %3184 = vmatpush.bf16.msra.mxu0 %v3135
    %3185 = vmatpush.bf16.msra.mxu0 %v3134
    %3186 = vmatpush.bf16.msra.mxu0 %v3133
    %3187 = vmatpush.bf16.msra.mxu0 %v3132
    %3188 = vmatmul.bf16.gmra.mxu0 %v2981
    %v3189 = vpop.f32.mrf.mxu0
    %v3190 = vadd.f32 %v3034, %v3189
    %v3191 = vpop.f32.mrf.mxu0
    %v3192 = vadd.f32 %v3034, %v3191
    %3193 = vdwg.mxu0
    %3194 = vmatpush.bf16.msra.mxu0 %v3147
    %3195 = vmatpush.bf16.msra.mxu0 %v3146
    %3196 = vmatpush.bf16.msra.mxu0 %v3145
    %3197 = vmatpush.bf16.msra.mxu0 %v3144
    %3198 = vmatpush.bf16.msra.mxu0 %v3143
    %3199 = vmatpush.bf16.msra.mxu0 %v3142
    %3200 = vmatpush.bf16.msra.mxu0 %v3141
    %3201 = vmatpush.bf16.msra.mxu0 %v3140
    %3202 = vmatmul.bf16.gmra.mxu0 %v2982
    %v3203 = vpop.f32.mrf.mxu0
    %v3204 = vadd.f32 %v3190, %v3203
    %v3205 = vpop.f32.mrf.mxu0
    %v3206 = vadd.f32 %v3192, %v3205
    %3207 = vdwg.mxu0
    %3208 = vmatpush.bf16.msra.mxu0 %v3155
    %3209 = vmatpush.bf16.msra.mxu0 %v3154
    %3210 = vmatpush.bf16.msra.mxu0 %v3153
    %3211 = vmatpush.bf16.msra.mxu0 %v3152
    %3212 = vmatpush.bf16.msra.mxu0 %v3151
    %3213 = vmatpush.bf16.msra.mxu0 %v3150
    %3214 = vmatpush.bf16.msra.mxu0 %v3149
    %3215 = vmatpush.bf16.msra.mxu0 %v3148
    %3216 = vmatmul.bf16.gmra.mxu0 %v2983
    %v3217 = vpop.f32.mrf.mxu0
    %v3218 = vadd.f32 %v3204, %v3217
    %v3219 = vpop.f32.mrf.mxu0
    %v3220 = vadd.f32 %v3206, %v3219
    %3221 = vdwg.mxu0
    %v3222 = vadd.f32 %v3218, %v2652
    %v3223 = vadd.f32 %v3220, %v2653
    %v3224 = vmax.f32 %v3222, 0.0
    %v3225 = vmax.f32 %v3223, 0.0
    %v3228 = vrot.slane %v3224, 6
    %v3229 = vrot.slane %v3225, 6
    %v3230 = vsel %vm548, %v3228, %v3229
    %v3233 = vsel %vm548, 0.0, %v3228
    %v3234 = vadd.s32 %v2676, 4294967294
    %v3235 = vadd.s32 %v2677, 4294967294
    %vm3236 = vcmp.ge.s32.totalorder %v3234, 0
    %vm3237 = vcmp.ge.s32.totalorder %v3235, 0
    %vm3238 = vcmp.lt.s32.totalorder %v3234, 8
    %vm3239 = vcmp.lt.s32.totalorder %v3235, 8
    %vm3240 = vmand %vm3236, %vm3238
    %vm3241 = vmand %vm3237, %vm3239
    %v3242 = vsel %vm3240, 1, 0
    %v3243 = vsel %vm3241, 1, 0
    %vm3244 = vcmp.eq.s32.totalorder %v3242, 1
    %vm3245 = vcmp.eq.s32.totalorder %v3243, 1
    %v3246 = vsel %vm3244, %v3233, 0.0
    %v3247 = vsel %vm3245, %v3230, 0.0
    %v3248 = vrot.slane %v3224, 7
    %v3249 = vrot.slane %v3225, 7
    %v3250 = vsel %vm629, %v3248, %v3249
    %v3253 = vsel %vm629, 0.0, %v3248
    %v3254 = vsel %vm2696, %v3253, 0.0
    %v3255 = vsel %vm2697, %v3250, 0.0
    %v3256 = vrot.slane %v3224, 1
    %v3257 = vrot.slane %v3225, 1
    %v3258 = vsel %vm710, %v3256, %v3257
    %v3261 = vsel %vm710, %v3257, 0.0
    %v3262 = vsel %vm2716, %v3258, 0.0
    %v3263 = vsel %vm2717, %v3261, 0.0
    %v3264 = vrot.slane %v3224, 2
    %v3265 = vrot.slane %v3225, 2
    %v3266 = vsel %vm791, %v3264, %v3265
    %v3269 = vsel %vm791, %v3265, 0.0
    %v3270 = vadd.s32 %v2676, 2
    %v3271 = vadd.s32 %v2677, 2
    %vm3272 = vcmp.ge.s32.totalorder %v3270, 0
    %vm3273 = vcmp.ge.s32.totalorder %v3271, 0
    %vm3274 = vcmp.lt.s32.totalorder %v3270, 8
    %vm3275 = vcmp.lt.s32.totalorder %v3271, 8
    %vm3276 = vmand %vm3272, %vm3274
    %vm3277 = vmand %vm3273, %vm3275
    %v3278 = vsel %vm3276, 1, 0
    %v3279 = vsel %vm3277, 1, 0
    %vm3280 = vcmp.eq.s32.totalorder %v3278, 1
    %vm3281 = vcmp.eq.s32.totalorder %v3279, 1
    %v3282 = vsel %vm3280, %v3266, 0.0
    %v3283 = vsel %vm3281, %v3269, 0.0
    %v3284 = vpack.c.bf16 %v3247, %v3246
    %v3285 = vpack.c.bf16 %v3255, %v3254
    %v3286 = vpack.c.bf16 %v3225, %v3224
    %v3287 = vpack.c.bf16 %v3263, %v3262
    %v3288 = vpack.c.bf16 %v3283, %v3282
    %v3289 = vld [vmem:[#allocation12] sm:$0xf]
    %v3290 = vld [vmem:[#allocation12 + $0x4] sm:$0xf]
    %v3291 = vld [vmem:[#allocation12 + $0x8] sm:$0xf]
    %v3292 = vld [vmem:[#allocation12 + $0xc] sm:$0xf]
    %v3293 = vld [vmem:[#allocation12 + $0x10] sm:$0xf]
    %v3294 = vld [vmem:[#allocation12 + $0x14] sm:$0xf]
    %v3295 = vld [vmem:[#allocation12 + $0x18] sm:$0xf]
    %v3296 = vld [vmem:[#allocation12 + $0x1c] sm:$0xf]
    %v3297 = vld [vmem:[#allocation12 + $0x20] sm:$0xf]
    %v3298 = vld [vmem:[#allocation12 + $0x24] sm:$0xf]
    %v3299 = vld [vmem:[#allocation12 + $0x28] sm:$0xf]
    %v3300 = vld [vmem:[#allocation12 + $0x2c] sm:$0xf]
    %v3301 = vld [vmem:[#allocation12 + $0x30] sm:$0xf]
    %v3302 = vld [vmem:[#allocation12 + $0x34] sm:$0xf]
    %v3303 = vld [vmem:[#allocation12 + $0x38] sm:$0xf]
    %v3304 = vld [vmem:[#allocation12 + $0x3c] sm:$0xf]
    %v3305 = vld [vmem:[#allocation12 + $0x40] sm:$0xf]
    %v3306 = vld [vmem:[#allocation12 + $0x44] sm:$0xf]
    %v3307 = vld [vmem:[#allocation12 + $0x48] sm:$0xf]
    %v3308 = vld [vmem:[#allocation12 + $0x4c] sm:$0xf]
    %v3309 = vld [vmem:[#allocation12 + $0x50] sm:$0xf]
    %v3310 = vld [vmem:[#allocation12 + $0x54] sm:$0xf]
    %v3311 = vld [vmem:[#allocation12 + $0x58] sm:$0xf]
    %v3312 = vld [vmem:[#allocation12 + $0x5c] sm:$0xf]
    %v3313 = vld [vmem:[#allocation12 + $0x60] sm:$0xf]
    %v3314 = vld [vmem:[#allocation12 + $0x64] sm:$0xf]
    %v3315 = vld [vmem:[#allocation12 + $0x68] sm:$0xf]
    %v3316 = vld [vmem:[#allocation12 + $0x6c] sm:$0xf]
    %v3317 = vld [vmem:[#allocation12 + $0x70] sm:$0xf]
    %v3318 = vld [vmem:[#allocation12 + $0x74] sm:$0xf]
    %v3319 = vld [vmem:[#allocation12 + $0x78] sm:$0xf]
    %v3320 = vld [vmem:[#allocation12 + $0x7c] sm:$0xf]
    %v3321 = vld [vmem:[#allocation12 + $0x80] sm:$0xf]
    %v3322 = vld [vmem:[#allocation12 + $0x84] sm:$0xf]
    %v3323 = vld [vmem:[#allocation12 + $0x88] sm:$0xf]
    %v3324 = vld [vmem:[#allocation12 + $0x8c] sm:$0xf]
    %v3325 = vld [vmem:[#allocation12 + $0x90] sm:$0xf]
    %v3326 = vld [vmem:[#allocation12 + $0x94] sm:$0xf]
    %v3327 = vld [vmem:[#allocation12 + $0x98] sm:$0xf]
    %v3328 = vld [vmem:[#allocation12 + $0x9c] sm:$0xf]
    %v3329 = vld [vmem:[#allocation12 + $0xa0] sm:$0xf]
    %v3330 = vld [vmem:[#allocation12 + $0xa4] sm:$0xf]
    %v3331 = vld [vmem:[#allocation12 + $0xa8] sm:$0xf]
    %v3332 = vld [vmem:[#allocation12 + $0xac] sm:$0xf]
    %v3333 = vld [vmem:[#allocation12 + $0xb0] sm:$0xf]
    %v3334 = vld [vmem:[#allocation12 + $0xb4] sm:$0xf]
    %v3335 = vld [vmem:[#allocation12 + $0xb8] sm:$0xf]
    %v3336 = vld [vmem:[#allocation12 + $0xbc] sm:$0xf]
    %v3337 = vld [vmem:[#allocation12 + $0xc0] sm:$0xf]
    %v3338 = vld [vmem:[#allocation12 + $0xc4] sm:$0xf]
    %v3339 = vld [vmem:[#allocation12 + $0xc8] sm:$0xf]
    %v3340 = vld [vmem:[#allocation12 + $0xcc] sm:$0xf]
    %v3341 = vld [vmem:[#allocation12 + $0xd0] sm:$0xf]
    %v3342 = vld [vmem:[#allocation12 + $0xd4] sm:$0xf]
    %v3343 = vld [vmem:[#allocation12 + $0xd8] sm:$0xf]
    %v3344 = vld [vmem:[#allocation12 + $0xdc] sm:$0xf]
    %v3345 = vld [vmem:[#allocation12 + $0xe0] sm:$0xf]
    %v3346 = vld [vmem:[#allocation12 + $0xe4] sm:$0xf]
    %v3347 = vld [vmem:[#allocation12 + $0xe8] sm:$0xf]
    %v3348 = vld [vmem:[#allocation12 + $0xec] sm:$0xf]
    %v3349 = vld [vmem:[#allocation12 + $0xf0] sm:$0xf]
    %v3350 = vld [vmem:[#allocation12 + $0xf4] sm:$0xf]
    %v3351 = vld [vmem:[#allocation12 + $0xf8] sm:$0xf]
    %v3352 = vld [vmem:[#allocation12 + $0xfc] sm:$0xf]
    %v3353 = vld [vmem:[#allocation12 + $0x100] sm:$0xf]
    %v3354 = vld [vmem:[#allocation12 + $0x104] sm:$0xf]
    %v3355 = vld [vmem:[#allocation12 + $0x108] sm:$0xf]
    %v3356 = vld [vmem:[#allocation12 + $0x10c] sm:$0xf]
    %v3357 = vld [vmem:[#allocation12 + $0x110] sm:$0xf]
    %v3358 = vld [vmem:[#allocation12 + $0x114] sm:$0xf]
    %v3359 = vld [vmem:[#allocation12 + $0x118] sm:$0xf]
    %v3360 = vld [vmem:[#allocation12 + $0x11c] sm:$0xf]
    %v3361 = vld [vmem:[#allocation12 + $0x120] sm:$0xf]
    %v3362 = vld [vmem:[#allocation12 + $0x124] sm:$0xf]
    %v3363 = vld [vmem:[#allocation12 + $0x128] sm:$0xf]
    %v3364 = vld [vmem:[#allocation12 + $0x12c] sm:$0xf]
    %v3365 = vld [vmem:[#allocation12 + $0x130] sm:$0xf]
    %v3366 = vld [vmem:[#allocation12 + $0x134] sm:$0xf]
    %v3367 = vld [vmem:[#allocation12 + $0x138] sm:$0xf]
    %v3368 = vld [vmem:[#allocation12 + $0x13c] sm:$0xf]
    %v3369 = vld [vmem:[%s31] sm:$0x1]
    %v3371 = vperm.slane %v3369, 0
    %v3453 = vunpack.c.l.b16 %v3289
    %v3454 = vunpack.c.l.b16 %v3290
    %v3455 = vunpack.c.l.b16 %v3291
    %v3456 = vunpack.c.l.b16 %v3292
    %v3457 = vunpack.c.l.b16 %v3293
    %v3458 = vunpack.c.l.b16 %v3294
    %v3459 = vunpack.c.l.b16 %v3295
    %v3460 = vunpack.c.l.b16 %v3296
    %v3461 = vunpack.c.l.b16 %v3297
    %v3462 = vunpack.c.l.b16 %v3298
    %v3463 = vunpack.c.l.b16 %v3299
    %v3464 = vunpack.c.l.b16 %v3300
    %v3465 = vunpack.c.l.b16 %v3301
    %v3466 = vunpack.c.l.b16 %v3302
    %v3467 = vunpack.c.l.b16 %v3303
    %v3468 = vunpack.c.l.b16 %v3304
    %v3469 = vunpack.c.l.b16 %v3305
    %v3470 = vunpack.c.l.b16 %v3306
    %v3471 = vunpack.c.l.b16 %v3307
    %v3472 = vunpack.c.l.b16 %v3308
    %v3473 = vunpack.c.l.b16 %v3309
    %v3474 = vunpack.c.l.b16 %v3310
    %v3475 = vunpack.c.l.b16 %v3311
    %v3476 = vunpack.c.l.b16 %v3312
    %v3477 = vunpack.c.l.b16 %v3313
    %v3478 = vunpack.c.l.b16 %v3314
    %v3479 = vunpack.c.l.b16 %v3315
    %v3480 = vunpack.c.l.b16 %v3316
    %v3481 = vunpack.c.l.b16 %v3317
    %v3482 = vunpack.c.l.b16 %v3318
    %v3483 = vunpack.c.l.b16 %v3319
    %v3484 = vunpack.c.l.b16 %v3320
    %v3485 = vunpack.c.l.b16 %v3321
    %v3486 = vunpack.c.l.b16 %v3322
    %v3487 = vunpack.c.l.b16 %v3323
    %v3488 = vunpack.c.l.b16 %v3324
    %v3489 = vunpack.c.l.b16 %v3325
    %v3490 = vunpack.c.l.b16 %v3326
    %v3491 = vunpack.c.l.b16 %v3327
    %v3492 = vunpack.c.l.b16 %v3328
    %v3493 = vunpack.c.l.b16 %v3329
    %v3494 = vunpack.c.l.b16 %v3330
    %v3495 = vunpack.c.l.b16 %v3331
    %v3496 = vunpack.c.l.b16 %v3332
    %v3497 = vunpack.c.l.b16 %v3333
    %v3498 = vunpack.c.l.b16 %v3334
    %v3499 = vunpack.c.l.b16 %v3335
    %v3500 = vunpack.c.l.b16 %v3336
    %v3501 = vunpack.c.l.b16 %v3337
    %v3502 = vunpack.c.l.b16 %v3338
    %v3503 = vunpack.c.l.b16 %v3339
    %v3504 = vunpack.c.l.b16 %v3340
    %v3505 = vunpack.c.l.b16 %v3341
    %v3506 = vunpack.c.l.b16 %v3342
    %v3507 = vunpack.c.l.b16 %v3343
    %v3508 = vunpack.c.l.b16 %v3344
    %v3509 = vunpack.c.l.b16 %v3345
    %v3510 = vunpack.c.l.b16 %v3346
    %v3511 = vunpack.c.l.b16 %v3347
    %v3512 = vunpack.c.l.b16 %v3348
    %v3513 = vunpack.c.l.b16 %v3349
    %v3514 = vunpack.c.l.b16 %v3350
    %v3515 = vunpack.c.l.b16 %v3351
    %v3516 = vunpack.c.l.b16 %v3352
    %v3517 = vunpack.c.l.b16 %v3353
    %v3518 = vunpack.c.l.b16 %v3354
    %v3519 = vunpack.c.l.b16 %v3355
    %v3520 = vunpack.c.l.b16 %v3356
    %v3521 = vunpack.c.l.b16 %v3357
    %v3522 = vunpack.c.l.b16 %v3358
    %v3523 = vunpack.c.l.b16 %v3359
    %v3524 = vunpack.c.l.b16 %v3360
    %v3525 = vunpack.c.l.b16 %v3361
    %v3526 = vunpack.c.l.b16 %v3362
    %v3527 = vunpack.c.l.b16 %v3363
    %v3528 = vunpack.c.l.b16 %v3364
    %v3529 = vunpack.c.l.b16 %v3365
    %v3530 = vunpack.c.l.b16 %v3366
    %v3531 = vunpack.c.l.b16 %v3367
    %v3532 = vunpack.c.l.b16 %v3368
    %v3533 = vpack.c.b16 %v3454, %v3453
    %v3534 = vpack.c.b16 %v3456, %v3455
    %v3535 = vpack.c.b16 %v3458, %v3457
    %v3536 = vpack.c.b16 %v3460, %v3459
    %v3537 = vpack.c.b16 %v3462, %v3461
    %v3538 = vpack.c.b16 %v3464, %v3463
    %v3539 = vpack.c.b16 %v3466, %v3465
    %v3540 = vpack.c.b16 %v3468, %v3467
    %v3541 = vpack.c.b16 %v3470, %v3469
    %v3542 = vpack.c.b16 %v3472, %v3471
    %v3543 = vpack.c.b16 %v3474, %v3473
    %v3544 = vpack.c.b16 %v3476, %v3475
    %v3545 = vpack.c.b16 %v3478, %v3477
    %v3546 = vpack.c.b16 %v3480, %v3479
    %v3547 = vpack.c.b16 %v3482, %v3481
    %v3548 = vpack.c.b16 %v3484, %v3483
    %v3549 = vpack.c.b16 %v3486, %v3485
    %v3550 = vpack.c.b16 %v3488, %v3487
    %v3551 = vpack.c.b16 %v3490, %v3489
    %v3552 = vpack.c.b16 %v3492, %v3491
    %v3553 = vpack.c.b16 %v3494, %v3493
    %v3554 = vpack.c.b16 %v3496, %v3495
    %v3555 = vpack.c.b16 %v3498, %v3497
    %v3556 = vpack.c.b16 %v3500, %v3499
    %v3557 = vpack.c.b16 %v3502, %v3501
    %v3558 = vpack.c.b16 %v3504, %v3503
    %v3559 = vpack.c.b16 %v3506, %v3505
    %v3560 = vpack.c.b16 %v3508, %v3507
    %v3561 = vpack.c.b16 %v3510, %v3509
    %v3562 = vpack.c.b16 %v3512, %v3511
    %v3563 = vpack.c.b16 %v3514, %v3513
    %v3564 = vpack.c.b16 %v3516, %v3515
    %v3565 = vpack.c.b16 %v3518, %v3517
    %v3566 = vpack.c.b16 %v3520, %v3519
    %v3567 = vpack.c.b16 %v3522, %v3521
    %v3568 = vpack.c.b16 %v3524, %v3523
    %v3569 = vpack.c.b16 %v3526, %v3525
    %v3570 = vpack.c.b16 %v3528, %v3527
    %v3571 = vpack.c.b16 %v3530, %v3529
    %v3572 = vpack.c.b16 %v3532, %v3531
    %3613 = vmatpush.bf16.msra.mxu0 %v3540
    %3614 = vmatpush.bf16.msra.mxu0 %v3539
    %3615 = vmatpush.bf16.msra.mxu0 %v3538
    %3616 = vmatpush.bf16.msra.mxu0 %v3537
    %3617 = vmatpush.bf16.msra.mxu0 %v3536
    %3618 = vmatpush.bf16.msra.mxu0 %v3535
    %3619 = vmatpush.bf16.msra.mxu0 %v3534
    %3620 = vmatpush.bf16.msra.mxu0 %v3533
    %3621 = vmatmul.bf16.gmra.mxu0 %v3284
    %v3622 = vpop.f32.mrf.mxu0
    %v3623 = vadd.f32 %v3371, %v3622
    %v3624 = vpop.f32.mrf.mxu0
    %v3625 = vadd.f32 %v3371, %v3624
    %3626 = vdwg.mxu0
    %3627 = vmatpush.bf16.msra.mxu0 %v3548
    %3628 = vmatpush.bf16.msra.mxu0 %v3547
    %3629 = vmatpush.bf16.msra.mxu0 %v3546
    %3630 = vmatpush.bf16.msra.mxu0 %v3545
    %3631 = vmatpush.bf16.msra.mxu0 %v3544
    %3632 = vmatpush.bf16.msra.mxu0 %v3543
    %3633 = vmatpush.bf16.msra.mxu0 %v3542
    %3634 = vmatpush.bf16.msra.mxu0 %v3541
    %3635 = vmatmul.bf16.gmra.mxu0 %v3285
    %v3636 = vpop.f32.mrf.mxu0
    %v3637 = vadd.f32 %v3623, %v3636
    %v3638 = vpop.f32.mrf.mxu0
    %v3639 = vadd.f32 %v3625, %v3638
    %3640 = vdwg.mxu0
    %3641 = vmatpush.bf16.msra.mxu0 %v3556
    %3642 = vmatpush.bf16.msra.mxu0 %v3555
    %3643 = vmatpush.bf16.msra.mxu0 %v3554
    %3644 = vmatpush.bf16.msra.mxu0 %v3553
    %3645 = vmatpush.bf16.msra.mxu0 %v3552
    %3646 = vmatpush.bf16.msra.mxu0 %v3551
    %3647 = vmatpush.bf16.msra.mxu0 %v3550
    %3648 = vmatpush.bf16.msra.mxu0 %v3549
    %3649 = vmatmul.bf16.gmra.mxu0 %v3286
    %v3650 = vpop.f32.mrf.mxu0
    %v3651 = vadd.f32 %v3637, %v3650
    %v3652 = vpop.f32.mrf.mxu0
    %v3653 = vadd.f32 %v3639, %v3652
    %3654 = vdwg.mxu0
    %3655 = vmatpush.bf16.msra.mxu0 %v3564
    %3656 = vmatpush.bf16.msra.mxu0 %v3563
    %3657 = vmatpush.bf16.msra.mxu0 %v3562
    %3658 = vmatpush.bf16.msra.mxu0 %v3561
    %3659 = vmatpush.bf16.msra.mxu0 %v3560
    %3660 = vmatpush.bf16.msra.mxu0 %v3559
    %3661 = vmatpush.bf16.msra.mxu0 %v3558
    %3662 = vmatpush.bf16.msra.mxu0 %v3557
    %3663 = vmatmul.bf16.gmra.mxu0 %v3287
    %v3664 = vpop.f32.mrf.mxu0
    %v3665 = vadd.f32 %v3651, %v3664
    %v3666 = vpop.f32.mrf.mxu0
    %v3667 = vadd.f32 %v3653, %v3666
    %3668 = vdwg.mxu0
    %3669 = vmatpush.bf16.msra.mxu0 %v3572
    %3670 = vmatpush.bf16.msra.mxu0 %v3571
    %3671 = vmatpush.bf16.msra.mxu0 %v3570
    %3672 = vmatpush.bf16.msra.mxu0 %v3569
    %3673 = vmatpush.bf16.msra.mxu0 %v3568
    %3674 = vmatpush.bf16.msra.mxu0 %v3567
    %3675 = vmatpush.bf16.msra.mxu0 %v3566
    %3676 = vmatpush.bf16.msra.mxu0 %v3565
    %3677 = vmatmul.bf16.gmra.mxu0 %v3288
    %v3678 = vpop.f32.mrf.mxu0
    %v3679 = vadd.f32 %v3665, %v3678
    %v3680 = vpop.f32.mrf.mxu0
    %v3681 = vadd.f32 %v3667, %v3680
    %3682 = vdwg.mxu0
    %v3683 = vmax.f32 %v3679, 0.0
    %v3684 = vmax.f32 %v3681, 0.0
    %3685 = vst [vmem:[#allocation2] sm:$0xff] %v3683
    %3686 = vst [vmem:[#allocation2 + $0x8] sm:$0xff] %v3684
    %v3687 = vld [vmem:[#allocation2] ss:$2 sm:$0xff]
    %v3688 = vld [vmem:[%s1384] ss:$2 sm:$0xff]
    %v3689 = vmax.f32 %v3687, %v3688
    %vm3690 = vcmp.lt.s32.totalorder %v436, 0
    %v3691 = vsub.s32 0, %v436
    %v3692 = vsel %vm3690, %v3691, %v436
    %v3693 = vshrl.u32 %v3692, 2
    %v3694 = vand.u32 %v3692, 3
    %v3695 = vsub.s32 0, %v3694
    %v3696 = vsel %vm3690, %v3695, %v3694
    %vm3697 = vcmp.ne.s32.totalorder %v3696, 0
    %vm3698 = vcmp.lt.s32.totalorder %v3696, 0
    %vm3699 = vmand %vm3698, %vm3697
    %v3700 = vadd.s32 %v3696, 4
    %v3701 = vsel %vm3699, %v3700, %v3696
    %v3703 = vrot.slane %v3689, 7
    %v3705 = vsel %vm629, 0.0, %v3703
    %v3706 = vadd.s32 %v3701, 4294967295
    %vm3707 = vcmp.ge.s32.totalorder %v3706, 0
    %vm3708 = vcmp.lt.s32.totalorder %v3706, 4
    %vm3709 = vmand %vm3707, %vm3708
    %v3710 = vsel %vm3709, 1, 0
    %vm3711 = vcmp.eq.s32.totalorder %v3710, 1
    %v3712 = vsel %vm3711, %v3705, 0.0
    %v3713 = vrot.slane %v3689, 1
    %v3715 = vsel %vm710, %v3713, 0.0
    %v3716 = vadd.s32 %v3701, 1
    %vm3717 = vcmp.ge.s32.totalorder %v3716, 0
    %vm3718 = vcmp.lt.s32.totalorder %v3716, 4
    %vm3719 = vmand %vm3717, %vm3718
    %v3720 = vsel %vm3719, 1, 0
    %vm3721 = vcmp.eq.s32.totalorder %v3720, 1
    %v3722 = vsel %vm3721, %v3715, 0.0
    %v3723 = vpack.c.bf16 %v3712, %v3712
    %v3724 = vpack.c.bf16 %v3689, %v3689
    %v3725 = vpack.c.bf16 %v3722, %v3722
    %v3726 = vld [vmem:[#allocation14] sm:$0xf]
    %v3727 = vld [vmem:[#allocation14 + $0x4] sm:$0xf]
    %v3728 = vld [vmem:[#allocation14 + $0x8] sm:$0xf]
    %v3729 = vld [vmem:[#allocation14 + $0xc] sm:$0xf]
    %v3730 = vld [vmem:[#allocation14 + $0x10] sm:$0xf]
    %v3731 = vld [vmem:[#allocation14 + $0x14] sm:$0xf]
    %v3732 = vld [vmem:[#allocation14 + $0x18] sm:$0xf]
    %v3733 = vld [vmem:[#allocation14 + $0x1c] sm:$0xf]
    %v3734 = vld [vmem:[#allocation14 + $0x20] sm:$0xf]
    %v3735 = vld [vmem:[#allocation14 + $0x24] sm:$0xf]
    %v3736 = vld [vmem:[#allocation14 + $0x28] sm:$0xf]
    %v3737 = vld [vmem:[#allocation14 + $0x2c] sm:$0xf]
    %v3738 = vld [vmem:[#allocation14 + $0x30] sm:$0xf]
    %v3739 = vld [vmem:[#allocation14 + $0x34] sm:$0xf]
    %v3740 = vld [vmem:[#allocation14 + $0x38] sm:$0xf]
    %v3741 = vld [vmem:[#allocation14 + $0x3c] sm:$0xf]
    %v3742 = vld [vmem:[#allocation14 + $0x40] sm:$0xf]
    %v3743 = vld [vmem:[#allocation14 + $0x44] sm:$0xf]
    %v3744 = vld [vmem:[#allocation14 + $0x48] sm:$0xf]
    %v3745 = vld [vmem:[#allocation14 + $0x4c] sm:$0xf]
    %v3746 = vld [vmem:[#allocation14 + $0x50] sm:$0xf]
    %v3747 = vld [vmem:[#allocation14 + $0x54] sm:$0xf]
    %v3748 = vld [vmem:[#allocation14 + $0x58] sm:$0xf]
    %v3749 = vld [vmem:[#allocation14 + $0x5c] sm:$0xf]
    %v3750 = vld [vmem:[#allocation14 + $0x60] sm:$0xf]
    %v3751 = vld [vmem:[#allocation14 + $0x64] sm:$0xf]
    %v3752 = vld [vmem:[#allocation14 + $0x68] sm:$0xf]
    %v3753 = vld [vmem:[#allocation14 + $0x6c] sm:$0xf]
    %v3754 = vld [vmem:[#allocation14 + $0x70] sm:$0xf]
    %v3755 = vld [vmem:[#allocation14 + $0x74] sm:$0xf]
    %v3756 = vld [vmem:[#allocation14 + $0x78] sm:$0xf]
    %v3757 = vld [vmem:[#allocation14 + $0x7c] sm:$0xf]
    %v3758 = vld [vmem:[#allocation14 + $0x80] sm:$0xf]
    %v3759 = vld [vmem:[#allocation14 + $0x84] sm:$0xf]
    %v3760 = vld [vmem:[#allocation14 + $0x88] sm:$0xf]
    %v3761 = vld [vmem:[#allocation14 + $0x8c] sm:$0xf]
    %v3762 = vld [vmem:[#allocation14 + $0x90] sm:$0xf]
    %v3763 = vld [vmem:[#allocation14 + $0x94] sm:$0xf]
    %v3764 = vld [vmem:[#allocation14 + $0x98] sm:$0xf]
    %v3765 = vld [vmem:[#allocation14 + $0x9c] sm:$0xf]
    %v3766 = vld [vmem:[#allocation14 + $0xa0] sm:$0xf]
    %v3767 = vld [vmem:[#allocation14 + $0xa4] sm:$0xf]
    %v3768 = vld [vmem:[#allocation14 + $0xa8] sm:$0xf]
    %v3769 = vld [vmem:[#allocation14 + $0xac] sm:$0xf]
    %v3770 = vld [vmem:[#allocation14 + $0xb0] sm:$0xf]
    %v3771 = vld [vmem:[#allocation14 + $0xb4] sm:$0xf]
    %v3772 = vld [vmem:[#allocation14 + $0xb8] sm:$0xf]
    %v3773 = vld [vmem:[#allocation14 + $0xbc] sm:$0xf]
    %v3774 = vld [vmem:[#allocation15] sm:$0x1]
    %v3776 = vperm.slane %v3774, 0
    %v3826 = vunpack.c.l.b16 %v3726
    %v3827 = vunpack.c.l.b16 %v3727
    %v3828 = vunpack.c.l.b16 %v3728
    %v3829 = vunpack.c.l.b16 %v3729
    %v3830 = vunpack.c.l.b16 %v3730
    %v3831 = vunpack.c.l.b16 %v3731
    %v3832 = vunpack.c.l.b16 %v3732
    %v3833 = vunpack.c.l.b16 %v3733
    %v3834 = vunpack.c.l.b16 %v3734
    %v3835 = vunpack.c.l.b16 %v3735
    %v3836 = vunpack.c.l.b16 %v3736
    %v3837 = vunpack.c.l.b16 %v3737
    %v3838 = vunpack.c.l.b16 %v3738
    %v3839 = vunpack.c.l.b16 %v3739
    %v3840 = vunpack.c.l.b16 %v3740
    %v3841 = vunpack.c.l.b16 %v3741
    %v3842 = vunpack.c.l.b16 %v3742
    %v3843 = vunpack.c.l.b16 %v3743
    %v3844 = vunpack.c.l.b16 %v3744
    %v3845 = vunpack.c.l.b16 %v3745
    %v3846 = vunpack.c.l.b16 %v3746
    %v3847 = vunpack.c.l.b16 %v3747
    %v3848 = vunpack.c.l.b16 %v3748
    %v3849 = vunpack.c.l.b16 %v3749
    %v3850 = vunpack.c.l.b16 %v3750
    %v3851 = vunpack.c.l.b16 %v3751
    %v3852 = vunpack.c.l.b16 %v3752
    %v3853 = vunpack.c.l.b16 %v3753
    %v3854 = vunpack.c.l.b16 %v3754
    %v3855 = vunpack.c.l.b16 %v3755
    %v3856 = vunpack.c.l.b16 %v3756
    %v3857 = vunpack.c.l.b16 %v3757
    %v3858 = vunpack.c.l.b16 %v3758
    %v3859 = vunpack.c.l.b16 %v3759
    %v3860 = vunpack.c.l.b16 %v3760
    %v3861 = vunpack.c.l.b16 %v3761
    %v3862 = vunpack.c.l.b16 %v3762
    %v3863 = vunpack.c.l.b16 %v3763
    %v3864 = vunpack.c.l.b16 %v3764
    %v3865 = vunpack.c.l.b16 %v3765
    %v3866 = vunpack.c.l.b16 %v3766
    %v3867 = vunpack.c.l.b16 %v3767
    %v3868 = vunpack.c.l.b16 %v3768
    %v3869 = vunpack.c.l.b16 %v3769
    %v3870 = vunpack.c.l.b16 %v3770
    %v3871 = vunpack.c.l.b16 %v3771
    %v3872 = vunpack.c.l.b16 %v3772
    %v3873 = vunpack.c.l.b16 %v3773
    %v3874 = vpack.c.b16 %v3827, %v3826
    %v3875 = vpack.c.b16 %v3829, %v3828
    %v3876 = vpack.c.b16 %v3831, %v3830
    %v3877 = vpack.c.b16 %v3833, %v3832
    %v3878 = vpack.c.b16 %v3835, %v3834
    %v3879 = vpack.c.b16 %v3837, %v3836
    %v3880 = vpack.c.b16 %v3839, %v3838
    %v3881 = vpack.c.b16 %v3841, %v3840
    %v3882 = vpack.c.b16 %v3843, %v3842
    %v3883 = vpack.c.b16 %v3845, %v3844
    %v3884 = vpack.c.b16 %v3847, %v3846
    %v3885 = vpack.c.b16 %v3849, %v3848
    %v3886 = vpack.c.b16 %v3851, %v3850
    %v3887 = vpack.c.b16 %v3853, %v3852
    %v3888 = vpack.c.b16 %v3855, %v3854
    %v3889 = vpack.c.b16 %v3857, %v3856
    %v3890 = vpack.c.b16 %v3859, %v3858
    %v3891 = vpack.c.b16 %v3861, %v3860
    %v3892 = vpack.c.b16 %v3863, %v3862
    %v3893 = vpack.c.b16 %v3865, %v3864
    %v3894 = vpack.c.b16 %v3867, %v3866
    %v3895 = vpack.c.b16 %v3869, %v3868
    %v3896 = vpack.c.b16 %v3871, %v3870
    %v3897 = vpack.c.b16 %v3873, %v3872
    %3922 = vmatpush.bf16.msra.mxu0 %v3881
    %3923 = vmatpush.bf16.msra.mxu0 %v3880
    %3924 = vmatpush.bf16.msra.mxu0 %v3879
    %3925 = vmatpush.bf16.msra.mxu0 %v3878
    %3926 = vmatpush.bf16.msra.mxu0 %v3877
    %3927 = vmatpush.bf16.msra.mxu0 %v3876
    %3928 = vmatpush.bf16.msra.mxu0 %v3875
    %3929 = vmatpush.bf16.msra.mxu0 %v3874
    %3930 = vmatmul.bf16.gmra.mxu0 %v3723
    %v3931 = vpop.f32.mrf.mxu0
    %v3932 = vadd.f32 %v3776, %v3931
    %v3933 = vpop.f32.mrf.mxu0
    %3934 = vdwg.mxu0
    %3935 = vmatpush.bf16.msra.mxu0 %v3889
    %3936 = vmatpush.bf16.msra.mxu0 %v3888
    %3937 = vmatpush.bf16.msra.mxu0 %v3887
    %3938 = vmatpush.bf16.msra.mxu0 %v3886
    %3939 = vmatpush.bf16.msra.mxu0 %v3885
    %3940 = vmatpush.bf16.msra.mxu0 %v3884
    %3941 = vmatpush.bf16.msra.mxu0 %v3883
    %3942 = vmatpush.bf16.msra.mxu0 %v3882
    %3943 = vmatmul.bf16.gmra.mxu0 %v3724
    %v3944 = vpop.f32.mrf.mxu0
    %v3945 = vadd.f32 %v3932, %v3944
    %v3946 = vpop.f32.mrf.mxu0
    %3947 = vdwg.mxu0
    %3948 = vmatpush.bf16.msra.mxu0 %v3897
    %3949 = vmatpush.bf16.msra.mxu0 %v3896
    %3950 = vmatpush.bf16.msra.mxu0 %v3895
    %3951 = vmatpush.bf16.msra.mxu0 %v3894
    %3952 = vmatpush.bf16.msra.mxu0 %v3893
    %3953 = vmatpush.bf16.msra.mxu0 %v3892
    %3954 = vmatpush.bf16.msra.mxu0 %v3891
    %3955 = vmatpush.bf16.msra.mxu0 %v3890
    %3956 = vmatmul.bf16.gmra.mxu0 %v3725
    %v3957 = vpop.f32.mrf.mxu0
    %v3958 = vadd.f32 %v3945, %v3957
    %v3959 = vpop.f32.mrf.mxu0
    %3960 = vdwg.mxu0
    %v3961 = vmax.f32 %v3958, 0.0
    %v3963 = vrot.slane %v3961, 7
    %v3965 = vsel %vm629, 0.0, %v3963
    %v3966 = vsel %vm3711, %v3965, 0.0
    %v3967 = vrot.slane %v3961, 1
    %v3969 = vsel %vm710, %v3967, 0.0
    %v3970 = vsel %vm3721, %v3969, 0.0
    %v3971 = vpack.c.bf16 %v3966, %v3966
    %v3972 = vpack.c.bf16 %v3961, %v3961
    %v3973 = vpack.c.bf16 %v3970, %v3970
    %v3974 = vld [vmem:[#allocation17] sm:$0xf]
    %v3975 = vld [vmem:[#allocation17 + $0x4] sm:$0xf]
    %v3976 = vld [vmem:[#allocation17 + $0x8] sm:$0xf]
    %v3977 = vld [vmem:[#allocation17 + $0xc] sm:$0xf]
    %v3978 = vld [vmem:[#allocation17 + $0x10] sm:$0xf]
    %v3979 = vld [vmem:[#allocation17 + $0x14] sm:$0xf]
    %v3980 = vld [vmem:[#allocation17 + $0x18] sm:$0xf]
    %v3981 = vld [vmem:[#allocation17 + $0x1c] sm:$0xf]
    %v3982 = vld [vmem:[#allocation17 + $0x20] sm:$0xf]
    %v3983 = vld [vmem:[#allocation17 + $0x24] sm:$0xf]
    %v3984 = vld [vmem:[#allocation17 + $0x28] sm:$0xf]
    %v3985 = vld [vmem:[#allocation17 + $0x2c] sm:$0xf]
    %v3986 = vld [vmem:[#allocation17 + $0x30] sm:$0xf]
    %v3987 = vld [vmem:[#allocation17 + $0x34] sm:$0xf]
    %v3988 = vld [vmem:[#allocation17 + $0x38] sm:$0xf]
    %v3989 = vld [vmem:[#allocation17 + $0x3c] sm:$0xf]
    %v3990 = vld [vmem:[#allocation17 + $0x40] sm:$0xf]
    %v3991 = vld [vmem:[#allocation17 + $0x44] sm:$0xf]
    %v3992 = vld [vmem:[#allocation17 + $0x48] sm:$0xf]
    %v3993 = vld [vmem:[#allocation17 + $0x4c] sm:$0xf]
    %v3994 = vld [vmem:[#allocation17 + $0x50] sm:$0xf]
    %v3995 = vld [vmem:[#allocation17 + $0x54] sm:$0xf]
    %v3996 = vld [vmem:[#allocation17 + $0x58] sm:$0xf]
    %v3997 = vld [vmem:[#allocation17 + $0x5c] sm:$0xf]
    %v3998 = vld [vmem:[#allocation17 + $0x60] sm:$0xf]
    %v3999 = vld [vmem:[#allocation17 + $0x64] sm:$0xf]
    %v4000 = vld [vmem:[#allocation17 + $0x68] sm:$0xf]
    %v4001 = vld [vmem:[#allocation17 + $0x6c] sm:$0xf]
    %v4002 = vld [vmem:[#allocation17 + $0x70] sm:$0xf]
    %v4003 = vld [vmem:[#allocation17 + $0x74] sm:$0xf]
    %v4004 = vld [vmem:[#allocation17 + $0x78] sm:$0xf]
    %v4005 = vld [vmem:[#allocation17 + $0x7c] sm:$0xf]
    %v4006 = vld [vmem:[#allocation17 + $0x80] sm:$0xf]
    %v4007 = vld [vmem:[#allocation17 + $0x84] sm:$0xf]
    %v4008 = vld [vmem:[#allocation17 + $0x88] sm:$0xf]
    %v4009 = vld [vmem:[#allocation17 + $0x8c] sm:$0xf]
    %v4010 = vld [vmem:[#allocation17 + $0x90] sm:$0xf]
    %v4011 = vld [vmem:[#allocation17 + $0x94] sm:$0xf]
    %v4012 = vld [vmem:[#allocation17 + $0x98] sm:$0xf]
    %v4013 = vld [vmem:[#allocation17 + $0x9c] sm:$0xf]
    %v4014 = vld [vmem:[#allocation17 + $0xa0] sm:$0xf]
    %v4015 = vld [vmem:[#allocation17 + $0xa4] sm:$0xf]
    %v4016 = vld [vmem:[#allocation17 + $0xa8] sm:$0xf]
    %v4017 = vld [vmem:[#allocation17 + $0xac] sm:$0xf]
    %v4018 = vld [vmem:[#allocation17 + $0xb0] sm:$0xf]
    %v4019 = vld [vmem:[#allocation17 + $0xb4] sm:$0xf]
    %v4020 = vld [vmem:[#allocation17 + $0xb8] sm:$0xf]
    %v4021 = vld [vmem:[#allocation17 + $0xbc] sm:$0xf]
    %v4022 = vld [vmem:[#allocation18] sm:$0x1]
    %v4024 = vperm.slane %v4022, 0
    %v4074 = vunpack.c.l.b16 %v3974
    %v4075 = vunpack.c.l.b16 %v3975
    %v4076 = vunpack.c.l.b16 %v3976
    %v4077 = vunpack.c.l.b16 %v3977
    %v4078 = vunpack.c.l.b16 %v3978
    %v4079 = vunpack.c.l.b16 %v3979
    %v4080 = vunpack.c.l.b16 %v3980
    %v4081 = vunpack.c.l.b16 %v3981
    %v4082 = vunpack.c.l.b16 %v3982
    %v4083 = vunpack.c.l.b16 %v3983
    %v4084 = vunpack.c.l.b16 %v3984
    %v4085 = vunpack.c.l.b16 %v3985
    %v4086 = vunpack.c.l.b16 %v3986
    %v4087 = vunpack.c.l.b16 %v3987
    %v4088 = vunpack.c.l.b16 %v3988
    %v4089 = vunpack.c.l.b16 %v3989
    %v4090 = vunpack.c.l.b16 %v3990
    %v4091 = vunpack.c.l.b16 %v3991
    %v4092 = vunpack.c.l.b16 %v3992
    %v4093 = vunpack.c.l.b16 %v3993
    %v4094 = vunpack.c.l.b16 %v3994
    %v4095 = vunpack.c.l.b16 %v3995
    %v4096 = vunpack.c.l.b16 %v3996
    %v4097 = vunpack.c.l.b16 %v3997
    %v4098 = vunpack.c.l.b16 %v3998
    %v4099 = vunpack.c.l.b16 %v3999
    %v4100 = vunpack.c.l.b16 %v4000
    %v4101 = vunpack.c.l.b16 %v4001
    %v4102 = vunpack.c.l.b16 %v4002
    %v4103 = vunpack.c.l.b16 %v4003
    %v4104 = vunpack.c.l.b16 %v4004
    %v4105 = vunpack.c.l.b16 %v4005
    %v4106 = vunpack.c.l.b16 %v4006
    %v4107 = vunpack.c.l.b16 %v4007
    %v4108 = vunpack.c.l.b16 %v4008
    %v4109 = vunpack.c.l.b16 %v4009
    %v4110 = vunpack.c.l.b16 %v4010
    %v4111 = vunpack.c.l.b16 %v4011
    %v4112 = vunpack.c.l.b16 %v4012
    %v4113 = vunpack.c.l.b16 %v4013
    %v4114 = vunpack.c.l.b16 %v4014
    %v4115 = vunpack.c.l.b16 %v4015
    %v4116 = vunpack.c.l.b16 %v4016
    %v4117 = vunpack.c.l.b16 %v4017
    %v4118 = vunpack.c.l.b16 %v4018
    %v4119 = vunpack.c.l.b16 %v4019
    %v4120 = vunpack.c.l.b16 %v4020
    %v4121 = vunpack.c.l.b16 %v4021
    %v4122 = vpack.c.b16 %v4075, %v4074
    %v4123 = vpack.c.b16 %v4077, %v4076
    %v4124 = vpack.c.b16 %v4079, %v4078
    %v4125 = vpack.c.b16 %v4081, %v4080
    %v4126 = vpack.c.b16 %v4083, %v4082
    %v4127 = vpack.c.b16 %v4085, %v4084
    %v4128 = vpack.c.b16 %v4087, %v4086
    %v4129 = vpack.c.b16 %v4089, %v4088
    %v4130 = vpack.c.b16 %v4091, %v4090
    %v4131 = vpack.c.b16 %v4093, %v4092
    %v4132 = vpack.c.b16 %v4095, %v4094
    %v4133 = vpack.c.b16 %v4097, %v4096
    %v4134 = vpack.c.b16 %v4099, %v4098
    %v4135 = vpack.c.b16 %v4101, %v4100
    %v4136 = vpack.c.b16 %v4103, %v4102
    %v4137 = vpack.c.b16 %v4105, %v4104
    %v4138 = vpack.c.b16 %v4107, %v4106
    %v4139 = vpack.c.b16 %v4109, %v4108
    %v4140 = vpack.c.b16 %v4111, %v4110
    %v4141 = vpack.c.b16 %v4113, %v4112
    %v4142 = vpack.c.b16 %v4115, %v4114
    %v4143 = vpack.c.b16 %v4117, %v4116
    %v4144 = vpack.c.b16 %v4119, %v4118
    %v4145 = vpack.c.b16 %v4121, %v4120
    %4170 = vmatpush.bf16.msra.mxu0 %v4129
    %4171 = vmatpush.bf16.msra.mxu0 %v4128
    %4172 = vmatpush.bf16.msra.mxu0 %v4127
    %4173 = vmatpush.bf16.msra.mxu0 %v4126
    %4174 = vmatpush.bf16.msra.mxu0 %v4125
    %4175 = vmatpush.bf16.msra.mxu0 %v4124
    %4176 = vmatpush.bf16.msra.mxu0 %v4123
    %4177 = vmatpush.bf16.msra.mxu0 %v4122
    %4178 = vmatmul.bf16.gmra.mxu0 %v3971
    %v4179 = vpop.f32.mrf.mxu0
    %v4180 = vadd.f32 %v4024, %v4179
    %v4181 = vpop.f32.mrf.mxu0
    %4182 = vdwg.mxu0
    %4183 = vmatpush.bf16.msra.mxu0 %v4137
    %4184 = vmatpush.bf16.msra.mxu0 %v4136
    %4185 = vmatpush.bf16.msra.mxu0 %v4135
    %4186 = vmatpush.bf16.msra.mxu0 %v4134
    %4187 = vmatpush.bf16.msra.mxu0 %v4133
    %4188 = vmatpush.bf16.msra.mxu0 %v4132
    %4189 = vmatpush.bf16.msra.mxu0 %v4131
    %4190 = vmatpush.bf16.msra.mxu0 %v4130
    %4191 = vmatmul.bf16.gmra.mxu0 %v3972
    %v4192 = vpop.f32.mrf.mxu0
    %v4193 = vadd.f32 %v4180, %v4192
    %v4194 = vpop.f32.mrf.mxu0
    %4195 = vdwg.mxu0
    %4196 = vmatpush.bf16.msra.mxu0 %v4145
    %4197 = vmatpush.bf16.msra.mxu0 %v4144
    %4198 = vmatpush.bf16.msra.mxu0 %v4143
    %4199 = vmatpush.bf16.msra.mxu0 %v4142
    %4200 = vmatpush.bf16.msra.mxu0 %v4141
    %4201 = vmatpush.bf16.msra.mxu0 %v4140
    %4202 = vmatpush.bf16.msra.mxu0 %v4139
    %4203 = vmatpush.bf16.msra.mxu0 %v4138
    %4204 = vmatmul.bf16.gmra.mxu0 %v3973
    %v4205 = vpop.f32.mrf.mxu0
    %v4206 = vadd.f32 %v4193, %v4205
    %v4207 = vpop.f32.mrf.mxu0
    %4208 = vdwg.mxu0
    %v4209 = vadd.f32 %v4206, %v3689
    %v4210 = vmax.f32 %v4209, 0.0
    %v4211 = vpack.c.bf16 %v4210, %v4210
    %v4212 = vld [vmem:[#allocation20] sm:$0xff]
    %v4213 = vld [vmem:[#allocation20 + $0x8] sm:$0xff]
    %v4214 = vld [vmem:[#allocation20 + $0x10] sm:$0xff]
    %v4215 = vld [vmem:[#allocation20 + $0x18] sm:$0xff]
    %v4216 = vld [vmem:[#allocation20 + $0x20] sm:$0xff]
    %v4217 = vld [vmem:[#allocation20 + $0x28] sm:$0xff]
    %v4218 = vld [vmem:[#allocation20 + $0x30] sm:$0xff]
    %v4219 = vld [vmem:[#allocation20 + $0x38] sm:$0xff]
    %v4220 = vld [vmem:[#allocation20 + $0x40] sm:$0xff]
    %v4221 = vld [vmem:[#allocation20 + $0x48] sm:$0xff]
    %v4222 = vld [vmem:[#allocation20 + $0x50] sm:$0xff]
    %v4223 = vld [vmem:[#allocation20 + $0x58] sm:$0xff]
    %v4224 = vld [vmem:[#allocation20 + $0x60] sm:$0xff]
    %v4225 = vld [vmem:[#allocation20 + $0x68] sm:$0xff]
    %v4226 = vld [vmem:[#allocation20 + $0x70] sm:$0xff]
    %v4227 = vld [vmem:[#allocation20 + $0x78] sm:$0xff]
    %v4228 = vld [vmem:[%s43] sm:$0x3]
    %v4230 = vperm.slane %v4228, 0
    %v4231 = vperm.slane %v4228, 1
    %v4250 = vunpack.c.l.b16 %v4212
    %v4251 = vunpack.c.h.b16 %v4212
    %v4252 = vunpack.c.l.b16 %v4213
    %v4253 = vunpack.c.h.b16 %v4213
    %v4254 = vunpack.c.l.b16 %v4214
    %v4255 = vunpack.c.h.b16 %v4214
    %v4256 = vunpack.c.l.b16 %v4215
    %v4257 = vunpack.c.h.b16 %v4215
    %v4258 = vunpack.c.l.b16 %v4216
    %v4259 = vunpack.c.h.b16 %v4216
    %v4260 = vunpack.c.l.b16 %v4217
    %v4261 = vunpack.c.h.b16 %v4217
    %v4262 = vunpack.c.l.b16 %v4218
    %v4263 = vunpack.c.h.b16 %v4218
    %v4264 = vunpack.c.l.b16 %v4219
    %v4265 = vunpack.c.h.b16 %v4219
    %v4266 = vunpack.c.l.b16 %v4220
    %v4267 = vunpack.c.h.b16 %v4220
    %v4268 = vunpack.c.l.b16 %v4221
    %v4269 = vunpack.c.h.b16 %v4221
    %v4270 = vunpack.c.l.b16 %v4222
    %v4271 = vunpack.c.h.b16 %v4222
    %v4272 = vunpack.c.l.b16 %v4223
    %v4273 = vunpack.c.h.b16 %v4223
    %v4274 = vunpack.c.l.b16 %v4224
    %v4275 = vunpack.c.h.b16 %v4224
    %v4276 = vunpack.c.l.b16 %v4225
    %v4277 = vunpack.c.h.b16 %v4225
    %v4278 = vunpack.c.l.b16 %v4226
    %v4279 = vunpack.c.h.b16 %v4226
    %v4280 = vunpack.c.l.b16 %v4227
    %v4281 = vunpack.c.h.b16 %v4227
    %v4282 = vpack.c.b16 %v4252, %v4250
    %v4283 = vpack.c.b16 %v4253, %v4251
    %v4284 = vpack.c.b16 %v4256, %v4254
    %v4285 = vpack.c.b16 %v4257, %v4255
    %v4286 = vpack.c.b16 %v4260, %v4258
    %v4287 = vpack.c.b16 %v4261, %v4259
    %v4288 = vpack.c.b16 %v4264, %v4262
    %v4289 = vpack.c.b16 %v4265, %v4263
    %v4290 = vpack.c.b16 %v4268, %v4266
    %v4291 = vpack.c.b16 %v4269, %v4267
    %v4292 = vpack.c.b16 %v4272, %v4270
    %v4293 = vpack.c.b16 %v4273, %v4271
    %v4294 = vpack.c.b16 %v4276, %v4274
    %v4295 = vpack.c.b16 %v4277, %v4275
    %v4296 = vpack.c.b16 %v4280, %v4278
    %v4297 = vpack.c.b16 %v4281, %v4279
    %4314 = vmatpush.bf16.msra.mxu0 %v4296
    %4315 = vmatpush.bf16.msra.mxu0 %v4294
    %4316 = vmatpush.bf16.msra.mxu0 %v4292
    %4317 = vmatpush.bf16.msra.mxu0 %v4290
    %4318 = vmatpush.bf16.msra.mxu0 %v4288
    %4319 = vmatpush.bf16.msra.mxu0 %v4286
    %4320 = vmatpush.bf16.msra.mxu0 %v4284
    %4321 = vmatpush.bf16.msra.mxu0 %v4282
    %4322 = vmatmul.bf16.gmra.mxu0 %v4211
    %v4323 = vpop.f32.mrf.mxu0
    %v4324 = vadd.f32 %v4230, %v4323
    %v4325 = vpop.f32.mrf.mxu0
    %4326 = vdwg.mxu0
    %4327 = vmatpush.bf16.msra.mxu0 %v4297
    %4328 = vmatpush.bf16.msra.mxu0 %v4295
    %4329 = vmatpush.bf16.msra.mxu0 %v4293
    %4330 = vmatpush.bf16.msra.mxu0 %v4291
    %4331 = vmatpush.bf16.msra.mxu0 %v4289
    %4332 = vmatpush.bf16.msra.mxu0 %v4287
    %4333 = vmatpush.bf16.msra.mxu0 %v4285
    %4334 = vmatpush.bf16.msra.mxu0 %v4283
    %4335 = vmatmul.bf16.gmra.mxu0 %v4211
    %v4336 = vpop.f32.mrf.mxu0
    %v4337 = vadd.f32 %v4231, %v4336
    %v4338 = vpop.f32.mrf.mxu0
    %4339 = vdwg.mxu0
    %v4340 = vmax.f32 %v4324, 0.0
    %v4341 = vmax.f32 %v4337, 0.0
    %v4342 = vld [vmem:[%s71] sm:$0x3]
    %vm4343 = vcmask 64512
    %v4345 = vsel %vm4343, %v4342, 0
    %4347 = vmatpush.msra.mxu0 0.0
    %4348 = vmatpush.msra.mxu0 0.0
    %4349 = vmatpush.msra.mxu0 0.0
    %4350 = vmatpush.msra.mxu0 0.0
    %4351 = vmatpush.msra.mxu0 0.0
    %4352 = vmatpush.msra.mxu0 0.0
    %4353 = vmatpush.msra.mxu0 0.0
    %4354 = vmatpush.msra.mxu0 0.0
    %4355 = vmatpush.msra.mxu0 0.0
    %4356 = vmatpush.msra.mxu0 0.0
    %4357 = vmatpush.msra.mxu0 0.0
    %4358 = vmatpush.msra.mxu0 0.0
    %4359 = vmatpush.msra.mxu0 0.0
    %4360 = vmatpush.msra.mxu0 0.0
    %4361 = vmatpush.msra.mxu0 0.0
    %4362 = vmatpush.msra.mxu0 %v4340
    %4363 = vmatmul.f32.gmra.mxu0 %v4345
    %v4364 = vpop.f32.mrf.mxu0
    %v4365 = vadd.f32 0.0, %v4364
    %4366 = vdwg.mxu0
    %4367 = vmatpush.msra.mxu0 0.0
    %4368 = vmatpush.msra.mxu0 0.0
    %4369 = vmatpush.msra.mxu0 0.0
    %4370 = vmatpush.msra.mxu0 0.0
    %4371 = vmatpush.msra.mxu0 0.0
    %4372 = vmatpush.msra.mxu0 0.0
    %4373 = vmatpush.msra.mxu0 0.0
    %4374 = vmatpush.msra.mxu0 0.0
    %4375 = vmatpush.msra.mxu0 0.0
    %4376 = vmatpush.msra.mxu0 0.0
    %4377 = vmatpush.msra.mxu0 0.0
    %4378 = vmatpush.msra.mxu0 0.0
    %4379 = vmatpush.msra.mxu0 0.0
    %4380 = vmatpush.msra.mxu0 0.0
    %4381 = vmatpush.msra.mxu0 0.0
    %4382 = vmatpush.msra.mxu0 %v4341
    %4383 = vmatmul.f32.gmra.mxu0 %v4345
    %v4384 = vpop.f32.mrf.mxu0
    %v4385 = vadd.f32 0.0, %v4384
    %4386 = vdwg.mxu0
    %v4387 = vpack.c.bf16 %v4365, %v4365
    %v4388 = vpack.c.bf16 %v4385, %v4385
    %v4389 = vld [vmem:[#allocation21] sm:$0xf]
    %v4390 = vld [vmem:[#allocation21 + $0x4] sm:$0xf]
    %v4391 = vld [vmem:[#allocation21 + $0x8] sm:$0xf]
    %v4392 = vld [vmem:[#allocation21 + $0xc] sm:$0xf]
    %v4393 = vld [vmem:[#allocation21 + $0x10] sm:$0xf]
    %v4394 = vld [vmem:[#allocation21 + $0x14] sm:$0xf]
    %v4395 = vld [vmem:[#allocation21 + $0x18] sm:$0xf]
    %v4396 = vld [vmem:[#allocation21 + $0x1c] sm:$0xf]
    %v4397 = vld [vmem:[#allocation21 + $0x20] sm:$0xf]
    %v4398 = vld [vmem:[#allocation21 + $0x24] sm:$0xf]
    %v4399 = vld [vmem:[#allocation21 + $0x28] sm:$0xf]
    %v4400 = vld [vmem:[#allocation21 + $0x2c] sm:$0xf]
    %v4401 = vld [vmem:[#allocation21 + $0x30] sm:$0xf]
    %v4402 = vld [vmem:[#allocation21 + $0x34] sm:$0xf]
    %v4403 = vld [vmem:[#allocation21 + $0x38] sm:$0xf]
    %v4404 = vld [vmem:[#allocation21 + $0x3c] sm:$0xf]
    %v4405 = vld [vmem:[#allocation21 + $0x40] sm:$0xf]
    %v4406 = vld [vmem:[#allocation21 + $0x44] sm:$0xf]
    %v4407 = vld [vmem:[#allocation21 + $0x48] sm:$0xf]
    %v4408 = vld [vmem:[#allocation21 + $0x4c] sm:$0xf]
    %v4409 = vld [vmem:[#allocation21 + $0x50] sm:$0xf]
    %v4410 = vld [vmem:[#allocation21 + $0x54] sm:$0xf]
    %v4411 = vld [vmem:[#allocation21 + $0x58] sm:$0xf]
    %v4412 = vld [vmem:[#allocation21 + $0x5c] sm:$0xf]
    %v4413 = vld [vmem:[#allocation21 + $0x60] sm:$0xf]
    %v4414 = vld [vmem:[#allocation21 + $0x64] sm:$0xf]
    %v4415 = vld [vmem:[#allocation21 + $0x68] sm:$0xf]
    %v4416 = vld [vmem:[#allocation21 + $0x6c] sm:$0xf]
    %v4417 = vld [vmem:[#allocation21 + $0x70] sm:$0xf]
    %v4418 = vld [vmem:[#allocation21 + $0x74] sm:$0xf]
    %v4419 = vld [vmem:[#allocation21 + $0x78] sm:$0xf]
    %v4420 = vld [vmem:[#allocation21 + $0x7c] sm:$0xf]
    %v4421 = vld [vmem:[%s47] sm:$0x1]
    %v4423 = vperm.slane %v4421, 0
    %v4457 = vunpack.c.l.b16 %v4389
    %v4458 = vunpack.c.l.b16 %v4390
    %v4459 = vunpack.c.l.b16 %v4391
    %v4460 = vunpack.c.l.b16 %v4392
    %v4461 = vunpack.c.l.b16 %v4393
    %v4462 = vunpack.c.l.b16 %v4394
    %v4463 = vunpack.c.l.b16 %v4395
    %v4464 = vunpack.c.l.b16 %v4396
    %v4465 = vunpack.c.l.b16 %v4397
    %v4466 = vunpack.c.l.b16 %v4398
    %v4467 = vunpack.c.l.b16 %v4399
    %v4468 = vunpack.c.l.b16 %v4400
    %v4469 = vunpack.c.l.b16 %v4401
    %v4470 = vunpack.c.l.b16 %v4402
    %v4471 = vunpack.c.l.b16 %v4403
    %v4472 = vunpack.c.l.b16 %v4404
    %v4473 = vunpack.c.l.b16 %v4405
    %v4474 = vunpack.c.l.b16 %v4406
    %v4475 = vunpack.c.l.b16 %v4407
    %v4476 = vunpack.c.l.b16 %v4408
    %v4477 = vunpack.c.l.b16 %v4409
    %v4478 = vunpack.c.l.b16 %v4410
    %v4479 = vunpack.c.l.b16 %v4411
    %v4480 = vunpack.c.l.b16 %v4412
    %v4481 = vunpack.c.l.b16 %v4413
    %v4482 = vunpack.c.l.b16 %v4414
    %v4483 = vunpack.c.l.b16 %v4415
    %v4484 = vunpack.c.l.b16 %v4416
    %v4485 = vunpack.c.l.b16 %v4417
    %v4486 = vunpack.c.l.b16 %v4418
    %v4487 = vunpack.c.l.b16 %v4419
    %v4488 = vunpack.c.l.b16 %v4420
    %v4489 = vpack.c.b16 %v4458, %v4457
    %v4490 = vpack.c.b16 %v4460, %v4459
    %v4491 = vpack.c.b16 %v4462, %v4461
    %v4492 = vpack.c.b16 %v4464, %v4463
    %v4493 = vpack.c.b16 %v4466, %v4465
    %v4494 = vpack.c.b16 %v4468, %v4467
    %v4495 = vpack.c.b16 %v4470, %v4469
    %v4496 = vpack.c.b16 %v4472, %v4471
    %v4497 = vpack.c.b16 %v4474, %v4473
    %v4498 = vpack.c.b16 %v4476, %v4475
    %v4499 = vpack.c.b16 %v4478, %v4477
    %v4500 = vpack.c.b16 %v4480, %v4479
    %v4501 = vpack.c.b16 %v4482, %v4481
    %v4502 = vpack.c.b16 %v4484, %v4483
    %v4503 = vpack.c.b16 %v4486, %v4485
    %v4504 = vpack.c.b16 %v4488, %v4487
    %4521 = vmatpush.bf16.msra.mxu0 %v4496
    %4522 = vmatpush.bf16.msra.mxu0 %v4495
    %4523 = vmatpush.bf16.msra.mxu0 %v4494
    %4524 = vmatpush.bf16.msra.mxu0 %v4493
    %4525 = vmatpush.bf16.msra.mxu0 %v4492
    %4526 = vmatpush.bf16.msra.mxu0 %v4491
    %4527 = vmatpush.bf16.msra.mxu0 %v4490
    %4528 = vmatpush.bf16.msra.mxu0 %v4489
    %4529 = vmatmul.bf16.gmra.mxu0 %v4387
    %v4530 = vpop.f32.mrf.mxu0
    %v4531 = vadd.f32 %v4423, %v4530
    %v4532 = vpop.f32.mrf.mxu0
    %4533 = vdwg.mxu0
    %4534 = vmatpush.bf16.msra.mxu0 %v4504
    %4535 = vmatpush.bf16.msra.mxu0 %v4503
    %4536 = vmatpush.bf16.msra.mxu0 %v4502
    %4537 = vmatpush.bf16.msra.mxu0 %v4501
    %4538 = vmatpush.bf16.msra.mxu0 %v4500
    %4539 = vmatpush.bf16.msra.mxu0 %v4499
    %4540 = vmatpush.bf16.msra.mxu0 %v4498
    %4541 = vmatpush.bf16.msra.mxu0 %v4497
    %4542 = vmatmul.bf16.gmra.mxu0 %v4388
    %v4543 = vpop.f32.mrf.mxu0
    %v4544 = vadd.f32 %v4531, %v4543
    %v4545 = vpop.f32.mrf.mxu0
    %4546 = vdwg.mxu0
    %v4547 = vmax.f32 %v4544, 0.0
    %v4548 = vpack.c.bf16 %v4547, %v4547
    %v4549 = vld [vmem:[#allocation23] sm:$0xf]
    %v4550 = vld [vmem:[#allocation23 + $0x4] sm:$0xf]
    %v4551 = vld [vmem:[#allocation23 + $0x8] sm:$0xf]
    %v4552 = vld [vmem:[#allocation23 + $0xc] sm:$0xf]
    %v4553 = vld [vmem:[#allocation23 + $0x10] sm:$0xf]
    %v4554 = vld [vmem:[#allocation23 + $0x14] sm:$0xf]
    %v4555 = vld [vmem:[#allocation23 + $0x18] sm:$0xf]
    %v4556 = vld [vmem:[#allocation23 + $0x1c] sm:$0xf]
    %v4557 = vld [vmem:[#allocation23 + $0x20] sm:$0xf]
    %v4558 = vld [vmem:[#allocation23 + $0x24] sm:$0xf]
    %v4559 = vld [vmem:[#allocation23 + $0x28] sm:$0xf]
    %v4560 = vld [vmem:[#allocation23 + $0x2c] sm:$0xf]
    %v4561 = vld [vmem:[#allocation23 + $0x30] sm:$0xf]
    %v4562 = vld [vmem:[#allocation23 + $0x34] sm:$0xf]
    %v4563 = vld [vmem:[#allocation23 + $0x38] sm:$0xf]
    %v4564 = vld [vmem:[#allocation23 + $0x3c] sm:$0xf]
    %v4565 = vld [vmem:[%s51] sm:$0x1]
    %v4567 = vperm.slane %v4565, 0
    %v4585 = vunpack.c.l.b16 %v4549
    %v4586 = vunpack.c.l.b16 %v4550
    %v4587 = vunpack.c.l.b16 %v4551
    %v4588 = vunpack.c.l.b16 %v4552
    %v4589 = vunpack.c.l.b16 %v4553
    %v4590 = vunpack.c.l.b16 %v4554
    %v4591 = vunpack.c.l.b16 %v4555
    %v4592 = vunpack.c.l.b16 %v4556
    %v4593 = vunpack.c.l.b16 %v4557
    %v4594 = vunpack.c.l.b16 %v4558
    %v4595 = vunpack.c.l.b16 %v4559
    %v4596 = vunpack.c.l.b16 %v4560
    %v4597 = vunpack.c.l.b16 %v4561
    %v4598 = vunpack.c.l.b16 %v4562
    %v4599 = vunpack.c.l.b16 %v4563
    %v4600 = vunpack.c.l.b16 %v4564
    %v4601 = vpack.c.b16 %v4586, %v4585
    %v4602 = vpack.c.b16 %v4588, %v4587
    %v4603 = vpack.c.b16 %v4590, %v4589
    %v4604 = vpack.c.b16 %v4592, %v4591
    %v4605 = vpack.c.b16 %v4594, %v4593
    %v4606 = vpack.c.b16 %v4596, %v4595
    %v4607 = vpack.c.b16 %v4598, %v4597
    %v4608 = vpack.c.b16 %v4600, %v4599
    %4617 = vmatpush.bf16.msra.mxu0 %v4608
    %4618 = vmatpush.bf16.msra.mxu0 %v4607
    %4619 = vmatpush.bf16.msra.mxu0 %v4606
    %4620 = vmatpush.bf16.msra.mxu0 %v4605
    %4621 = vmatpush.bf16.msra.mxu0 %v4604
    %4622 = vmatpush.bf16.msra.mxu0 %v4603
    %4623 = vmatpush.bf16.msra.mxu0 %v4602
    %4624 = vmatpush.bf16.msra.mxu0 %v4601
    %4625 = vmatmul.bf16.gmra.mxu0 %v4548
    %v4626 = vpop.f32.mrf.mxu0
    %v4627 = vadd.f32 %v4567, %v4626
    %v4628 = vpop.f32.mrf.mxu0
    %4629 = vdwg.mxu0
    %v4630 = vld [vmem:[%s3] sm:$0x3]
    %v4631 = vpack.c.bf16 %v4630, %v4630
    %v4632 = vld [vmem:[#allocation24] sm:$0xf]
    %v4633 = vld [vmem:[#allocation24 + $0x4] sm:$0xf]
    %v4634 = vld [vmem:[#allocation24 + $0x8] sm:$0xf]
    %v4635 = vld [vmem:[#allocation24 + $0xc] sm:$0xf]
    %v4636 = vld [vmem:[#allocation24 + $0x10] sm:$0xf]
    %v4637 = vld [vmem:[#allocation24 + $0x14] sm:$0xf]
    %v4638 = vld [vmem:[#allocation24 + $0x18] sm:$0xf]
    %v4639 = vld [vmem:[#allocation24 + $0x1c] sm:$0xf]
    %v4640 = vld [vmem:[#allocation24 + $0x20] sm:$0xf]
    %v4641 = vld [vmem:[#allocation24 + $0x24] sm:$0xf]
    %v4642 = vld [vmem:[#allocation24 + $0x28] sm:$0xf]
    %v4643 = vld [vmem:[#allocation24 + $0x2c] sm:$0xf]
    %v4644 = vld [vmem:[#allocation24 + $0x30] sm:$0xf]
    %v4645 = vld [vmem:[#allocation24 + $0x34] sm:$0xf]
    %v4646 = vld [vmem:[#allocation24 + $0x38] sm:$0xf]
    %v4647 = vld [vmem:[#allocation24 + $0x3c] sm:$0xf]
    %v4648 = vld [vmem:[%s55] sm:$0x1]
    %v4650 = vperm.slane %v4648, 0
    %v4668 = vunpack.c.l.b16 %v4632
    %v4669 = vunpack.c.l.b16 %v4633
    %v4670 = vunpack.c.l.b16 %v4634
    %v4671 = vunpack.c.l.b16 %v4635
    %v4672 = vunpack.c.l.b16 %v4636
    %v4673 = vunpack.c.l.b16 %v4637
    %v4674 = vunpack.c.l.b16 %v4638
    %v4675 = vunpack.c.l.b16 %v4639
    %v4676 = vunpack.c.l.b16 %v4640
    %v4677 = vunpack.c.l.b16 %v4641
    %v4678 = vunpack.c.l.b16 %v4642
    %v4679 = vunpack.c.l.b16 %v4643
    %v4680 = vunpack.c.l.b16 %v4644
    %v4681 = vunpack.c.l.b16 %v4645
    %v4682 = vunpack.c.l.b16 %v4646
    %v4683 = vunpack.c.l.b16 %v4647
    %v4684 = vpack.c.b16 %v4669, %v4668
    %v4685 = vpack.c.b16 %v4671, %v4670
    %v4686 = vpack.c.b16 %v4673, %v4672
    %v4687 = vpack.c.b16 %v4675, %v4674
    %v4688 = vpack.c.b16 %v4677, %v4676
    %v4689 = vpack.c.b16 %v4679, %v4678
    %v4690 = vpack.c.b16 %v4681, %v4680
    %v4691 = vpack.c.b16 %v4683, %v4682
    %4700 = vmatpush.bf16.msra.mxu0 %v4691
    %4701 = vmatpush.bf16.msra.mxu0 %v4690
    %4702 = vmatpush.bf16.msra.mxu0 %v4689
    %4703 = vmatpush.bf16.msra.mxu0 %v4688
    %4704 = vmatpush.bf16.msra.mxu0 %v4687
    %4705 = vmatpush.bf16.msra.mxu0 %v4686
    %4706 = vmatpush.bf16.msra.mxu0 %v4685
    %4707 = vmatpush.bf16.msra.mxu0 %v4684
    %4708 = vmatmul.bf16.gmra.mxu0 %v4631
    %v4709 = vpop.f32.mrf.mxu0
    %v4710 = vadd.f32 %v4650, %v4709
    %v4711 = vpop.f32.mrf.mxu0
    %4712 = vdwg.mxu0
    %v4713 = vmax.f32 %v4710, 0.0
    %v4714 = vpack.c.bf16 %v4713, %v4713
    %v4715 = vld [vmem:[#allocation26] sm:$0xf]
    %v4716 = vld [vmem:[#allocation26 + $0x4] sm:$0xf]
    %v4717 = vld [vmem:[#allocation26 + $0x8] sm:$0xf]
    %v4718 = vld [vmem:[#allocation26 + $0xc] sm:$0xf]
    %v4719 = vld [vmem:[#allocation26 + $0x10] sm:$0xf]
    %v4720 = vld [vmem:[#allocation26 + $0x14] sm:$0xf]
    %v4721 = vld [vmem:[#allocation26 + $0x18] sm:$0xf]
    %v4722 = vld [vmem:[#allocation26 + $0x1c] sm:$0xf]
    %v4723 = vld [vmem:[#allocation26 + $0x20] sm:$0xf]
    %v4724 = vld [vmem:[#allocation26 + $0x24] sm:$0xf]
    %v4725 = vld [vmem:[#allocation26 + $0x28] sm:$0xf]
    %v4726 = vld [vmem:[#allocation26 + $0x2c] sm:$0xf]
    %v4727 = vld [vmem:[#allocation26 + $0x30] sm:$0xf]
    %v4728 = vld [vmem:[#allocation26 + $0x34] sm:$0xf]
    %v4729 = vld [vmem:[#allocation26 + $0x38] sm:$0xf]
    %v4730 = vld [vmem:[#allocation26 + $0x3c] sm:$0xf]
    %v4731 = vld [vmem:[%s59] sm:$0x1]
    %v4733 = vperm.slane %v4731, 0
    %v4751 = vunpack.c.l.b16 %v4715
    %v4752 = vunpack.c.l.b16 %v4716
    %v4753 = vunpack.c.l.b16 %v4717
    %v4754 = vunpack.c.l.b16 %v4718
    %v4755 = vunpack.c.l.b16 %v4719
    %v4756 = vunpack.c.l.b16 %v4720
    %v4757 = vunpack.c.l.b16 %v4721
    %v4758 = vunpack.c.l.b16 %v4722
    %v4759 = vunpack.c.l.b16 %v4723
    %v4760 = vunpack.c.l.b16 %v4724
    %v4761 = vunpack.c.l.b16 %v4725
    %v4762 = vunpack.c.l.b16 %v4726
    %v4763 = vunpack.c.l.b16 %v4727
    %v4764 = vunpack.c.l.b16 %v4728
    %v4765 = vunpack.c.l.b16 %v4729
    %v4766 = vunpack.c.l.b16 %v4730
    %v4767 = vpack.c.b16 %v4752, %v4751
    %v4768 = vpack.c.b16 %v4754, %v4753
    %v4769 = vpack.c.b16 %v4756, %v4755
    %v4770 = vpack.c.b16 %v4758, %v4757
    %v4771 = vpack.c.b16 %v4760, %v4759
    %v4772 = vpack.c.b16 %v4762, %v4761
    %v4773 = vpack.c.b16 %v4764, %v4763
    %v4774 = vpack.c.b16 %v4766, %v4765
    %4783 = vmatpush.bf16.msra.mxu0 %v4774
    %4784 = vmatpush.bf16.msra.mxu0 %v4773
    %4785 = vmatpush.bf16.msra.mxu0 %v4772
    %4786 = vmatpush.bf16.msra.mxu0 %v4771
    %4787 = vmatpush.bf16.msra.mxu0 %v4770
    %4788 = vmatpush.bf16.msra.mxu0 %v4769
    %4789 = vmatpush.bf16.msra.mxu0 %v4768
    %4790 = vmatpush.bf16.msra.mxu0 %v4767
    %4791 = vmatmul.bf16.gmra.mxu0 %v4714
    %v4792 = vpop.f32.mrf.mxu0
    %v4793 = vadd.f32 %v4733, %v4792
    %v4794 = vpop.f32.mrf.mxu0
    %4795 = vdwg.mxu0
    %v4796 = vmax.f32 %v4793, 0.0
    %v4797 = vpack.c.bf16 %v4627, %v4627
    %v4798 = vld [vmem:[#allocation27] sm:$0xff]
    %v4799 = vld [vmem:[#allocation27 + $0x8] sm:$0xff]
    %v4800 = vld [vmem:[#allocation27 + $0x10] sm:$0xff]
    %v4801 = vld [vmem:[#allocation27 + $0x18] sm:$0xff]
    %v4802 = vld [vmem:[#allocation27 + $0x20] sm:$0xff]
    %v4803 = vld [vmem:[#allocation27 + $0x28] sm:$0xff]
    %v4804 = vld [vmem:[#allocation27 + $0x30] sm:$0xff]
    %v4805 = vld [vmem:[#allocation27 + $0x38] sm:$0xff]
    %v4806 = vld [vmem:[#allocation27 + $0x40] sm:$0xff]
    %v4807 = vld [vmem:[#allocation27 + $0x48] sm:$0xff]
    %v4808 = vld [vmem:[#allocation27 + $0x50] sm:$0xff]
    %v4809 = vld [vmem:[#allocation27 + $0x58] sm:$0xff]
    %v4810 = vld [vmem:[#allocation27 + $0x60] sm:$0xff]
    %v4811 = vld [vmem:[#allocation27 + $0x68] sm:$0xff]
    %v4812 = vld [vmem:[#allocation27 + $0x70] sm:$0xff]
    %v4813 = vld [vmem:[#allocation27 + $0x78] sm:$0xff]
    %v4814 = vpack.c.bf16 %v4796, %v4796
    %v4815 = vld [vmem:[#allocation29] sm:$0xff]
    %v4816 = vld [vmem:[#allocation29 + $0x8] sm:$0xff]
    %v4817 = vld [vmem:[#allocation29 + $0x10] sm:$0xff]
    %v4818 = vld [vmem:[#allocation29 + $0x18] sm:$0xff]
    %v4819 = vld [vmem:[#allocation29 + $0x20] sm:$0xff]
    %v4820 = vld [vmem:[#allocation29 + $0x28] sm:$0xff]
    %v4821 = vld [vmem:[#allocation29 + $0x30] sm:$0xff]
    %v4822 = vld [vmem:[#allocation29 + $0x38] sm:$0xff]
    %v4823 = vld [vmem:[#allocation29 + $0x40] sm:$0xff]
    %v4824 = vld [vmem:[#allocation29 + $0x48] sm:$0xff]
    %v4825 = vld [vmem:[#allocation29 + $0x50] sm:$0xff]
    %v4826 = vld [vmem:[#allocation29 + $0x58] sm:$0xff]
    %v4827 = vld [vmem:[#allocation29 + $0x60] sm:$0xff]
    %v4828 = vld [vmem:[#allocation29 + $0x68] sm:$0xff]
    %v4829 = vld [vmem:[#allocation29 + $0x70] sm:$0xff]
    %v4830 = vld [vmem:[#allocation29 + $0x78] sm:$0xff]
    %v4847 = vunpack.c.l.b16 %v4815
    %v4848 = vunpack.c.h.b16 %v4815
    %v4849 = vunpack.c.l.b16 %v4816
    %v4850 = vunpack.c.h.b16 %v4816
    %v4851 = vunpack.c.l.b16 %v4817
    %v4852 = vunpack.c.h.b16 %v4817
    %v4853 = vunpack.c.l.b16 %v4818
    %v4854 = vunpack.c.h.b16 %v4818
    %v4855 = vunpack.c.l.b16 %v4819
    %v4856 = vunpack.c.h.b16 %v4819
    %v4857 = vunpack.c.l.b16 %v4820
    %v4858 = vunpack.c.h.b16 %v4820
    %v4859 = vunpack.c.l.b16 %v4821
    %v4860 = vunpack.c.h.b16 %v4821
    %v4861 = vunpack.c.l.b16 %v4822
    %v4862 = vunpack.c.h.b16 %v4822
    %v4863 = vunpack.c.l.b16 %v4823
    %v4864 = vunpack.c.h.b16 %v4823
    %v4865 = vunpack.c.l.b16 %v4824
    %v4866 = vunpack.c.h.b16 %v4824
    %v4867 = vunpack.c.l.b16 %v4825
    %v4868 = vunpack.c.h.b16 %v4825
    %v4869 = vunpack.c.l.b16 %v4826
    %v4870 = vunpack.c.h.b16 %v4826
    %v4871 = vunpack.c.l.b16 %v4827
    %v4872 = vunpack.c.h.b16 %v4827
    %v4873 = vunpack.c.l.b16 %v4828
    %v4874 = vunpack.c.h.b16 %v4828
    %v4875 = vunpack.c.l.b16 %v4829
    %v4876 = vunpack.c.h.b16 %v4829
    %v4877 = vunpack.c.l.b16 %v4830
    %v4878 = vunpack.c.h.b16 %v4830
    %v4879 = vpack.c.b16 %v4849, %v4847
    %v4880 = vpack.c.b16 %v4850, %v4848
    %v4881 = vpack.c.b16 %v4853, %v4851
    %v4882 = vpack.c.b16 %v4854, %v4852
    %v4883 = vpack.c.b16 %v4857, %v4855
    %v4884 = vpack.c.b16 %v4858, %v4856
    %v4885 = vpack.c.b16 %v4861, %v4859
    %v4886 = vpack.c.b16 %v4862, %v4860
    %v4887 = vpack.c.b16 %v4865, %v4863
    %v4888 = vpack.c.b16 %v4866, %v4864
    %v4889 = vpack.c.b16 %v4869, %v4867
    %v4890 = vpack.c.b16 %v4870, %v4868
    %v4891 = vpack.c.b16 %v4873, %v4871
    %v4892 = vpack.c.b16 %v4874, %v4872
    %v4893 = vpack.c.b16 %v4877, %v4875
    %v4894 = vpack.c.b16 %v4878, %v4876
    %4911 = vmatpush.bf16.msra.mxu0 %v4893
    %4912 = vmatpush.bf16.msra.mxu0 %v4891
    %4913 = vmatpush.bf16.msra.mxu0 %v4889
    %4914 = vmatpush.bf16.msra.mxu0 %v4887
    %4915 = vmatpush.bf16.msra.mxu0 %v4885
    %4916 = vmatpush.bf16.msra.mxu0 %v4883
    %4917 = vmatpush.bf16.msra.mxu0 %v4881
    %4918 = vmatpush.bf16.msra.mxu0 %v4879
    %4919 = vmatmul.bf16.gmra.mxu0 %v4814
    %v4920 = vpop.f32.mrf.mxu0
    %v4921 = vadd.f32 0.0, %v4920
    %v4922 = vpop.f32.mrf.mxu0
    %4923 = vdwg.mxu0
    %4924 = vmatpush.bf16.msra.mxu0 %v4894
    %4925 = vmatpush.bf16.msra.mxu0 %v4892
    %4926 = vmatpush.bf16.msra.mxu0 %v4890
    %4927 = vmatpush.bf16.msra.mxu0 %v4888
    %4928 = vmatpush.bf16.msra.mxu0 %v4886
    %4929 = vmatpush.bf16.msra.mxu0 %v4884
    %4930 = vmatpush.bf16.msra.mxu0 %v4882
    %4931 = vmatpush.bf16.msra.mxu0 %v4880
    %4932 = vmatmul.bf16.gmra.mxu0 %v4814
    %v4933 = vpop.f32.mrf.mxu0
    %v4934 = vadd.f32 0.0, %v4933
    %v4935 = vpop.f32.mrf.mxu0
    %4936 = vdwg.mxu0
    %v4953 = vunpack.c.l.b16 %v4798
    %v4954 = vunpack.c.h.b16 %v4798
    %v4955 = vunpack.c.l.b16 %v4799
    %v4956 = vunpack.c.h.b16 %v4799
    %v4957 = vunpack.c.l.b16 %v4800
    %v4958 = vunpack.c.h.b16 %v4800
    %v4959 = vunpack.c.l.b16 %v4801
    %v4960 = vunpack.c.h.b16 %v4801
    %v4961 = vunpack.c.l.b16 %v4802
    %v4962 = vunpack.c.h.b16 %v4802
    %v4963 = vunpack.c.l.b16 %v4803
    %v4964 = vunpack.c.h.b16 %v4803
    %v4965 = vunpack.c.l.b16 %v4804
    %v4966 = vunpack.c.h.b16 %v4804
    %v4967 = vunpack.c.l.b16 %v4805
    %v4968 = vunpack.c.h.b16 %v4805
    %v4969 = vunpack.c.l.b16 %v4806
    %v4970 = vunpack.c.h.b16 %v4806
    %v4971 = vunpack.c.l.b16 %v4807
    %v4972 = vunpack.c.h.b16 %v4807
    %v4973 = vunpack.c.l.b16 %v4808
    %v4974 = vunpack.c.h.b16 %v4808
    %v4975 = vunpack.c.l.b16 %v4809
    %v4976 = vunpack.c.h.b16 %v4809
    %v4977 = vunpack.c.l.b16 %v4810
    %v4978 = vunpack.c.h.b16 %v4810
    %v4979 = vunpack.c.l.b16 %v4811
    %v4980 = vunpack.c.h.b16 %v4811
    %v4981 = vunpack.c.l.b16 %v4812
    %v4982 = vunpack.c.h.b16 %v4812
    %v4983 = vunpack.c.l.b16 %v4813
    %v4984 = vunpack.c.h.b16 %v4813
    %v4985 = vpack.c.b16 %v4955, %v4953
    %v4986 = vpack.c.b16 %v4956, %v4954
    %v4987 = vpack.c.b16 %v4959, %v4957
    %v4988 = vpack.c.b16 %v4960, %v4958
    %v4989 = vpack.c.b16 %v4963, %v4961
    %v4990 = vpack.c.b16 %v4964, %v4962
    %v4991 = vpack.c.b16 %v4967, %v4965
    %v4992 = vpack.c.b16 %v4968, %v4966
    %v4993 = vpack.c.b16 %v4971, %v4969
    %v4994 = vpack.c.b16 %v4972, %v4970
    %v4995 = vpack.c.b16 %v4975, %v4973
    %v4996 = vpack.c.b16 %v4976, %v4974
    %v4997 = vpack.c.b16 %v4979, %v4977
    %v4998 = vpack.c.b16 %v4980, %v4978
    %v4999 = vpack.c.b16 %v4983, %v4981
    %v5000 = vpack.c.b16 %v4984, %v4982
    %5017 = vmatpush.bf16.msra.mxu0 %v4999
    %5018 = vmatpush.bf16.msra.mxu0 %v4997
    %5019 = vmatpush.bf16.msra.mxu0 %v4995
    %5020 = vmatpush.bf16.msra.mxu0 %v4993
    %5021 = vmatpush.bf16.msra.mxu0 %v4991
    %5022 = vmatpush.bf16.msra.mxu0 %v4989
    %5023 = vmatpush.bf16.msra.mxu0 %v4987
    %5024 = vmatpush.bf16.msra.mxu0 %v4985
    %5025 = vmatmul.bf16.gmra.mxu0 %v4797
    %v5026 = vpop.f32.mrf.mxu0
    %v5027 = vadd.f32 %v4921, %v5026
    %v5028 = vpop.f32.mrf.mxu0
    %5029 = vdwg.mxu0
    %5030 = vmatpush.bf16.msra.mxu0 %v5000
    %5031 = vmatpush.bf16.msra.mxu0 %v4998
    %5032 = vmatpush.bf16.msra.mxu0 %v4996
    %5033 = vmatpush.bf16.msra.mxu0 %v4994
    %5034 = vmatpush.bf16.msra.mxu0 %v4992
    %5035 = vmatpush.bf16.msra.mxu0 %v4990
    %5036 = vmatpush.bf16.msra.mxu0 %v4988
    %5037 = vmatpush.bf16.msra.mxu0 %v4986
    %5038 = vmatmul.bf16.gmra.mxu0 %v4797
    %v5039 = vpop.f32.mrf.mxu0
    %v5040 = vadd.f32 %v4934, %v5039
    %v5041 = vpop.f32.mrf.mxu0
    %5042 = vdwg.mxu0
    %v5043 = vld [vmem:[%s65] sm:$0x3]
    %v5045 = vperm.slane %v5043, 0
    %v5046 = vperm.slane %v5043, 1
    %v5049 = vadd.f32 %v5027, %v5045
    %v5050 = vadd.f32 %v5040, %v5046
    %v5051 = vmax.f32 %v5049, 0.0
    %v5052 = vmax.f32 %v5050, 0.0
    %v5053 = vpack.c.bf16 %v5051, %v5051
    %v5054 = vpack.c.bf16 %v5052, %v5052
    %v5055 = vld [vmem:[#allocation30] sm:$0xf]
    %v5056 = vld [vmem:[#allocation30 + $0x4] sm:$0xf]
    %v5057 = vld [vmem:[#allocation30 + $0x8] sm:$0xf]
    %v5058 = vld [vmem:[#allocation30 + $0xc] sm:$0xf]
    %v5059 = vld [vmem:[#allocation30 + $0x10] sm:$0xf]
    %v5060 = vld [vmem:[#allocation30 + $0x14] sm:$0xf]
    %v5061 = vld [vmem:[#allocation30 + $0x18] sm:$0xf]
    %v5062 = vld [vmem:[#allocation30 + $0x1c] sm:$0xf]
    %v5063 = vld [vmem:[#allocation30 + $0x20] sm:$0xf]
    %v5064 = vld [vmem:[#allocation30 + $0x24] sm:$0xf]
    %v5065 = vld [vmem:[#allocation30 + $0x28] sm:$0xf]
    %v5066 = vld [vmem:[#allocation30 + $0x2c] sm:$0xf]
    %v5067 = vld [vmem:[#allocation30 + $0x30] sm:$0xf]
    %v5068 = vld [vmem:[#allocation30 + $0x34] sm:$0xf]
    %v5069 = vld [vmem:[#allocation30 + $0x38] sm:$0xf]
    %v5070 = vld [vmem:[#allocation30 + $0x3c] sm:$0xf]
    %v5071 = vld [vmem:[#allocation30 + $0x40] sm:$0xf]
    %v5072 = vld [vmem:[#allocation30 + $0x44] sm:$0xf]
    %v5073 = vld [vmem:[#allocation30 + $0x48] sm:$0xf]
    %v5074 = vld [vmem:[#allocation30 + $0x4c] sm:$0xf]
    %v5075 = vld [vmem:[#allocation30 + $0x50] sm:$0xf]
    %v5076 = vld [vmem:[#allocation30 + $0x54] sm:$0xf]
    %v5077 = vld [vmem:[#allocation30 + $0x58] sm:$0xf]
    %v5078 = vld [vmem:[#allocation30 + $0x5c] sm:$0xf]
    %v5079 = vld [vmem:[#allocation30 + $0x60] sm:$0xf]
    %v5080 = vld [vmem:[#allocation30 + $0x64] sm:$0xf]
    %v5081 = vld [vmem:[#allocation30 + $0x68] sm:$0xf]
    %v5082 = vld [vmem:[#allocation30 + $0x6c] sm:$0xf]
    %v5083 = vld [vmem:[#allocation30 + $0x70] sm:$0xf]
    %v5084 = vld [vmem:[#allocation30 + $0x74] sm:$0xf]
    %v5085 = vld [vmem:[#allocation30 + $0x78] sm:$0xf]
    %v5086 = vld [vmem:[#allocation30 + $0x7c] sm:$0xf]
    %v5087 = vld [vmem:[%s69] sm:$0x1]
    %v5089 = vperm.slane %v5087, 0
    %v5123 = vunpack.c.l.b16 %v5055
    %v5124 = vunpack.c.l.b16 %v5056
    %v5125 = vunpack.c.l.b16 %v5057
    %v5126 = vunpack.c.l.b16 %v5058
    %v5127 = vunpack.c.l.b16 %v5059
    %v5128 = vunpack.c.l.b16 %v5060
    %v5129 = vunpack.c.l.b16 %v5061
    %v5130 = vunpack.c.l.b16 %v5062
    %v5131 = vunpack.c.l.b16 %v5063
    %v5132 = vunpack.c.l.b16 %v5064
    %v5133 = vunpack.c.l.b16 %v5065
    %v5134 = vunpack.c.l.b16 %v5066
    %v5135 = vunpack.c.l.b16 %v5067
    %v5136 = vunpack.c.l.b16 %v5068
    %v5137 = vunpack.c.l.b16 %v5069
    %v5138 = vunpack.c.l.b16 %v5070
    %v5139 = vunpack.c.l.b16 %v5071
    %v5140 = vunpack.c.l.b16 %v5072
    %v5141 = vunpack.c.l.b16 %v5073
    %v5142 = vunpack.c.l.b16 %v5074
    %v5143 = vunpack.c.l.b16 %v5075
    %v5144 = vunpack.c.l.b16 %v5076
    %v5145 = vunpack.c.l.b16 %v5077
    %v5146 = vunpack.c.l.b16 %v5078
    %v5147 = vunpack.c.l.b16 %v5079
    %v5148 = vunpack.c.l.b16 %v5080
    %v5149 = vunpack.c.l.b16 %v5081
    %v5150 = vunpack.c.l.b16 %v5082
    %v5151 = vunpack.c.l.b16 %v5083
    %v5152 = vunpack.c.l.b16 %v5084
    %v5153 = vunpack.c.l.b16 %v5085
    %v5154 = vunpack.c.l.b16 %v5086
    %v5155 = vpack.c.b16 %v5124, %v5123
    %v5156 = vpack.c.b16 %v5126, %v5125
    %v5157 = vpack.c.b16 %v5128, %v5127
    %v5158 = vpack.c.b16 %v5130, %v5129
    %v5159 = vpack.c.b16 %v5132, %v5131
    %v5160 = vpack.c.b16 %v5134, %v5133
    %v5161 = vpack.c.b16 %v5136, %v5135
    %v5162 = vpack.c.b16 %v5138, %v5137
    %v5163 = vpack.c.b16 %v5140, %v5139
    %v5164 = vpack.c.b16 %v5142, %v5141
    %v5165 = vpack.c.b16 %v5144, %v5143
    %v5166 = vpack.c.b16 %v5146, %v5145
    %v5167 = vpack.c.b16 %v5148, %v5147
    %v5168 = vpack.c.b16 %v5150, %v5149
    %v5169 = vpack.c.b16 %v5152, %v5151
    %v5170 = vpack.c.b16 %v5154, %v5153
    %5187 = vmatpush.bf16.msra.mxu0 %v5162
    %5188 = vmatpush.bf16.msra.mxu0 %v5161
    %5189 = vmatpush.bf16.msra.mxu0 %v5160
    %5190 = vmatpush.bf16.msra.mxu0 %v5159
    %5191 = vmatpush.bf16.msra.mxu0 %v5158
    %5192 = vmatpush.bf16.msra.mxu0 %v5157
    %5193 = vmatpush.bf16.msra.mxu0 %v5156
    %5194 = vmatpush.bf16.msra.mxu0 %v5155
    %5195 = vmatmul.bf16.gmra.mxu0 %v5053
    %v5196 = vpop.f32.mrf.mxu0
    %v5197 = vadd.f32 %v5089, %v5196
    %v5198 = vpop.f32.mrf.mxu0
    %5199 = vdwg.mxu0
    %5200 = vmatpush.bf16.msra.mxu0 %v5170
    %5201 = vmatpush.bf16.msra.mxu0 %v5169
    %5202 = vmatpush.bf16.msra.mxu0 %v5168
    %5203 = vmatpush.bf16.msra.mxu0 %v5167
    %5204 = vmatpush.bf16.msra.mxu0 %v5166
    %5205 = vmatpush.bf16.msra.mxu0 %v5165
    %5206 = vmatpush.bf16.msra.mxu0 %v5164
    %5207 = vmatpush.bf16.msra.mxu0 %v5163
    %5208 = vmatmul.bf16.gmra.mxu0 %v5054
    %v5209 = vpop.f32.mrf.mxu0
    %v5210 = vadd.f32 %v5197, %v5209
    %v5211 = vpop.f32.mrf.mxu0
    %5212 = vdwg.mxu0
    %5213 = vst [vmem:[#allocation32] sm:$0x3] %v5210
    // Predicated region
    $region218: #{ecg_concept_cnn_forward.1} parent=1 // pred_check
      _
    $region219: #{ecg_concept_cnn_forward.1} parent=1 // pred_check_branch
      %5215 = sbr.rel (0) target = $region221
    $region220: #{ecg_concept_cnn_forward.1} parent=1 // pred_region
      %5217 = vsyncadd [#allocation5], 0
      %s5219 = sshll.u32 [#allocation32], 4
      %s5220 = int_to_ptr.vmem [resolvable:$true] %s5219
      %s5221 = sshll.u32 %s73, 4
      %s5222 = int_to_ptr.hbm [resolvable:$true] %s5221
      %5224 = dma.vmem_to_hbm [thread:$0]  %s5220, 32, %s5222, [#allocation5]
    $region221: #{ecg_concept_cnn_forward.1} parent=1 // pred_fallthru
      _
    // Predicated region
    $region222: #{ecg_concept_cnn_forward.1} parent=1 // pred_check
      _
    $region223: #{ecg_concept_cnn_forward.1} parent=1 // pred_check_branch
      %5226 = sbr.rel (0) target = $region225
    $region224: #{ecg_concept_cnn_forward.1} parent=1 // pred_region
      %5228 = dma.done [#allocation5], 32
    $region225: #{ecg_concept_cnn_forward.1} parent=1 // pred_fallthru
      _
    %5229 = vsyncpa [#allocation4], 1
    %5230 = vsyncpa [#allocation7], 1
    %5231 = vsyncpa [#allocation10], 1
    %5232 = vsyncpa [#allocation13], 1
    %5233 = vsyncpa [#allocation16], 1
    %5234 = vsyncpa [#allocation19], 1
    %5235 = vsyncpa [#allocation22], 1
    %5236 = vsyncpa [#allocation25], 1
    %5237 = vsyncpa [#allocation28], 1
    %5238 = vsyncpa [#allocation31], 1
    %5239 = vsyncpa [#allocation5], 1

</llo_original>
